<compile_context>
chip_gen: v6e
topology: v6e:2x2x1
jax: 0.10.0
libtpu: 0.0.40
codegen_flags: <defaults>
</compile_context>

<pallas_src>
import functools

import jax
import jax.numpy as jnp
import numpy as np
from jax.experimental import pallas as pl
from jax.experimental.pallas import tpu as pltpu

_EPS = 1e-5                      # BatchNorm2d default eps
_NEG_SLOPE = 0.01                # LeakyReLU negative slope
_TM_MAX = 1024                   # max rows per grid step (amortize per-step overhead)
_VMEM_LIMIT = 32 * 1024 * 1024   # explicit VMEM budget (safe on every generation)


# ---------------------------------------------------------------------------
# helpers
# ---------------------------------------------------------------------------
def _round_up(x, m):
    return (x + m - 1) // m * m


def _tiling(rows, tm_max=_TM_MAX):
    """Row tiling: TM multiple of 16 (bf16 sublane tile), >=2 grid steps when possible
    so both v7x TensorCores get work."""
    tm = max(16, min(tm_max, _round_up((rows + 1) // 2, 16)))
    m_pad = _round_up(rows, tm)
    return tm, m_pad, m_pad // tm


def _tap_slices(x_nhwc, kh, kw, stride, padding):
    """All KH*KW strided taps of a zero-padded NHWC input, each as a [M, C] matrix."""
    n, h, w, c = x_nhwc.shape
    ho = (h + 2 * padding - kh) // stride + 1
    wo = (w + 2 * padding - kw) // stride + 1
    xp = jnp.pad(x_nhwc, ((0, 0), (padding, padding), (padding, padding), (0, 0)))
    taps = []
    for i in range(kh):
        for j in range(kw):
            sl = xp[:, i:i + (ho - 1) * stride + 1:stride,
                       j:j + (wo - 1) * stride + 1:stride, :]
            taps.append(sl.reshape(n * ho * wo, c))
    return taps, ho, wo


def _bn_act_taps(y_rows, m_true, n, h, w, scale, shift, out_dtype=jnp.bfloat16):
    """Producer BN + LeakyReLU applied inside the (XLA-fused) tap-extraction writes.
    Returns a bf16 [9, M_out, C] tap stack (no separate apply pass over HBM)."""
    c = y_rows.shape[1]
    a = y_rows[:m_true].astype(jnp.float32) * scale[None, :] + shift[None, :]
    a = jnp.maximum(a, _NEG_SLOPE * a).reshape(n, h, w, c)
    taps, ho, wo = _tap_slices(a, 3, 3, 2, 1)
    return jnp.stack(taps, axis=0).astype(out_dtype), ho, wo


def _finalize_stats(stats, count):
    """Reduce per-tile (sum, sumsq) partials -> (mean, biased var). Tiny host-side op."""
    c = stats.shape[1]
    st = stats.reshape(-1, 8, c)
    s = jnp.sum(st[:, 0, :], axis=0)
    q = jnp.sum(st[:, 1, :], axis=0)
    mean = s / count
    var = jnp.maximum(q / count - mean * mean, 0.0)
    return mean, var


def _bn_scale_shift(mean, var, gamma, beta):
    scale = gamma * jax.lax.rsqrt(var + _EPS)
    shift = beta - mean * scale
    return scale, shift


# ---------------------------------------------------------------------------
# Pallas kernels
# ---------------------------------------------------------------------------
def _write_stats(stats_ref, y):
    # row 0 = per-channel sum, row 1 = per-channel sum of squares, rows 2..7 zero.
    s1 = jnp.sum(y, axis=0, keepdims=True)
    s2 = jnp.sum(y * y, axis=0, keepdims=True)
    row = jax.lax.broadcasted_iota(jnp.int32, stats_ref.shape, 0)
    stats_ref[...] = jnp.where(row == 0, s1, jnp.where(row == 1, s2, 0.0))


def _gemm_stats_kernel(x_ref, w_ref, y_ref, stats_ref):
    # Pass 1: MXU GEMM (bf16 in, f32 accumulate) + partial BN stats.
    x = x_ref[...]
    if x.dtype != jnp.bfloat16:
        x = x.astype(jnp.bfloat16)
    y = jnp.dot(x, w_ref[...], preferred_element_type=jnp.float32)
    y_ref[...] = y.astype(y_ref.dtype)
    _write_stats(stats_ref, y)


def _bn_act_gemm_stats_kernel(x_ref, scale_ref, shift_ref, w_ref, y_ref, stats_ref,
                              *, m_true, tm):
    # Fused: producer BN scale/shift + LeakyReLU on the streamed tile (f32), mask any
    # padded rows back to zero (so BN stats stay exact), bf16 cast, MXU GEMM + stats.
    a = x_ref[...].astype(jnp.float32) * scale_ref[...] + shift_ref[...]
    a = jnp.maximum(a, _NEG_SLOPE * a)
    row = pl.program_id(0) * tm + jax.lax.broadcasted_iota(jnp.int32, a.shape, 0)
    a = jnp.where(row < m_true, a, 0.0)
    y = jnp.dot(a.astype(jnp.bfloat16), w_ref[...], preferred_element_type=jnp.float32)
    y_ref[...] = y.astype(y_ref.dtype)
    _write_stats(stats_ref, y)


def _dw_stats_kernel(t_ref, w_ref, y_ref, stats_ref):
    # Pass 1 for depthwise 3x3: per-lane weighted tap sum (bf16 stream, f32 VPU math)
    # + partial BN stats.
    y = t_ref[0].astype(jnp.float32) * w_ref[0:1, :]
    for t in range(1, t_ref.shape[0]):                     # static 9-tap unrolled loop
        y = y + t_ref[t].astype(jnp.float32) * w_ref[t:t + 1, :]
    y_ref[...] = y.astype(y_ref.dtype)
    _write_stats(stats_ref, y)


def _final_apply_kernel(a_ref, b_ref, sc_ref, sh_ref, o_ref):
    # Fused epilogue for both stem outputs: per-channel BN scale/shift + LeakyReLU,
    # written in the pre-shuffle concat order [branch1(x1), x2].
    y = jnp.concatenate([a_ref[...], b_ref[...]], axis=-1)
    y = y * sc_ref[...] + sh_ref[...]
    o_ref[...] = jnp.maximum(y, _NEG_SLOPE * y)


# ---------------------------------------------------------------------------
# pallas_call wrappers
# ---------------------------------------------------------------------------
def _gemm_bn_pass1(x, w2d, m_true, *, out_dtype, in_scale=None, in_shift=None,
                   tm_max=_TM_MAX):
    """GEMM (+ optional fused input BN/LeakyReLU) + BN stats, tiled over M."""
    rows, k = x.shape
    cout = w2d.shape[1]
    tm, m_pad, nt = _tiling(rows, tm_max)
    if m_pad > rows:
        x = jnp.pad(x, ((0, m_pad - rows), (0, 0)))
    w_bf = w2d.astype(jnp.bfloat16)

    if in_scale is not None:
        kernel = functools.partial(_bn_act_gemm_stats_kernel, m_true=m_true, tm=tm)
        sc = in_scale.reshape(1, k).astype(jnp.float32)
        sh = in_shift.reshape(1, k).astype(jnp.float32)
        in_specs = [
            pl.BlockSpec((tm, k), lambda i: (i, 0)),
            pl.BlockSpec((1, k), lambda i: (0, 0)),
            pl.BlockSpec((1, k), lambda i: (0, 0)),
            pl.BlockSpec((k, cout), lambda i: (0, 0)),
        ]
        args = (x, sc, sh, w_bf)
    else:
        kernel = _gemm_stats_kernel
        in_specs = [
            pl.BlockSpec((tm, k), lambda i: (i, 0)),
            pl.BlockSpec((k, cout), lambda i: (0, 0)),
        ]
        args = (x, w_bf)

    bytes_accessed = (m_pad * k * np.dtype(x.dtype).itemsize
                      + k * cout * 2
                      + m_pad * cout * np.dtype(out_dtype).itemsize
                      + nt * 8 * cout * 4)

    y, stats = pl.pallas_call(
        kernel,
        grid=(nt,),
        in_specs=in_specs,
        out_specs=[
            pl.BlockSpec((tm, cout), lambda i: (i, 0)),
            pl.BlockSpec((8, cout), lambda i: (i, 0)),
        ],
        out_shape=[
            jax.ShapeDtypeStruct((m_pad, cout), out_dtype),
            jax.ShapeDtypeStruct((nt * 8, cout), jnp.float32),
        ],
        compiler_params=pltpu.CompilerParams(
            dimension_semantics=("parallel",),
            vmem_limit_bytes=_VMEM_LIMIT),
        cost_estimate=pl.CostEstimate(
            flops=int(2 * m_pad * k * cout + 4 * m_pad * k),
            transcendentals=0,
            bytes_accessed=int(bytes_accessed)),
    )(*args)

    mean, var = _finalize_stats(stats, m_true)
    return y, mean, var


def _dw_bn_pass1(taps, w_taps, m_true, *, out_dtype, tm_max=_TM_MAX):
    """Depthwise conv (bf16 tap stream, f32 math) + BN stats, tiled over M."""
    t, rows, c = taps.shape
    tm, m_pad, nt = _tiling(rows, tm_max)
    if m_pad > rows:
        taps = jnp.pad(taps, ((0, 0), (0, m_pad - rows), (0, 0)))
    wp = w_taps.astype(jnp.float32)

    bytes_accessed = (t * m_pad * c * np.dtype(taps.dtype).itemsize
                      + t * c * 4
                      + m_pad * c * np.dtype(out_dtype).itemsize
                      + nt * 8 * c * 4)

    y, stats = pl.pallas_call(
        _dw_stats_kernel,
        grid=(nt,),
        in_specs=[
            pl.BlockSpec((t, tm, c), lambda i: (0, i, 0)),
            pl.BlockSpec((t, c), lambda i: (0, 0)),
        ],
        out_specs=[
            pl.BlockSpec((tm, c), lambda i: (i, 0)),
            pl.BlockSpec((8, c), lambda i: (i, 0)),
        ],
        out_shape=[
            jax.ShapeDtypeStruct((m_pad, c), out_dtype),
            jax.ShapeDtypeStruct((nt * 8, c), jnp.float32),
        ],
        compiler_params=pltpu.CompilerParams(
            dimension_semantics=("parallel",),
            vmem_limit_bytes=_VMEM_LIMIT),
        cost_estimate=pl.CostEstimate(
            flops=int(2 * t * m_pad * c),
            transcendentals=0,
            bytes_accessed=int(bytes_accessed)),
    )(taps, wp)

    mean, var = _finalize_stats(stats, m_true)
    return y, mean, var


def _final_apply(a, b, scale, shift, m_true, *, tm_max=_TM_MAX):
    """Fused epilogue: both final BN applies + LeakyReLU -> [m_true, ca+cb] f32."""
    rows, ca = a.shape
    cb = b.shape[1]
    c = ca + cb
    tm, m_pad, nt = _tiling(rows, tm_max)
    if m_pad > rows:
        a = jnp.pad(a, ((0, m_pad - rows), (0, 0)))
        b = jnp.pad(b, ((0, m_pad - rows), (0, 0)))
    sc = scale.reshape(1, c).astype(jnp.float32)
    sh = shift.reshape(1, c).astype(jnp.float32)

    out = pl.pallas_call(
        _final_apply_kernel,
        grid=(nt,),
        in_specs=[
            pl.BlockSpec((tm, ca), lambda i: (i, 0)),
            pl.BlockSpec((tm, cb), lambda i: (i, 0)),
            pl.BlockSpec((1, c), lambda i: (0, 0)),
            pl.BlockSpec((1, c), lambda i: (0, 0)),
        ],
        out_specs=pl.BlockSpec((tm, c), lambda i: (i, 0)),
        out_shape=jax.ShapeDtypeStruct((m_pad, c), jnp.float32),
        compiler_params=pltpu.CompilerParams(
            dimension_semantics=("parallel",),
            vmem_limit_bytes=_VMEM_LIMIT),
        cost_estimate=pl.CostEstimate(
            flops=int(4 * m_pad * c),
            transcendentals=0,
            bytes_accessed=int(3 * m_pad * c * 4)),
    )(a, b, sc, sh)
    return out[:m_true]


# ---------------------------------------------------------------------------
# Stem forward (Pallas path)
# ---------------------------------------------------------------------------
def stem_forward(x_nchw, p, *, tm_max=_TM_MAX):
    n = x_nchw.shape[0]
    x = jnp.transpose(x_nchw, (0, 2, 3, 1))                      # NHWC internal layout

    stem_c = p["conv1_w"].shape[0]
    branch_c = stem_c // 2
    mid_c = p["expand_w"].shape[0]
    inc_c = p["branch1_pw_w"].shape[0]

    # ---- conv1 (3x3 s2) -> bn1 stats (bias cancelled by train-BN batch mean) ----
    taps0, h1, w1 = _tap_slices(x, 3, 3, 2, 1)
    patches = jnp.concatenate(taps0, axis=1).astype(jnp.bfloat16)        # [M1, 9*cin]
    m1 = n * h1 * w1
    wmat1 = jnp.transpose(p["conv1_w"], (2, 3, 1, 0)).reshape(-1, stem_c)
    y1, mean1, var1 = _gemm_bn_pass1(patches, wmat1, m1,
                                     out_dtype=jnp.float32, tm_max=tm_max)
    sc1, sh1 = _bn_scale_shift(mean1, var1, p["bn1_g"], p["bn1_b"])

    # ---- expand (1x1) on x2: bn1+LeakyReLU fused in-kernel via zero-extended
    #      scale/shift/weight so only the x2 channel half contributes ----
    w_expand = p["expand_w"].reshape(mid_c, branch_c).T                  # [branch, mid]
    zeros_bc = jnp.zeros((branch_c,), jnp.float32)
    w_exp_ext = jnp.concatenate(
        [jnp.zeros((branch_c, mid_c), jnp.float32), w_expand], axis=0)   # [stem, mid]
    y2, mean2, var2 = _gemm_bn_pass1(
        y1, w_exp_ext, m1, out_dtype=jnp.bfloat16,
        in_scale=jnp.concatenate([zeros_bc, sc1[branch_c:]]),
        in_shift=jnp.concatenate([zeros_bc, sh1[branch_c:]]),
        tm_max=tm_max)
    sc2, sh2 = _bn_scale_shift(mean2, var2, p["bn2_g"], p["bn2_b"])

    # ---- x2 depthwise (3x3 s2): bn2+relu fused into the bf16 tap extraction ----
    t2, h2, w2 = _bn_act_taps(y2, m1, n, h1, w1, sc2, sh2)
    m2 = n * h2 * w2
    w_dw = p["dw_w"].reshape(mid_c, 9).T                                 # [9, mid]
    y3, _, var3 = _dw_bn_pass1(t2, w_dw, m2, out_dtype=jnp.bfloat16, tm_max=tm_max)
    scale3 = p["bn3_g"] * jax.lax.rsqrt(var3 + _EPS)
    # bn3's shift is a per-channel constant through the 1x1 -> cancelled by bn4's mean.

    # ---- linear (1x1, bn3 scale folded into weight rows) -> bn4 stats ----
    w_lin = p["linear_w"].reshape(branch_c, mid_c).T * scale3[:, None]   # [mid, branch]
    y4, mean4, var4 = _gemm_bn_pass1(y3, w_lin, m2, out_dtype=jnp.float32, tm_max=tm_max)
    sc4, sh4 = _bn_scale_shift(mean4, var4, p["bn4_g"], p["bn4_b"])

    # ---- branch1: dw(3x3 s2) on x1 (bn1+relu fused into taps), BN folded into pw ----
    tb, _, _ = _bn_act_taps(y1[:, :branch_c], m1, n, h1, w1,
                            sc1[:branch_c], sh1[:branch_c])
    w_b1dw = p["branch1_dw_w"].reshape(branch_c, 9).T
    z3, _, var_b1 = _dw_bn_pass1(tb, w_b1dw, m2, out_dtype=jnp.bfloat16, tm_max=tm_max)
    scale_b1 = p["branch1_bn1_g"] * jax.lax.rsqrt(var_b1 + _EPS)
    w_b1pw = p["branch1_pw_w"].reshape(inc_c, branch_c).T * scale_b1[:, None]
    z4, mean_b2, var_b2 = _gemm_bn_pass1(z3, w_b1pw, m2,
                                         out_dtype=jnp.float32, tm_max=tm_max)
    sc_b2, sh_b2 = _bn_scale_shift(mean_b2, var_b2,
                                   p["branch1_bn2_g"], p["branch1_bn2_b"])

    # ---- fused epilogue kernel: both final BN applies + LeakyReLU ----
    out_rows = _final_apply(z4, y4,
                            jnp.concatenate([sc_b2, sc4]),
                            jnp.concatenate([sh_b2, sh4]),
                            m2, tm_max=tm_max)                           # [M2, inc+branch]

    # ---- channel_shuffle(groups=2) + NHWC->NCHW (plain-JAX layout plumbing) ----
    c_out = inc_c + branch_c
    out_rows = out_rows.reshape(m2, 2, c_out // 2).transpose(0, 2, 1).reshape(m2, c_out)
    out = out_rows.reshape(n, h2, w2, c_out)
    return jnp.transpose(out, (0, 3, 1, 2))                              # NCHW


# ---------------------------------------------------------------------------
# Pure-JAX reference (mirrors the PyTorch module, train-mode BN, with conv biases)
# ---------------------------------------------------------------------------
def _ref_conv(x, w, b, stride, padding, groups=1):
    y = jax.lax.conv_general_dilated(
        x, w, (stride, stride), [(padding, padding), (padding, padding)],
        dimension_numbers=("NCHW", "OIHW", "NCHW"), feature_group_count=groups)
    return y + b[None, :, None, None]


def _ref_bn(y, gamma, beta):
    mean = y.mean(axis=(0, 2, 3), keepdims=True)
    var = ((y - mean) ** 2).mean(axis=(0, 2, 3), keepdims=True)
    y = (y - mean) * jax.lax.rsqrt(var + _EPS)
    return y * gamma[None, :, None, None] + beta[None, :, None, None]


def _ref_leaky(y):
    return jnp.where(y >= 0, y, _NEG_SLOPE * y)


def _ref_channel_shuffle(x, groups):
    n, c, h, w = x.shape
    x = x.reshape(n, groups, c // groups, h, w)
    x = jnp.transpose(x, (0, 2, 1, 3, 4))
    return x.reshape(n, c, h, w)


def stem_reference(x, p):
    y = _ref_leaky(_ref_bn(_ref_conv(x, p["conv1_w"], p["conv1_b"], 2, 1),
                           p["bn1_g"], p["bn1_b"]))
    c = y.shape[1]
    x1, x2 = y[:, :c // 2], y[:, c // 2:]
    x2 = _ref_leaky(_ref_bn(_ref_conv(x2, p["expand_w"], p["expand_b"], 1, 0),
                            p["bn2_g"], p["bn2_b"]))
    x2 = _ref_bn(_ref_conv(x2, p["dw_w"], p["dw_b"], 2, 1, groups=x2.shape[1]),
                 p["bn3_g"], p["bn3_b"])
    x2 = _ref_leaky(_ref_bn(_ref_conv(x2, p["linear_w"], p["linear_b"], 1, 0),
                            p["bn4_g"], p["bn4_b"]))
    x1 = _ref_bn(_ref_conv(x1, p["branch1_dw_w"], p["branch1_dw_b"], 2, 1,
                           groups=x1.shape[1]),
                 p["branch1_bn1_g"], p["branch1_bn1_b"])
    x1 = _ref_leaky(_ref_bn(_ref_conv(x1, p["branch1_pw_w"], p["branch1_pw_b"], 1, 0),
                            p["branch1_bn2_g"], p["branch1_bn2_b"]))
    out = jnp.concatenate([x1, x2], axis=1)
    return _ref_channel_shuffle(out, 2)


# ---------------------------------------------------------------------------
# Demo / correctness check
# ---------------------------------------------------------------------------
if __name__ == "__main__":
    # Stem(in_channels=4, stem_channels=32, out_channels=32, expand_ratio=1.0)
    in_channels, stem_channels, out_channels, expand_ratio = 4, 32, 32, 1.0
    n, h, w = 2, 16, 16
    mid = int(round(stem_channels * expand_ratio))
    branch = stem_channels // 2
    inc = out_channels - branch            # stem_channels == out_channels path

    keys = iter(jax.random.split(jax.random.PRNGKey(0), 32))

    def conv_init(cout, cin, kh, kw):
        k1, k2 = next(keys), next(keys)
        fan = cin * kh * kw
        wgt = jax.random.normal(k1, (cout, cin, kh, kw), jnp.float32) / np.sqrt(fan)
        b = 0.1 * jax.random.normal(k2, (cout,), jnp.float32)
        return wgt, b

    def bn_init(c):
        k1, k2 = next(keys), next(keys)
        g = 1.0 + 0.1 * jax.random.normal(k1, (c,), jnp.float32)
        b = 0.1 * jax.random.normal(k2, (c,), jnp.float32)
        return g, b

    p = {}
    p["conv1_w"], p["conv1_b"] = conv_init(stem_channels, in_channels, 3, 3)
    p["bn1_g"], p["bn1_b"] = bn_init(stem_channels)
    p["expand_w"], p["expand_b"] = conv_init(mid, branch, 1, 1)
    p["bn2_g"], p["bn2_b"] = bn_init(mid)
    p["dw_w"], p["dw_b"] = conv_init(mid, 1, 3, 3)                 # depthwise (groups=mid)
    p["bn3_g"], p["bn3_b"] = bn_init(mid)
    p["linear_w"], p["linear_b"] = conv_init(branch, mid, 1, 1)
    p["bn4_g"], p["bn4_b"] = bn_init(branch)
    p["branch1_dw_w"], p["branch1_dw_b"] = conv_init(branch, 1, 3, 3)
    p["branch1_bn1_g"], p["branch1_bn1_b"] = bn_init(branch)
    p["branch1_pw_w"], p["branch1_pw_b"] = conv_init(inc, branch, 1, 1)
    p["branch1_bn2_g"], p["branch1_bn2_b"] = bn_init(inc)

    x = jax.random.normal(next(keys), (n, in_channels, h, w), jnp.float32)

    out = jax.jit(stem_forward)(x, p)
    out = jax.block_until_ready(out)

    ref = stem_reference(x, p)
    # Tolerance reflects the bf16 MXU GEMMs / bf16 tap + activation streaming
    # (reference is pure f32).
    np.testing.assert_allclose(np.asarray(out), np.asarray(ref), rtol=5e-2, atol=5e-2)

    print("KERNEL_OK")
</pallas_src>

<mosaic_0001>
module attributes {stable_mosaic.version = 11 : i64} {
  func.func @_gemm_stats_kernel(%arg0: i32, %arg1: memref<64x36xbf16, #tpu.memory_space<vmem>>, %arg2: memref<36x32xbf16, #tpu.memory_space<vmem>>, %arg3: memref<64x32xf32, #tpu.memory_space<vmem>>, %arg4: memref<8x32xf32, #tpu.memory_space<vmem>>) attributes {dimension_semantics = [#tpu.dimension_semantics<parallel>], iteration_bounds = array<i64: 2>, scalar_prefetch = 0 : i64, scratch_operands = 0 : i64, tpu.core_type = #tpu.core_type<tc>, window_params = [{transform_indices = @transform_0, window_bounds = array<i64: 64, 36>}, {pipeline_mode = #tpu.pipeline_mode<synchronous>, transform_indices = @transform_1, window_bounds = array<i64: 36, 32>}, {transform_indices = @transform_2, window_bounds = array<i64: 64, 32>}, {transform_indices = @transform_3, window_bounds = array<i64: 8, 32>}]} {
    %c0 = arith.constant 0 : index
    %c0_0 = arith.constant 0 : index
    %0 = vector.load %arg1[%c0, %c0_0] : memref<64x36xbf16, #tpu.memory_space<vmem>>, vector<64x36xbf16>
    %c0_1 = arith.constant 0 : index
    %c0_2 = arith.constant 0 : index
    %1 = vector.load %arg2[%c0_1, %c0_2] : memref<36x32xbf16, #tpu.memory_space<vmem>>, vector<36x32xbf16>
    %cst = arith.constant dense<0.000000e+00> : vector<64x32xf32>
    %2 = tpu.matmul %0, %1, %cst {dimension_numbers = #tpu.dot_dimension_numbers<[1], [0], [0], [1], [0, 0, 1, 1], [], []>} : vector<64x36xbf16>, vector<36x32xbf16>, vector<64x32xf32> -> vector<64x32xf32>
    %c0_3 = arith.constant 0 : index
    %c0_4 = arith.constant 0 : index
    %3 = vector.load %arg3[%c0_3, %c0_4] : memref<64x32xf32, #tpu.memory_space<vmem>>, vector<64x32xf32>
    tpu.vector_store %arg3[%c0_3, %c0_4], %2 {strides = array<i32>} : memref<64x32xf32, #tpu.memory_space<vmem>>, vector<64x32xf32>,
    %cst_5 = arith.constant dense<0.000000e+00> : vector<32xf32>
    %4 = vector.multi_reduction <add>, %2, %cst_5 [0] : vector<64x32xf32> to vector<32xf32>
    %5 = vector.shape_cast %4 : vector<32xf32> to vector<1x32xf32>
    %6 = arith.mulf %2, %2 : vector<64x32xf32>
    %cst_6 = arith.constant dense<0.000000e+00> : vector<32xf32>
    %7 = vector.multi_reduction <add>, %6, %cst_6 [0] : vector<64x32xf32> to vector<32xf32>
    %8 = vector.shape_cast %7 : vector<32xf32> to vector<1x32xf32>
    %9 = tpu.iota {dimensions = array<i32: 0>} : vector<8x32xi32>
    %c0_i32 = arith.constant 0 : i32
    %10 = vector.broadcast %c0_i32 : i32 to vector<8x32xi32>
    %11 = arith.cmpi eq, %9, %10 : vector<8x32xi32>
    %c1_i32 = arith.constant 1 : i32
    %12 = vector.broadcast %c1_i32 : i32 to vector<8x32xi32>
    %13 = arith.cmpi eq, %9, %12 : vector<8x32xi32>
    %cst_7 = arith.constant 0.000000e+00 : f32
    %14 = vector.shape_cast %8 : vector<1x32xf32> to vector<1x32xf32>
    %15 = vector.broadcast %14 : vector<1x32xf32> to vector<8x32xf32>
    %16 = vector.broadcast %cst_7 : f32 to vector<8x32xf32>
    %17 = arith.select %13, %15, %16 : vector<8x32xi1>, vector<8x32xf32>
    %18 = vector.shape_cast %5 : vector<1x32xf32> to vector<1x32xf32>
    %19 = vector.broadcast %18 : vector<1x32xf32> to vector<8x32xf32>
    %20 = arith.select %11, %19, %17 : vector<8x32xi1>, vector<8x32xf32>
    %c0_8 = arith.constant 0 : index
    %c0_9 = arith.constant 0 : index
    %21 = vector.load %arg4[%c0_8, %c0_9] : memref<8x32xf32, #tpu.memory_space<vmem>>, vector<8x32xf32>
    tpu.vector_store %arg4[%c0_8, %c0_9], %20 {strides = array<i32>} : memref<8x32xf32, #tpu.memory_space<vmem>>, vector<8x32xf32>,
    return
  }
  func.func @transform_0(%arg0: i32) -> (i32, i32) {
    %c0_i32 = arith.constant 0 : i32
    %c0_i32_0 = arith.constant 0 : i32
    return %arg0, %c0_i32 : i32, i32
  }
  func.func @transform_1(%arg0: i32) -> (i32, i32) {
    %c0_i32 = arith.constant 0 : i32
    %c0_i32_0 = arith.constant 0 : i32
    %c0_i32_1 = arith.constant 0 : i32
    return %c0_i32, %c0_i32_0 : i32, i32
  }
  func.func @transform_2(%arg0: i32) -> (i32, i32) {
    %c0_i32 = arith.constant 0 : i32
    %c0_i32_0 = arith.constant 0 : i32
    return %arg0, %c0_i32 : i32, i32
  }
  func.func @transform_3(%arg0: i32) -> (i32, i32) {
    %c0_i32 = arith.constant 0 : i32
    %c0_i32_0 = arith.constant 0 : i32
    return %arg0, %c0_i32 : i32, i32
  }
}

module attributes {stable_mosaic.version = 11 : i64} {
  func.func @_dw_stats_kernel(%arg0: i32, %arg1: memref<9x16x16xbf16, #tpu.memory_space<vmem>>, %arg2: memref<9x16xf32, #tpu.memory_space<vmem>>, %arg3: memref<16x16xbf16, #tpu.memory_space<vmem>>, %arg4: memref<8x16xf32, #tpu.memory_space<vmem>>) attributes {dimension_semantics = [#tpu.dimension_semantics<parallel>], iteration_bounds = array<i64: 2>, scalar_prefetch = 0 : i64, scratch_operands = 0 : i64, tpu.core_type = #tpu.core_type<tc>, window_params = [{transform_indices = @transform_0, window_bounds = array<i64: 9, 16, 16>}, {pipeline_mode = #tpu.pipeline_mode<synchronous>, transform_indices = @transform_1, window_bounds = array<i64: 9, 16>}, {transform_indices = @transform_2, window_bounds = array<i64: 16, 16>}, {transform_indices = @transform_3, window_bounds = array<i64: 8, 16>}]} {
    %c0 = arith.constant 0 : index
    %c0_0 = arith.constant 0 : index
    %c0_1 = arith.constant 0 : index
    %0 = vector.load %arg1[%c0, %c0_0, %c0_1] : memref<9x16x16xbf16, #tpu.memory_space<vmem>>, vector<1x16x16xbf16>
    %1 = vector.shape_cast %0 : vector<1x16x16xbf16> to vector<16x16xbf16>
    %2 = arith.extf %1 : vector<16x16xbf16> to vector<16x16xf32>
    %c0_2 = arith.constant 0 : index
    %c0_3 = arith.constant 0 : index
    %3 = vector.load %arg2[%c0_2, %c0_3] : memref<9x16xf32, #tpu.memory_space<vmem>>, vector<1x16xf32>
    %4 = vector.broadcast %3 : vector<1x16xf32> to vector<16x16xf32>
    %5 = arith.mulf %2, %4 : vector<16x16xf32>
    %c1 = arith.constant 1 : index
    %c0_4 = arith.constant 0 : index
    %c0_5 = arith.constant 0 : index
    %6 = vector.load %arg1[%c1, %c0_4, %c0_5] : memref<9x16x16xbf16, #tpu.memory_space<vmem>>, vector<1x16x16xbf16>
    %7 = vector.shape_cast %6 : vector<1x16x16xbf16> to vector<16x16xbf16>
    %8 = arith.extf %7 : vector<16x16xbf16> to vector<16x16xf32>
    %c1_6 = arith.constant 1 : index
    %c0_7 = arith.constant 0 : index
    %9 = vector.load %arg2[%c1_6, %c0_7] : memref<9x16xf32, #tpu.memory_space<vmem>>, vector<1x16xf32>
    %10 = vector.broadcast %9 : vector<1x16xf32> to vector<16x16xf32>
    %11 = arith.mulf %8, %10 : vector<16x16xf32>
    %12 = arith.addf %5, %11 : vector<16x16xf32>
    %c2 = arith.constant 2 : index
    %c0_8 = arith.constant 0 : index
    %c0_9 = arith.constant 0 : index
    %13 = vector.load %arg1[%c2, %c0_8, %c0_9] : memref<9x16x16xbf16, #tpu.memory_space<vmem>>, vector<1x16x16xbf16>
    %14 = vector.shape_cast %13 : vector<1x16x16xbf16> to vector<16x16xbf16>
    %15 = arith.extf %14 : vector<16x16xbf16> to vector<16x16xf32>
    %c2_10 = arith.constant 2 : index
    %c0_11 = arith.constant 0 : index
    %16 = vector.load %arg2[%c2_10, %c0_11] : memref<9x16xf32, #tpu.memory_space<vmem>>, vector<1x16xf32>
    %17 = vector.broadcast %16 : vector<1x16xf32> to vector<16x16xf32>
    %18 = arith.mulf %15, %17 : vector<16x16xf32>
    %19 = arith.addf %12, %18 : vector<16x16xf32>
    %c3 = arith.constant 3 : index
    %c0_12 = arith.constant 0 : index
    %c0_13 = arith.constant 0 : index
    %20 = vector.load %arg1[%c3, %c0_12, %c0_13] : memref<9x16x16xbf16, #tpu.memory_space<vmem>>, vector<1x16x16xbf16>
    %21 = vector.shape_cast %20 : vector<1x16x16xbf16> to vector<16x16xbf16>
    %22 = arith.extf %21 : vector<16x16xbf16> to vector<16x16xf32>
    %c3_14 = arith.constant 3 : index
    %c0_15 = arith.constant 0 : index
    %23 = vector.load %arg2[%c3_14, %c0_15] : memref<9x16xf32, #tpu.memory_space<vmem>>, vector<1x16xf32>
    %24 = vector.broadcast %23 : vector<1x16xf32> to vector<16x16xf32>
    %25 = arith.mulf %22, %24 : vector<16x16xf32>
    %26 = arith.addf %19, %25 : vector<16x16xf32>
    %c4 = arith.constant 4 : index
    %c0_16 = arith.constant 0 : index
    %c0_17 = arith.constant 0 : index
    %27 = vector.load %arg1[%c4, %c0_16, %c0_17] : memref<9x16x16xbf16, #tpu.memory_space<vmem>>, vector<1x16x16xbf16>
    %28 = vector.shape_cast %27 : vector<1x16x16xbf16> to vector<16x16xbf16>
    %29 = arith.extf %28 : vector<16x16xbf16> to vector<16x16xf32>
    %c4_18 = arith.constant 4 : index
    %c0_19 = arith.constant 0 : index
    %30 = vector.load %arg2[%c4_18, %c0_19] : memref<9x16xf32, #tpu.memory_space<vmem>>, vector<1x16xf32>
    %31 = vector.broadcast %30 : vector<1x16xf32> to vector<16x16xf32>
    %32 = arith.mulf %29, %31 : vector<16x16xf32>
    %33 = arith.addf %26, %32 : vector<16x16xf32>
    %c5 = arith.constant 5 : index
    %c0_20 = arith.constant 0 : index
    %c0_21 = arith.constant 0 : index
    %34 = vector.load %arg1[%c5, %c0_20, %c0_21] : memref<9x16x16xbf16, #tpu.memory_space<vmem>>, vector<1x16x16xbf16>
    %35 = vector.shape_cast %34 : vector<1x16x16xbf16> to vector<16x16xbf16>
    %36 = arith.extf %35 : vector<16x16xbf16> to vector<16x16xf32>
    %c5_22 = arith.constant 5 : index
    %c0_23 = arith.constant 0 : index
    %37 = vector.load %arg2[%c5_22, %c0_23] : memref<9x16xf32, #tpu.memory_space<vmem>>, vector<1x16xf32>
    %38 = vector.broadcast %37 : vector<1x16xf32> to vector<16x16xf32>
    %39 = arith.mulf %36, %38 : vector<16x16xf32>
    %40 = arith.addf %33, %39 : vector<16x16xf32>
    %c6 = arith.constant 6 : index
    %c0_24 = arith.constant 0 : index
    %c0_25 = arith.constant 0 : index
    %41 = vector.load %arg1[%c6, %c0_24, %c0_25] : memref<9x16x16xbf16, #tpu.memory_space<vmem>>, vector<1x16x16xbf16>
    %42 = vector.shape_cast %41 : vector<1x16x16xbf16> to vector<16x16xbf16>
    %43 = arith.extf %42 : vector<16x16xbf16> to vector<16x16xf32>
    %c6_26 = arith.constant 6 : index
    %c0_27 = arith.constant 0 : index
    %44 = vector.load %arg2[%c6_26, %c0_27] : memref<9x16xf32, #tpu.memory_space<vmem>>, vector<1x16xf32>
    %45 = vector.broadcast %44 : vector<1x16xf32> to vector<16x16xf32>
    %46 = arith.mulf %43, %45 : vector<16x16xf32>
    %47 = arith.addf %40, %46 : vector<16x16xf32>
    %c7 = arith.constant 7 : index
    %c0_28 = arith.constant 0 : index
    %c0_29 = arith.constant 0 : index
    %48 = vector.load %arg1[%c7, %c0_28, %c0_29] : memref<9x16x16xbf16, #tpu.memory_space<vmem>>, vector<1x16x16xbf16>
    %49 = vector.shape_cast %48 : vector<1x16x16xbf16> to vector<16x16xbf16>
    %50 = arith.extf %49 : vector<16x16xbf16> to vector<16x16xf32>
    %c7_30 = arith.constant 7 : index
    %c0_31 = arith.constant 0 : index
    %51 = vector.load %arg2[%c7_30, %c0_31] : memref<9x16xf32, #tpu.memory_space<vmem>>, vector<1x16xf32>
    %52 = vector.broadcast %51 : vector<1x16xf32> to vector<16x16xf32>
    %53 = arith.mulf %50, %52 : vector<16x16xf32>
    %54 = arith.addf %47, %53 : vector<16x16xf32>
    %c8 = arith.constant 8 : index
    %c0_32 = arith.constant 0 : index
    %c0_33 = arith.constant 0 : index
    %55 = vector.load %arg1[%c8, %c0_32, %c0_33] : memref<9x16x16xbf16, #tpu.memory_space<vmem>>, vector<1x16x16xbf16>
    %56 = vector.shape_cast %55 : vector<1x16x16xbf16> to vector<16x16xbf16>
    %57 = arith.extf %56 : vector<16x16xbf16> to vector<16x16xf32>
    %c8_34 = arith.constant 8 : index
    %c0_35 = arith.constant 0 : index
    %58 = vector.load %arg2[%c8_34, %c0_35] : memref<9x16xf32, #tpu.memory_space<vmem>>, vector<1x16xf32>
    %59 = vector.broadcast %58 : vector<1x16xf32> to vector<16x16xf32>
    %60 = arith.mulf %57, %59 : vector<16x16xf32>
    %61 = arith.addf %54, %60 : vector<16x16xf32>
    %62 = arith.truncf %61 : vector<16x16xf32> to vector<16x16xbf16>
    %c0_36 = arith.constant 0 : index
    %c0_37 = arith.constant 0 : index
    %63 = vector.load %arg3[%c0_36, %c0_37] : memref<16x16xbf16, #tpu.memory_space<vmem>>, vector<16x16xbf16>
    tpu.vector_store %arg3[%c0_36, %c0_37], %62 {strides = array<i32>} : memref<16x16xbf16, #tpu.memory_space<vmem>>, vector<16x16xbf16>,
    %cst = arith.constant dense<0.000000e+00> : vector<16xf32>
    %64 = vector.multi_reduction <add>, %61, %cst [0] : vector<16x16xf32> to vector<16xf32>
    %65 = vector.shape_cast %64 : vector<16xf32> to vector<1x16xf32>
    %66 = arith.mulf %61, %61 : vector<16x16xf32>
    %cst_38 = arith.constant dense<0.000000e+00> : vector<16xf32>
    %67 = vector.multi_reduction <add>, %66, %cst_38 [0] : vector<16x16xf32> to vector<16xf32>
    %68 = vector.shape_cast %67 : vector<16xf32> to vector<1x16xf32>
    %69 = tpu.iota {dimensions = array<i32: 0>} : vector<8x16xi32>
    %c0_i32 = arith.constant 0 : i32
    %70 = vector.broadcast %c0_i32 : i32 to vector<8x16xi32>
    %71 = arith.cmpi eq, %69, %70 : vector<8x16xi32>
    %c1_i32 = arith.constant 1 : i32
    %72 = vector.broadcast %c1_i32 : i32 to vector<8x16xi32>
    %73 = arith.cmpi eq, %69, %72 : vector<8x16xi32>
    %cst_39 = arith.constant 0.000000e+00 : f32
    %74 = vector.shape_cast %68 : vector<1x16xf32> to vector<1x16xf32>
    %75 = vector.broadcast %74 : vector<1x16xf32> to vector<8x16xf32>
    %76 = vector.broadcast %cst_39 : f32 to vector<8x16xf32>
    %77 = arith.select %73, %75, %76 : vector<8x16xi1>, vector<8x16xf32>
    %78 = vector.shape_cast %65 : vector<1x16xf32> to vector<1x16xf32>
    %79 = vector.broadcast %78 : vector<1x16xf32> to vector<8x16xf32>
    %80 = arith.select %71, %79, %77 : vector<8x16xi1>, vector<8x16xf32>
    %c0_40 = arith.constant 0 : index
    %c0_41 = arith.constant 0 : index
    %81 = vector.load %arg4[%c0_40, %c0_41] : memref<8x16xf32, #tpu.memory_space<vmem>>, vector<8x16xf32>
    tpu.vector_store %arg4[%c0_40, %c0_41], %80 {strides = array<i32>} : memref<8x16xf32, #tpu.memory_space<vmem>>, vector<8x16xf32>,
    return
  }
  func.func @transform_0(%arg0: i32) -> (i32, i32, i32) {
    %c0_i32 = arith.constant 0 : i32
    %c0_i32_0 = arith.constant 0 : i32
    %c0_i32_1 = arith.constant 0 : i32
    return %c0_i32, %arg0, %c0_i32_0 : i32, i32, i32
  }
  func.func @transform_1(%arg0: i32) -> (i32, i32) {
    %c0_i32 = arith.constant 0 : i32
    %c0_i32_0 = arith.constant 0 : i32
    %c0_i32_1 = arith.constant 0 : i32
    return %c0_i32, %c0_i32_0 : i32, i32
  }
  func.func @transform_2(%arg0: i32) -> (i32, i32) {
    %c0_i32 = arith.constant 0 : i32
    %c0_i32_0 = arith.constant 0 : i32
    return %arg0, %c0_i32 : i32, i32
  }
  func.func @transform_3(%arg0: i32) -> (i32, i32) {
    %c0_i32 = arith.constant 0 : i32
    %c0_i32_0 = arith.constant 0 : i32
    return %arg0, %c0_i32 : i32, i32
  }
}

module attributes {stable_mosaic.version = 11 : i64} {
  func.func @_gemm_stats_kernel(%arg0: i32, %arg1: memref<16x16xbf16, #tpu.memory_space<vmem>>, %arg2: memref<16x16xbf16, #tpu.memory_space<vmem>>, %arg3: memref<16x16xf32, #tpu.memory_space<vmem>>, %arg4: memref<8x16xf32, #tpu.memory_space<vmem>>) attributes {dimension_semantics = [#tpu.dimension_semantics<parallel>], iteration_bounds = array<i64: 2>, scalar_prefetch = 0 : i64, scratch_operands = 0 : i64, tpu.core_type = #tpu.core_type<tc>, window_params = [{transform_indices = @transform_0, window_bounds = array<i64: 16, 16>}, {pipeline_mode = #tpu.pipeline_mode<synchronous>, transform_indices = @transform_1, window_bounds = array<i64: 16, 16>}, {transform_indices = @transform_2, window_bounds = array<i64: 16, 16>}, {transform_indices = @transform_3, window_bounds = array<i64: 8, 16>}]} {
    %c0 = arith.constant 0 : index
    %c0_0 = arith.constant 0 : index
    %0 = vector.load %arg1[%c0, %c0_0] : memref<16x16xbf16, #tpu.memory_space<vmem>>, vector<16x16xbf16>
    %c0_1 = arith.constant 0 : index
    %c0_2 = arith.constant 0 : index
    %1 = vector.load %arg2[%c0_1, %c0_2] : memref<16x16xbf16, #tpu.memory_space<vmem>>, vector<16x16xbf16>
    %cst = arith.constant dense<0.000000e+00> : vector<16x16xf32>
    %2 = tpu.matmul %0, %1, %cst {dimension_numbers = #tpu.dot_dimension_numbers<[1], [0], [0], [1], [0, 0, 1, 1], [], []>} : vector<16x16xbf16>, vector<16x16xbf16>, vector<16x16xf32> -> vector<16x16xf32>
    %c0_3 = arith.constant 0 : index
    %c0_4 = arith.constant 0 : index
    %3 = vector.load %arg3[%c0_3, %c0_4] : memref<16x16xf32, #tpu.memory_space<vmem>>, vector<16x16xf32>
    tpu.vector_store %arg3[%c0_3, %c0_4], %2 {strides = array<i32>} : memref<16x16xf32, #tpu.memory_space<vmem>>, vector<16x16xf32>,
    %cst_5 = arith.constant dense<0.000000e+00> : vector<16xf32>
    %4 = vector.multi_reduction <add>, %2, %cst_5 [0] : vector<16x16xf32> to vector<16xf32>
    %5 = vector.shape_cast %4 : vector<16xf32> to vector<1x16xf32>
    %6 = arith.mulf %2, %2 : vector<16x16xf32>
    %cst_6 = arith.constant dense<0.000000e+00> : vector<16xf32>
    %7 = vector.multi_reduction <add>, %6, %cst_6 [0] : vector<16x16xf32> to vector<16xf32>
    %8 = vector.shape_cast %7 : vector<16xf32> to vector<1x16xf32>
    %9 = tpu.iota {dimensions = array<i32: 0>} : vector<8x16xi32>
    %c0_i32 = arith.constant 0 : i32
    %10 = vector.broadcast %c0_i32 : i32 to vector<8x16xi32>
    %11 = arith.cmpi eq, %9, %10 : vector<8x16xi32>
    %c1_i32 = arith.constant 1 : i32
    %12 = vector.broadcast %c1_i32 : i32 to vector<8x16xi32>
    %13 = arith.cmpi eq, %9, %12 : vector<8x16xi32>
    %cst_7 = arith.constant 0.000000e+00 : f32
    %14 = vector.shape_cast %8 : vector<1x16xf32> to vector<1x16xf32>
    %15 = vector.broadcast %14 : vector<1x16xf32> to vector<8x16xf32>
    %16 = vector.broadcast %cst_7 : f32 to vector<8x16xf32>
    %17 = arith.select %13, %15, %16 : vector<8x16xi1>, vector<8x16xf32>
    %18 = vector.shape_cast %5 : vector<1x16xf32> to vector<1x16xf32>
    %19 = vector.broadcast %18 : vector<1x16xf32> to vector<8x16xf32>
    %20 = arith.select %11, %19, %17 : vector<8x16xi1>, vector<8x16xf32>
    %c0_8 = arith.constant 0 : index
    %c0_9 = arith.constant 0 : index
    %21 = vector.load %arg4[%c0_8, %c0_9] : memref<8x16xf32, #tpu.memory_space<vmem>>, vector<8x16xf32>
    tpu.vector_store %arg4[%c0_8, %c0_9], %20 {strides = array<i32>} : memref<8x16xf32, #tpu.memory_space<vmem>>, vector<8x16xf32>,
    return
  }
  func.func @transform_0(%arg0: i32) -> (i32, i32) {
    %c0_i32 = arith.constant 0 : i32
    %c0_i32_0 = arith.constant 0 : i32
    return %arg0, %c0_i32 : i32, i32
  }
  func.func @transform_1(%arg0: i32) -> (i32, i32) {
    %c0_i32 = arith.constant 0 : i32
    %c0_i32_0 = arith.constant 0 : i32
    %c0_i32_1 = arith.constant 0 : i32
    return %c0_i32, %c0_i32_0 : i32, i32
  }
  func.func @transform_2(%arg0: i32) -> (i32, i32) {
    %c0_i32 = arith.constant 0 : i32
    %c0_i32_0 = arith.constant 0 : i32
    return %arg0, %c0_i32 : i32, i32
  }
  func.func @transform_3(%arg0: i32) -> (i32, i32) {
    %c0_i32 = arith.constant 0 : i32
    %c0_i32_0 = arith.constant 0 : i32
    return %arg0, %c0_i32 : i32, i32
  }
}

module attributes {stable_mosaic.version = 11 : i64} {
  func.func @_bn_act_gemm_stats_kernel(%arg0: i32, %arg1: memref<64x32xf32, #tpu.memory_space<vmem>>, %arg2: memref<1x32xf32, #tpu.memory_space<vmem>>, %arg3: memref<1x32xf32, #tpu.memory_space<vmem>>, %arg4: memref<32x32xbf16, #tpu.memory_space<vmem>>, %arg5: memref<64x32xbf16, #tpu.memory_space<vmem>>, %arg6: memref<8x32xf32, #tpu.memory_space<vmem>>) attributes {dimension_semantics = [#tpu.dimension_semantics<parallel>], iteration_bounds = array<i64: 2>, scalar_prefetch = 0 : i64, scratch_operands = 0 : i64, tpu.core_type = #tpu.core_type<tc>, window_params = [{transform_indices = @transform_0, window_bounds = array<i64: 64, 32>}, {pipeline_mode = #tpu.pipeline_mode<synchronous>, transform_indices = @transform_1, window_bounds = array<i64: 1, 32>}, {pipeline_mode = #tpu.pipeline_mode<synchronous>, transform_indices = @transform_2, window_bounds = array<i64: 1, 32>}, {pipeline_mode = #tpu.pipeline_mode<synchronous>, transform_indices = @transform_3, window_bounds = array<i64: 32, 32>}, {transform_indices = @transform_4, window_bounds = array<i64: 64, 32>}, {transform_indices = @transform_5, window_bounds = array<i64: 8, 32>}]} {
    %c0 = arith.constant 0 : index
    %c0_0 = arith.constant 0 : index
    %0 = vector.load %arg1[%c0, %c0_0] : memref<64x32xf32, #tpu.memory_space<vmem>>, vector<64x32xf32>
    %c0_1 = arith.constant 0 : index
    %c0_2 = arith.constant 0 : index
    %1 = vector.load %arg2[%c0_1, %c0_2] : memref<1x32xf32, #tpu.memory_space<vmem>>, vector<1x32xf32>
    %2 = vector.broadcast %1 : vector<1x32xf32> to vector<64x32xf32>
    %3 = arith.mulf %0, %2 : vector<64x32xf32>
    %c0_3 = arith.constant 0 : index
    %c0_4 = arith.constant 0 : index
    %4 = vector.load %arg3[%c0_3, %c0_4] : memref<1x32xf32, #tpu.memory_space<vmem>>, vector<1x32xf32>
    %5 = vector.broadcast %4 : vector<1x32xf32> to vector<64x32xf32>
    %6 = arith.addf %3, %5 : vector<64x32xf32>
    %cst = arith.constant 0.00999999977 : f32
    %7 = vector.broadcast %cst : f32 to vector<64x32xf32>
    %8 = arith.mulf %7, %6 : vector<64x32xf32>
    %9 = arith.maximumf %6, %8 : vector<64x32xf32>
    %c64_i32 = arith.constant 64 : i32
    %10 = arith.muli %arg0, %c64_i32 : i32
    %11 = tpu.iota {dimensions = array<i32: 0>} : vector<64x32xi32>
    %12 = vector.broadcast %10 : i32 to vector<64x32xi32>
    %13 = arith.addi %12, %11 : vector<64x32xi32>
    %c128_i32 = arith.constant 128 : i32
    %14 = vector.broadcast %c128_i32 : i32 to vector<64x32xi32>
    %15 = arith.cmpi slt, %13, %14 : vector<64x32xi32>
    %cst_5 = arith.constant 0.000000e+00 : f32
    %16 = vector.broadcast %cst_5 : f32 to vector<64x32xf32>
    %17 = arith.select %15, %9, %16 : vector<64x32xi1>, vector<64x32xf32>
    %18 = arith.truncf %17 : vector<64x32xf32> to vector<64x32xbf16>
    %c0_6 = arith.constant 0 : index
    %c0_7 = arith.constant 0 : index
    %19 = vector.load %arg4[%c0_6, %c0_7] : memref<32x32xbf16, #tpu.memory_space<vmem>>, vector<32x32xbf16>
    %cst_8 = arith.constant dense<0.000000e+00> : vector<64x32xf32>
    %20 = tpu.matmul %18, %19, %cst_8 {dimension_numbers = #tpu.dot_dimension_numbers<[1], [0], [0], [1], [0, 0, 1, 1], [], []>} : vector<64x32xbf16>, vector<32x32xbf16>, vector<64x32xf32> -> vector<64x32xf32>
    %21 = arith.truncf %20 : vector<64x32xf32> to vector<64x32xbf16>
    %c0_9 = arith.constant 0 : index
    %c0_10 = arith.constant 0 : index
    %22 = vector.load %arg5[%c0_9, %c0_10] : memref<64x32xbf16, #tpu.memory_space<vmem>>, vector<64x32xbf16>
    tpu.vector_store %arg5[%c0_9, %c0_10], %21 {strides = array<i32>} : memref<64x32xbf16, #tpu.memory_space<vmem>>, vector<64x32xbf16>,
    %cst_11 = arith.constant dense<0.000000e+00> : vector<32xf32>
    %23 = vector.multi_reduction <add>, %20, %cst_11 [0] : vector<64x32xf32> to vector<32xf32>
    %24 = vector.shape_cast %23 : vector<32xf32> to vector<1x32xf32>
    %25 = arith.mulf %20, %20 : vector<64x32xf32>
    %cst_12 = arith.constant dense<0.000000e+00> : vector<32xf32>
    %26 = vector.multi_reduction <add>, %25, %cst_12 [0] : vector<64x32xf32> to vector<32xf32>
    %27 = vector.shape_cast %26 : vector<32xf32> to vector<1x32xf32>
    %28 = tpu.iota {dimensions = array<i32: 0>} : vector<8x32xi32>
    %c0_i32 = arith.constant 0 : i32
    %29 = vector.broadcast %c0_i32 : i32 to vector<8x32xi32>
    %30 = arith.cmpi eq, %28, %29 : vector<8x32xi32>
    %c1_i32 = arith.constant 1 : i32
    %31 = vector.broadcast %c1_i32 : i32 to vector<8x32xi32>
    %32 = arith.cmpi eq, %28, %31 : vector<8x32xi32>
    %cst_13 = arith.constant 0.000000e+00 : f32
    %33 = vector.shape_cast %27 : vector<1x32xf32> to vector<1x32xf32>
    %34 = vector.broadcast %33 : vector<1x32xf32> to vector<8x32xf32>
    %35 = vector.broadcast %cst_13 : f32 to vector<8x32xf32>
    %36 = arith.select %32, %34, %35 : vector<8x32xi1>, vector<8x32xf32>
    %37 = vector.shape_cast %24 : vector<1x32xf32> to vector<1x32xf32>
    %38 = vector.broadcast %37 : vector<1x32xf32> to vector<8x32xf32>
    %39 = arith.select %30, %38, %36 : vector<8x32xi1>, vector<8x32xf32>
    %c0_14 = arith.constant 0 : index
    %c0_15 = arith.constant 0 : index
    %40 = vector.load %arg6[%c0_14, %c0_15] : memref<8x32xf32, #tpu.memory_space<vmem>>, vector<8x32xf32>
    tpu.vector_store %arg6[%c0_14, %c0_15], %39 {strides = array<i32>} : memref<8x32xf32, #tpu.memory_space<vmem>>, vector<8x32xf32>,
    return
  }
  func.func @transform_0(%arg0: i32) -> (i32, i32) {
    %c0_i32 = arith.constant 0 : i32
    %c0_i32_0 = arith.constant 0 : i32
    return %arg0, %c0_i32 : i32, i32
  }
  func.func @transform_1(%arg0: i32) -> (i32, i32) {
    %c0_i32 = arith.constant 0 : i32
    %c0_i32_0 = arith.constant 0 : i32
    %c0_i32_1 = arith.constant 0 : i32
    return %c0_i32, %c0_i32_0 : i32, i32
  }
  func.func @transform_2(%arg0: i32) -> (i32, i32) {
    %c0_i32 = arith.constant 0 : i32
    %c0_i32_0 = arith.constant 0 : i32
    %c0_i32_1 = arith.constant 0 : i32
    return %c0_i32, %c0_i32_0 : i32, i32
  }
  func.func @transform_3(%arg0: i32) -> (i32, i32) {
    %c0_i32 = arith.constant 0 : i32
    %c0_i32_0 = arith.constant 0 : i32
    %c0_i32_1 = arith.constant 0 : i32
    return %c0_i32, %c0_i32_0 : i32, i32
  }
  func.func @transform_4(%arg0: i32) -> (i32, i32) {
    %c0_i32 = arith.constant 0 : i32
    %c0_i32_0 = arith.constant 0 : i32
    return %arg0, %c0_i32 : i32, i32
  }
  func.func @transform_5(%arg0: i32) -> (i32, i32) {
    %c0_i32 = arith.constant 0 : i32
    %c0_i32_0 = arith.constant 0 : i32
    return %arg0, %c0_i32 : i32, i32
  }
}

module attributes {stable_mosaic.version = 11 : i64} {
  func.func @_dw_stats_kernel(%arg0: i32, %arg1: memref<9x16x32xbf16, #tpu.memory_space<vmem>>, %arg2: memref<9x32xf32, #tpu.memory_space<vmem>>, %arg3: memref<16x32xbf16, #tpu.memory_space<vmem>>, %arg4: memref<8x32xf32, #tpu.memory_space<vmem>>) attributes {dimension_semantics = [#tpu.dimension_semantics<parallel>], iteration_bounds = array<i64: 2>, scalar_prefetch = 0 : i64, scratch_operands = 0 : i64, tpu.core_type = #tpu.core_type<tc>, window_params = [{transform_indices = @transform_0, window_bounds = array<i64: 9, 16, 32>}, {pipeline_mode = #tpu.pipeline_mode<synchronous>, transform_indices = @transform_1, window_bounds = array<i64: 9, 32>}, {transform_indices = @transform_2, window_bounds = array<i64: 16, 32>}, {transform_indices = @transform_3, window_bounds = array<i64: 8, 32>}]} {
    %c0 = arith.constant 0 : index
    %c0_0 = arith.constant 0 : index
    %c0_1 = arith.constant 0 : index
    %0 = vector.load %arg1[%c0, %c0_0, %c0_1] : memref<9x16x32xbf16, #tpu.memory_space<vmem>>, vector<1x16x32xbf16>
    %1 = vector.shape_cast %0 : vector<1x16x32xbf16> to vector<16x32xbf16>
    %2 = arith.extf %1 : vector<16x32xbf16> to vector<16x32xf32>
    %c0_2 = arith.constant 0 : index
    %c0_3 = arith.constant 0 : index
    %3 = vector.load %arg2[%c0_2, %c0_3] : memref<9x32xf32, #tpu.memory_space<vmem>>, vector<1x32xf32>
    %4 = vector.broadcast %3 : vector<1x32xf32> to vector<16x32xf32>
    %5 = arith.mulf %2, %4 : vector<16x32xf32>
    %c1 = arith.constant 1 : index
    %c0_4 = arith.constant 0 : index
    %c0_5 = arith.constant 0 : index
    %6 = vector.load %arg1[%c1, %c0_4, %c0_5] : memref<9x16x32xbf16, #tpu.memory_space<vmem>>, vector<1x16x32xbf16>
    %7 = vector.shape_cast %6 : vector<1x16x32xbf16> to vector<16x32xbf16>
    %8 = arith.extf %7 : vector<16x32xbf16> to vector<16x32xf32>
    %c1_6 = arith.constant 1 : index
    %c0_7 = arith.constant 0 : index
    %9 = vector.load %arg2[%c1_6, %c0_7] : memref<9x32xf32, #tpu.memory_space<vmem>>, vector<1x32xf32>
    %10 = vector.broadcast %9 : vector<1x32xf32> to vector<16x32xf32>
    %11 = arith.mulf %8, %10 : vector<16x32xf32>
    %12 = arith.addf %5, %11 : vector<16x32xf32>
    %c2 = arith.constant 2 : index
    %c0_8 = arith.constant 0 : index
    %c0_9 = arith.constant 0 : index
    %13 = vector.load %arg1[%c2, %c0_8, %c0_9] : memref<9x16x32xbf16, #tpu.memory_space<vmem>>, vector<1x16x32xbf16>
    %14 = vector.shape_cast %13 : vector<1x16x32xbf16> to vector<16x32xbf16>
    %15 = arith.extf %14 : vector<16x32xbf16> to vector<16x32xf32>
    %c2_10 = arith.constant 2 : index
    %c0_11 = arith.constant 0 : index
    %16 = vector.load %arg2[%c2_10, %c0_11] : memref<9x32xf32, #tpu.memory_space<vmem>>, vector<1x32xf32>
    %17 = vector.broadcast %16 : vector<1x32xf32> to vector<16x32xf32>
    %18 = arith.mulf %15, %17 : vector<16x32xf32>
    %19 = arith.addf %12, %18 : vector<16x32xf32>
    %c3 = arith.constant 3 : index
    %c0_12 = arith.constant 0 : index
    %c0_13 = arith.constant 0 : index
    %20 = vector.load %arg1[%c3, %c0_12, %c0_13] : memref<9x16x32xbf16, #tpu.memory_space<vmem>>, vector<1x16x32xbf16>
    %21 = vector.shape_cast %20 : vector<1x16x32xbf16> to vector<16x32xbf16>
    %22 = arith.extf %21 : vector<16x32xbf16> to vector<16x32xf32>
    %c3_14 = arith.constant 3 : index
    %c0_15 = arith.constant 0 : index
    %23 = vector.load %arg2[%c3_14, %c0_15] : memref<9x32xf32, #tpu.memory_space<vmem>>, vector<1x32xf32>
    %24 = vector.broadcast %23 : vector<1x32xf32> to vector<16x32xf32>
    %25 = arith.mulf %22, %24 : vector<16x32xf32>
    %26 = arith.addf %19, %25 : vector<16x32xf32>
    %c4 = arith.constant 4 : index
    %c0_16 = arith.constant 0 : index
    %c0_17 = arith.constant 0 : index
    %27 = vector.load %arg1[%c4, %c0_16, %c0_17] : memref<9x16x32xbf16, #tpu.memory_space<vmem>>, vector<1x16x32xbf16>
    %28 = vector.shape_cast %27 : vector<1x16x32xbf16> to vector<16x32xbf16>
    %29 = arith.extf %28 : vector<16x32xbf16> to vector<16x32xf32>
    %c4_18 = arith.constant 4 : index
    %c0_19 = arith.constant 0 : index
    %30 = vector.load %arg2[%c4_18, %c0_19] : memref<9x32xf32, #tpu.memory_space<vmem>>, vector<1x32xf32>
    %31 = vector.broadcast %30 : vector<1x32xf32> to vector<16x32xf32>
    %32 = arith.mulf %29, %31 : vector<16x32xf32>
    %33 = arith.addf %26, %32 : vector<16x32xf32>
    %c5 = arith.constant 5 : index
    %c0_20 = arith.constant 0 : index
    %c0_21 = arith.constant 0 : index
    %34 = vector.load %arg1[%c5, %c0_20, %c0_21] : memref<9x16x32xbf16, #tpu.memory_space<vmem>>, vector<1x16x32xbf16>
    %35 = vector.shape_cast %34 : vector<1x16x32xbf16> to vector<16x32xbf16>
    %36 = arith.extf %35 : vector<16x32xbf16> to vector<16x32xf32>
    %c5_22 = arith.constant 5 : index
    %c0_23 = arith.constant 0 : index
    %37 = vector.load %arg2[%c5_22, %c0_23] : memref<9x32xf32, #tpu.memory_space<vmem>>, vector<1x32xf32>
    %38 = vector.broadcast %37 : vector<1x32xf32> to vector<16x32xf32>
    %39 = arith.mulf %36, %38 : vector<16x32xf32>
    %40 = arith.addf %33, %39 : vector<16x32xf32>
    %c6 = arith.constant 6 : index
    %c0_24 = arith.constant 0 : index
    %c0_25 = arith.constant 0 : index
    %41 = vector.load %arg1[%c6, %c0_24, %c0_25] : memref<9x16x32xbf16, #tpu.memory_space<vmem>>, vector<1x16x32xbf16>
    %42 = vector.shape_cast %41 : vector<1x16x32xbf16> to vector<16x32xbf16>
    %43 = arith.extf %42 : vector<16x32xbf16> to vector<16x32xf32>
    %c6_26 = arith.constant 6 : index
    %c0_27 = arith.constant 0 : index
    %44 = vector.load %arg2[%c6_26, %c0_27] : memref<9x32xf32, #tpu.memory_space<vmem>>, vector<1x32xf32>
    %45 = vector.broadcast %44 : vector<1x32xf32> to vector<16x32xf32>
    %46 = arith.mulf %43, %45 : vector<16x32xf32>
    %47 = arith.addf %40, %46 : vector<16x32xf32>
    %c7 = arith.constant 7 : index
    %c0_28 = arith.constant 0 : index
    %c0_29 = arith.constant 0 : index
    %48 = vector.load %arg1[%c7, %c0_28, %c0_29] : memref<9x16x32xbf16, #tpu.memory_space<vmem>>, vector<1x16x32xbf16>
    %49 = vector.shape_cast %48 : vector<1x16x32xbf16> to vector<16x32xbf16>
    %50 = arith.extf %49 : vector<16x32xbf16> to vector<16x32xf32>
    %c7_30 = arith.constant 7 : index
    %c0_31 = arith.constant 0 : index
    %51 = vector.load %arg2[%c7_30, %c0_31] : memref<9x32xf32, #tpu.memory_space<vmem>>, vector<1x32xf32>
    %52 = vector.broadcast %51 : vector<1x32xf32> to vector<16x32xf32>
    %53 = arith.mulf %50, %52 : vector<16x32xf32>
    %54 = arith.addf %47, %53 : vector<16x32xf32>
    %c8 = arith.constant 8 : index
    %c0_32 = arith.constant 0 : index
    %c0_33 = arith.constant 0 : index
    %55 = vector.load %arg1[%c8, %c0_32, %c0_33] : memref<9x16x32xbf16, #tpu.memory_space<vmem>>, vector<1x16x32xbf16>
    %56 = vector.shape_cast %55 : vector<1x16x32xbf16> to vector<16x32xbf16>
    %57 = arith.extf %56 : vector<16x32xbf16> to vector<16x32xf32>
    %c8_34 = arith.constant 8 : index
    %c0_35 = arith.constant 0 : index
    %58 = vector.load %arg2[%c8_34, %c0_35] : memref<9x32xf32, #tpu.memory_space<vmem>>, vector<1x32xf32>
    %59 = vector.broadcast %58 : vector<1x32xf32> to vector<16x32xf32>
    %60 = arith.mulf %57, %59 : vector<16x32xf32>
    %61 = arith.addf %54, %60 : vector<16x32xf32>
    %62 = arith.truncf %61 : vector<16x32xf32> to vector<16x32xbf16>
    %c0_36 = arith.constant 0 : index
    %c0_37 = arith.constant 0 : index
    %63 = vector.load %arg3[%c0_36, %c0_37] : memref<16x32xbf16, #tpu.memory_space<vmem>>, vector<16x32xbf16>
    tpu.vector_store %arg3[%c0_36, %c0_37], %62 {strides = array<i32>} : memref<16x32xbf16, #tpu.memory_space<vmem>>, vector<16x32xbf16>,
    %cst = arith.constant dense<0.000000e+00> : vector<32xf32>
    %64 = vector.multi_reduction <add>, %61, %cst [0] : vector<16x32xf32> to vector<32xf32>
    %65 = vector.shape_cast %64 : vector<32xf32> to vector<1x32xf32>
    %66 = arith.mulf %61, %61 : vector<16x32xf32>
    %cst_38 = arith.constant dense<0.000000e+00> : vector<32xf32>
    %67 = vector.multi_reduction <add>, %66, %cst_38 [0] : vector<16x32xf32> to vector<32xf32>
    %68 = vector.shape_cast %67 : vector<32xf32> to vector<1x32xf32>
    %69 = tpu.iota {dimensions = array<i32: 0>} : vector<8x32xi32>
    %c0_i32 = arith.constant 0 : i32
    %70 = vector.broadcast %c0_i32 : i32 to vector<8x32xi32>
    %71 = arith.cmpi eq, %69, %70 : vector<8x32xi32>
    %c1_i32 = arith.constant 1 : i32
    %72 = vector.broadcast %c1_i32 : i32 to vector<8x32xi32>
    %73 = arith.cmpi eq, %69, %72 : vector<8x32xi32>
    %cst_39 = arith.constant 0.000000e+00 : f32
    %74 = vector.shape_cast %68 : vector<1x32xf32> to vector<1x32xf32>
    %75 = vector.broadcast %74 : vector<1x32xf32> to vector<8x32xf32>
    %76 = vector.broadcast %cst_39 : f32 to vector<8x32xf32>
    %77 = arith.select %73, %75, %76 : vector<8x32xi1>, vector<8x32xf32>
    %78 = vector.shape_cast %65 : vector<1x32xf32> to vector<1x32xf32>
    %79 = vector.broadcast %78 : vector<1x32xf32> to vector<8x32xf32>
    %80 = arith.select %71, %79, %77 : vector<8x32xi1>, vector<8x32xf32>
    %c0_40 = arith.constant 0 : index
    %c0_41 = arith.constant 0 : index
    %81 = vector.load %arg4[%c0_40, %c0_41] : memref<8x32xf32, #tpu.memory_space<vmem>>, vector<8x32xf32>
    tpu.vector_store %arg4[%c0_40, %c0_41], %80 {strides = array<i32>} : memref<8x32xf32, #tpu.memory_space<vmem>>, vector<8x32xf32>,
    return
  }
  func.func @transform_0(%arg0: i32) -> (i32, i32, i32) {
    %c0_i32 = arith.constant 0 : i32
    %c0_i32_0 = arith.constant 0 : i32
    %c0_i32_1 = arith.constant 0 : i32
    return %c0_i32, %arg0, %c0_i32_0 : i32, i32, i32
  }
  func.func @transform_1(%arg0: i32) -> (i32, i32) {
    %c0_i32 = arith.constant 0 : i32
    %c0_i32_0 = arith.constant 0 : i32
    %c0_i32_1 = arith.constant 0 : i32
    return %c0_i32, %c0_i32_0 : i32, i32
  }
  func.func @transform_2(%arg0: i32) -> (i32, i32) {
    %c0_i32 = arith.constant 0 : i32
    %c0_i32_0 = arith.constant 0 : i32
    return %arg0, %c0_i32 : i32, i32
  }
  func.func @transform_3(%arg0: i32) -> (i32, i32) {
    %c0_i32 = arith.constant 0 : i32
    %c0_i32_0 = arith.constant 0 : i32
    return %arg0, %c0_i32 : i32, i32
  }
}

module attributes {stable_mosaic.version = 11 : i64} {
  func.func @_final_apply_kernel(%arg0: i32, %arg1: memref<16x16xf32, #tpu.memory_space<vmem>>, %arg2: memref<16x16xf32, #tpu.memory_space<vmem>>, %arg3: memref<1x32xf32, #tpu.memory_space<vmem>>, %arg4: memref<1x32xf32, #tpu.memory_space<vmem>>, %arg5: memref<16x32xf32, #tpu.memory_space<vmem>>) attributes {dimension_semantics = [#tpu.dimension_semantics<parallel>], iteration_bounds = array<i64: 2>, scalar_prefetch = 0 : i64, scratch_operands = 0 : i64, tpu.core_type = #tpu.core_type<tc>, window_params = [{transform_indices = @transform_0, window_bounds = array<i64: 16, 16>}, {transform_indices = @transform_1, window_bounds = array<i64: 16, 16>}, {pipeline_mode = #tpu.pipeline_mode<synchronous>, transform_indices = @transform_2, window_bounds = array<i64: 1, 32>}, {pipeline_mode = #tpu.pipeline_mode<synchronous>, transform_indices = @transform_3, window_bounds = array<i64: 1, 32>}, {transform_indices = @transform_4, window_bounds = array<i64: 16, 32>}]} {
    %c0 = arith.constant 0 : index
    %c0_0 = arith.constant 0 : index
    %0 = vector.load %arg1[%c0, %c0_0] : memref<16x16xf32, #tpu.memory_space<vmem>>, vector<16x16xf32>
    %c0_1 = arith.constant 0 : index
    %c0_2 = arith.constant 0 : index
    %1 = vector.load %arg2[%c0_1, %c0_2] : memref<16x16xf32, #tpu.memory_space<vmem>>, vector<16x16xf32>
    %2 = tpu.concatenate %0, %1 in 1 : vector<16x16xf32>, vector<16x16xf32> -> vector<16x32xf32>
    %c0_3 = arith.constant 0 : index
    %c0_4 = arith.constant 0 : index
    %3 = vector.load %arg3[%c0_3, %c0_4] : memref<1x32xf32, #tpu.memory_space<vmem>>, vector<1x32xf32>
    %4 = vector.broadcast %3 : vector<1x32xf32> to vector<16x32xf32>
    %5 = arith.mulf %2, %4 : vector<16x32xf32>
    %c0_5 = arith.constant 0 : index
    %c0_6 = arith.constant 0 : index
    %6 = vector.load %arg4[%c0_5, %c0_6] : memref<1x32xf32, #tpu.memory_space<vmem>>, vector<1x32xf32>
    %7 = vector.broadcast %6 : vector<1x32xf32> to vector<16x32xf32>
    %8 = arith.addf %5, %7 : vector<16x32xf32>
    %cst = arith.constant 0.00999999977 : f32
    %9 = vector.broadcast %cst : f32 to vector<16x32xf32>
    %10 = arith.mulf %9, %8 : vector<16x32xf32>
    %11 = arith.maximumf %8, %10 : vector<16x32xf32>
    %c0_7 = arith.constant 0 : index
    %c0_8 = arith.constant 0 : index
    %12 = vector.load %arg5[%c0_7, %c0_8] : memref<16x32xf32, #tpu.memory_space<vmem>>, vector<16x32xf32>
    tpu.vector_store %arg5[%c0_7, %c0_8], %11 {strides = array<i32>} : memref<16x32xf32, #tpu.memory_space<vmem>>, vector<16x32xf32>,
    return
  }
  func.func @transform_0(%arg0: i32) -> (i32, i32) {
    %c0_i32 = arith.constant 0 : i32
    %c0_i32_0 = arith.constant 0 : i32
    return %arg0, %c0_i32 : i32, i32
  }
  func.func @transform_1(%arg0: i32) -> (i32, i32) {
    %c0_i32 = arith.constant 0 : i32
    %c0_i32_0 = arith.constant 0 : i32
    return %arg0, %c0_i32 : i32, i32
  }
  func.func @transform_2(%arg0: i32) -> (i32, i32) {
    %c0_i32 = arith.constant 0 : i32
    %c0_i32_0 = arith.constant 0 : i32
    %c0_i32_1 = arith.constant 0 : i32
    return %c0_i32, %c0_i32_0 : i32, i32
  }
  func.func @transform_3(%arg0: i32) -> (i32, i32) {
    %c0_i32 = arith.constant 0 : i32
    %c0_i32_0 = arith.constant 0 : i32
    %c0_i32_1 = arith.constant 0 : i32
    return %c0_i32, %c0_i32_0 : i32, i32
  }
  func.func @transform_4(%arg0: i32) -> (i32, i32) {
    %c0_i32 = arith.constant 0 : i32
    %c0_i32_0 = arith.constant 0 : i32
    return %arg0, %c0_i32 : i32, i32
  }
}

module attributes {stable_mosaic.version = 11 : i64} {
  func.func @_gemm_stats_kernel(%arg0: i32, %arg1: memref<16x32xbf16, #tpu.memory_space<vmem>>, %arg2: memref<32x16xbf16, #tpu.memory_space<vmem>>, %arg3: memref<16x16xf32, #tpu.memory_space<vmem>>, %arg4: memref<8x16xf32, #tpu.memory_space<vmem>>) attributes {dimension_semantics = [#tpu.dimension_semantics<parallel>], iteration_bounds = array<i64: 2>, scalar_prefetch = 0 : i64, scratch_operands = 0 : i64, tpu.core_type = #tpu.core_type<tc>, window_params = [{transform_indices = @transform_0, window_bounds = array<i64: 16, 32>}, {pipeline_mode = #tpu.pipeline_mode<synchronous>, transform_indices = @transform_1, window_bounds = array<i64: 32, 16>}, {transform_indices = @transform_2, window_bounds = array<i64: 16, 16>}, {transform_indices = @transform_3, window_bounds = array<i64: 8, 16>}]} {
    %c0 = arith.constant 0 : index
    %c0_0 = arith.constant 0 : index
    %0 = vector.load %arg1[%c0, %c0_0] : memref<16x32xbf16, #tpu.memory_space<vmem>>, vector<16x32xbf16>
    %c0_1 = arith.constant 0 : index
    %c0_2 = arith.constant 0 : index
    %1 = vector.load %arg2[%c0_1, %c0_2] : memref<32x16xbf16, #tpu.memory_space<vmem>>, vector<32x16xbf16>
    %cst = arith.constant dense<0.000000e+00> : vector<16x16xf32>
    %2 = tpu.matmul %0, %1, %cst {dimension_numbers = #tpu.dot_dimension_numbers<[1], [0], [0], [1], [0, 0, 1, 1], [], []>} : vector<16x32xbf16>, vector<32x16xbf16>, vector<16x16xf32> -> vector<16x16xf32>
    %c0_3 = arith.constant 0 : index
    %c0_4 = arith.constant 0 : index
    %3 = vector.load %arg3[%c0_3, %c0_4] : memref<16x16xf32, #tpu.memory_space<vmem>>, vector<16x16xf32>
    tpu.vector_store %arg3[%c0_3, %c0_4], %2 {strides = array<i32>} : memref<16x16xf32, #tpu.memory_space<vmem>>, vector<16x16xf32>,
    %cst_5 = arith.constant dense<0.000000e+00> : vector<16xf32>
    %4 = vector.multi_reduction <add>, %2, %cst_5 [0] : vector<16x16xf32> to vector<16xf32>
    %5 = vector.shape_cast %4 : vector<16xf32> to vector<1x16xf32>
    %6 = arith.mulf %2, %2 : vector<16x16xf32>
    %cst_6 = arith.constant dense<0.000000e+00> : vector<16xf32>
    %7 = vector.multi_reduction <add>, %6, %cst_6 [0] : vector<16x16xf32> to vector<16xf32>
    %8 = vector.shape_cast %7 : vector<16xf32> to vector<1x16xf32>
    %9 = tpu.iota {dimensions = array<i32: 0>} : vector<8x16xi32>
    %c0_i32 = arith.constant 0 : i32
    %10 = vector.broadcast %c0_i32 : i32 to vector<8x16xi32>
    %11 = arith.cmpi eq, %9, %10 : vector<8x16xi32>
    %c1_i32 = arith.constant 1 : i32
    %12 = vector.broadcast %c1_i32 : i32 to vector<8x16xi32>
    %13 = arith.cmpi eq, %9, %12 : vector<8x16xi32>
    %cst_7 = arith.constant 0.000000e+00 : f32
    %14 = vector.shape_cast %8 : vector<1x16xf32> to vector<1x16xf32>
    %15 = vector.broadcast %14 : vector<1x16xf32> to vector<8x16xf32>
    %16 = vector.broadcast %cst_7 : f32 to vector<8x16xf32>
    %17 = arith.select %13, %15, %16 : vector<8x16xi1>, vector<8x16xf32>
    %18 = vector.shape_cast %5 : vector<1x16xf32> to vector<1x16xf32>
    %19 = vector.broadcast %18 : vector<1x16xf32> to vector<8x16xf32>
    %20 = arith.select %11, %19, %17 : vector<8x16xi1>, vector<8x16xf32>
    %c0_8 = arith.constant 0 : index
    %c0_9 = arith.constant 0 : index
    %21 = vector.load %arg4[%c0_8, %c0_9] : memref<8x16xf32, #tpu.memory_space<vmem>>, vector<8x16xf32>
    tpu.vector_store %arg4[%c0_8, %c0_9], %20 {strides = array<i32>} : memref<8x16xf32, #tpu.memory_space<vmem>>, vector<8x16xf32>,
    return
  }
  func.func @transform_0(%arg0: i32) -> (i32, i32) {
    %c0_i32 = arith.constant 0 : i32
    %c0_i32_0 = arith.constant 0 : i32
    return %arg0, %c0_i32 : i32, i32
  }
  func.func @transform_1(%arg0: i32) -> (i32, i32) {
    %c0_i32 = arith.constant 0 : i32
    %c0_i32_0 = arith.constant 0 : i32
    %c0_i32_1 = arith.constant 0 : i32
    return %c0_i32, %c0_i32_0 : i32, i32
  }
  func.func @transform_2(%arg0: i32) -> (i32, i32) {
    %c0_i32 = arith.constant 0 : i32
    %c0_i32_0 = arith.constant 0 : i32
    return %arg0, %c0_i32 : i32, i32
  }
  func.func @transform_3(%arg0: i32) -> (i32, i32) {
    %c0_i32 = arith.constant 0 : i32
    %c0_i32_0 = arith.constant 0 : i32
    return %arg0, %c0_i32 : i32, i32
  }
}

</mosaic_0001>

<llo_original>
// kernel: stem_forward.7
$region0: #{stem_forward.7}
  #allocation0 [shape = 'u32[]', space=smem, size = 0x4, offset = 0x4, fixed_abs, tag = 'smem constant byte address 0x4 - core index']
  #allocation1 [shape = 'u32[144,128]{1,0:T(1,128)}', space=vmem, size = 0x12000, scoped, tag = 'internal scratch']
  %s0 = inlined_call_operand.vmem [shape: bf16[128,36], index: 0, kind: input, shape index: {}]
  %s1 = inlined_call_operand.vmem [shape: bf16[36,32], index: 1, kind: input, shape index: {}]
  %s2 = inlined_call_operand.vmem [shape: f32[128,32], index: 2, kind: output, shape index: {0}]
  %s3 = inlined_call_operand.vmem [shape: f32[16,32], index: 3, kind: output, shape index: {1}]
  %4 = xla_tuple %s2, %s3
  %s5 = sld [smem:[#allocation0]]
  $region49: #{stem_forward.7} parent=0
    _
  %s7 = ssub.s32 1, %s5
  %s8 = scalar_select 0, %s7, %s5
  loop: start=0, step=1, limit=4
  $region2: #{stem_forward.7} parent=0 // loop_pre_header
    _
  $region3: #{stem_forward.7} parent=0 // loop_header
    %s10 = sphi 0, %s14
    %p11 = scmp.ge.s32.totalorder %s10, 4
    %s20 = sphi 0, %s22
    %s23 = sphi 0, %s20
    %s24 = sphi 0, %s23
    %s40 = sphi 0, %s24
    %s44 = sphi 0, %s44
    %s46 = sphi 0, %s44
    %s47 = sphi 0, %s46
    %s61 = sphi 0, %s47
    %s67 = sphi 0, %s69
    %s70 = sphi 0, %s67
    %s71 = sphi 0, %s70
    %s87 = sphi 0, %s71
    %s93 = sphi 0, %s95
    %s96 = sphi 0, %s93
    %s97 = sphi 0, %s96
    %s113 = sphi 0, %s97
  $region4: #{stem_forward.7} parent=0 // loop_header_branch
    %13 = sbr.rel (%p11) target = $region8
  $region5: #{stem_forward.7} parent=0 // loop_body
    %s15 = ssub.s32 %s10, 1
    %s16 = ssub.s32 %s10, 2
    %s17 = sadd.s32 %s10, 1
    %s18 = ssub.s32 %s10, %s17
    %p19 = scmp.eq.s32.totalorder %s18, 0
    %s21 = sadd.s32 %s20, 1
    %s22 = scalar_select %p19, %s20, %s21
    %p25 = pneg %p19
    %p26 = scmp.eq.s32.totalorder %s10, 1
    %p27 = por %p25, %p26
    %p28 = scmp.ne.s32.totalorder %s20, %s23
    %p29 = scmp.eq.s32.totalorder %s10, 0
    %p30 = por %p28, %p29
    %p31 = scmp.ne.s32.totalorder %s20, %s23
    %p32 = scmp.eq.s32.totalorder %s15, 1
    %p33 = por %p31, %p32
    %p34 = scmp.ne.s32.totalorder %s23, %s24
    %p35 = scmp.eq.s32.totalorder %s15, 0
    %p36 = por %p34, %p35
    %p37 = scmp.ne.s32.totalorder %s23, %s24
    %p38 = scmp.eq.s32.totalorder %s16, 1
    %p39 = por %p37, %p38
    %p41 = scmp.ne.s32.totalorder %s24, %s40
    %p42 = scmp.eq.s32.totalorder %s16, 0
    %p43 = por %p41, %p42
    %s45 = sadd.s32 %s44, 1
    %p48 = scmp.eq.s32.totalorder %s10, 1
    %p49 = scmp.ne.s32.totalorder %s44, %s46
    %p50 = scmp.eq.s32.totalorder %s10, 0
    %p51 = por %p49, %p50
    %p52 = scmp.ne.s32.totalorder %s44, %s46
    %p53 = scmp.eq.s32.totalorder %s15, 1
    %p54 = por %p52, %p53
    %p55 = scmp.ne.s32.totalorder %s46, %s47
    %p56 = scmp.eq.s32.totalorder %s15, 0
    %p57 = por %p55, %p56
    %p58 = scmp.ne.s32.totalorder %s46, %s47
    %p59 = scmp.eq.s32.totalorder %s16, 1
    %p60 = por %p58, %p59
    %p62 = scmp.ne.s32.totalorder %s47, %s61
    %p63 = scmp.eq.s32.totalorder %s16, 0
    %p64 = por %p62, %p63
    %s65 = ssub.s32 %s10, %s17
    %p66 = scmp.eq.s32.totalorder %s65, 0
    %s68 = sadd.s32 %s67, 1
    %s69 = scalar_select %p66, %s67, %s68
    %p72 = pneg %p66
    %p73 = scmp.eq.s32.totalorder %s10, 1
    %p74 = por %p72, %p73
    %p75 = scmp.ne.s32.totalorder %s67, %s70
    %p76 = scmp.eq.s32.totalorder %s10, 0
    %p77 = por %p75, %p76
    %p78 = scmp.ne.s32.totalorder %s67, %s70
    %p79 = scmp.eq.s32.totalorder %s15, 1
    %p80 = por %p78, %p79
    %p81 = scmp.ne.s32.totalorder %s70, %s71
    %p82 = scmp.eq.s32.totalorder %s15, 0
    %p83 = por %p81, %p82
    %p84 = scmp.ne.s32.totalorder %s70, %s71
    %p85 = scmp.eq.s32.totalorder %s16, 1
    %p86 = por %p84, %p85
    %p88 = scmp.ne.s32.totalorder %s71, %s87
    %p89 = scmp.eq.s32.totalorder %s16, 0
    %p90 = por %p88, %p89
    %s91 = ssub.s32 %s10, %s17
    %p92 = scmp.eq.s32.totalorder %s91, 0
    %s94 = sadd.s32 %s93, 1
    %s95 = scalar_select %p92, %s93, %s94
    %p98 = pneg %p92
    %p99 = scmp.eq.s32.totalorder %s10, 1
    %p100 = por %p98, %p99
    %p101 = scmp.ne.s32.totalorder %s93, %s96
    %p102 = scmp.eq.s32.totalorder %s10, 0
    %p103 = por %p101, %p102
    %p104 = scmp.ne.s32.totalorder %s93, %s96
    %p105 = scmp.eq.s32.totalorder %s15, 1
    %p106 = por %p104, %p105
    %p107 = scmp.ne.s32.totalorder %s96, %s97
    %p108 = scmp.eq.s32.totalorder %s15, 0
    %p109 = por %p107, %p108
    %p110 = scmp.ne.s32.totalorder %s96, %s97
    %p111 = scmp.eq.s32.totalorder %s16, 1
    %p112 = por %p110, %p111
    %p114 = scmp.ne.s32.totalorder %s97, %s113
    %p115 = scmp.eq.s32.totalorder %s16, 0
    %p116 = por %p114, %p115
    %p117 = scmp.le.s32.totalorder 1, %s10
    %p118 = scmp.lt.s32.totalorder %s10, 3
    %p119 = pnand %p117, %p118
    %p120 = pneg %p119
    // Predicated region
    $region9: #{stem_forward.7} parent=5 // pred_check
      _
    $region10: #{stem_forward.7} parent=5 // pred_check_branch
      %122 = sbr.rel (%p119) target = $region12
    $region11: #{stem_forward.7} parent=5 // pred_region
      %s123 = ssub.s32 %s10, 1
      // Predicated region
      $region13: #{stem_forward.7} parent=11 // pred_check
        %p124 = pneg %p57
      $region14: #{stem_forward.7} parent=11 // pred_check_branch
        %126 = sbr.rel (%p124) target = $region16
      $region15: #{stem_forward.7} parent=11 // pred_region
        _
      $region16: #{stem_forward.7} parent=11 // pred_fallthru
        _
    $region12: #{stem_forward.7} parent=5 // pred_fallthru
      _
    %p127 = scmp.lt.s32.totalorder %s10, 2
    // Predicated region
    $region17: #{stem_forward.7} parent=5 // pred_check
      %p128 = pneg %p127
    $region18: #{stem_forward.7} parent=5 // pred_check_branch
      %130 = sbr.rel (%p128) target = $region20
    $region19: #{stem_forward.7} parent=5 // pred_region
      // Predicated region
      $region21: #{stem_forward.7} parent=19 // pred_check
        %p131 = pneg %p30
      $region22: #{stem_forward.7} parent=19 // pred_check_branch
        %133 = sbr.rel (%p131) target = $region24
      $region23: #{stem_forward.7} parent=19 // pred_region
        %s134 = smul.u32 8, %s10
        %p135 = scmp.lt.s32.totalorder %s134, 15
        %s136 = scalar_select %p135, %s134, 15
        %s137 = smul.addr %s136, 4
        %s138 = scalar_lea.vmem %s0, %s137
        %s139 = smul.u32 8, %s10
      $region24: #{stem_forward.7} parent=19 // pred_fallthru
        _
    $region20: #{stem_forward.7} parent=5 // pred_fallthru
      _
    %p140 = scmp.le.s32.totalorder 1, %s10
    %p141 = scmp.lt.s32.totalorder %s10, 3
    %p142 = pnand %p140, %p141
    %p143 = pneg %p142
    // Predicated region
    $region25: #{stem_forward.7} parent=5 // pred_check
      _
    $region26: #{stem_forward.7} parent=5 // pred_check_branch
      %145 = sbr.rel (%p142) target = $region28
    $region27: #{stem_forward.7} parent=5 // pred_region
      %s146 = ssub.s32 %s10, 1
      %s147 = smul.u32 8, %s15
      %p148 = scmp.lt.s32.totalorder %s147, 15
      %s149 = scalar_select %p148, %s147, 15
      %s150 = smul.addr %s149, 4
      %s151 = scalar_lea.vmem %s0, %s150
      %p152 = pneg %p36
      %p153 = pneg %p33
      %p154 = pneg %p57
      %p155 = pneg %p54
      %p156 = pneg %p83
      %p157 = pneg %p80
      %s158 = smul.u32 8, %s15
      %p159 = scmp.lt.s32.totalorder %s158, 15
      %s160 = scalar_select %p159, %s158, 15
      %s161 = smul.addr %s160, 8
      %s162 = scalar_lea.vmem %s2, %s161
      %p163 = pneg %p109
      %p164 = pneg %p106
      %p165 = scmp.lt.s32.totalorder %s15, 1
      %s166 = scalar_select %p165, %s15, 1
      %s167 = smul.addr %s166, 8
      %s168 = scalar_lea.vmem %s3, %s167
      %s169 = smul.u32 8, %s15
      %p170 = scmp.lt.s32.totalorder %s169, 15
      %s171 = scalar_select %p170, %s169, 15
      %s172 = smul.addr %s171, 4
      %s173 = scalar_lea.vmem %s0, %s172
      %s174 = smul.u32 8, %s15
      %s175 = smul.u32 8, %s15
      %p176 = scmp.lt.s32.totalorder %s175, 15
      %s177 = scalar_select %p176, %s175, 15
      %s178 = smul.addr %s177, 8
      %s179 = scalar_lea.vmem %s2, %s178
      %s180 = smul.u32 8, %s15
      %p181 = scmp.lt.s32.totalorder %s15, 1
      %s182 = scalar_select %p181, %s15, 1
      %s183 = smul.addr %s182, 8
      %s184 = scalar_lea.vmem %s3, %s183
      %v186 = vld [vmem:[%s173] sm:$0xf]
      %v187 = vld [vmem:[%s173 + $0x4] sm:$0xf]
      %v188 = vld [vmem:[%s173 + $0x8] sm:$0xf]
      %v189 = vld [vmem:[%s173 + $0xc] sm:$0xf]
      %v190 = vld [vmem:[%s173 + $0x10] sm:$0xf]
      %v191 = vld [vmem:[%s173 + $0x14] sm:$0xf]
      %v192 = vld [vmem:[%s173 + $0x18] sm:$0xf]
      %v193 = vld [vmem:[%s173 + $0x1c] sm:$0xf]
      %v194 = vld [vmem:[%s1] sm:$0xf]
      %v195 = vld [vmem:[%s1 + $0x4] sm:$0xf]
      %v196 = vld [vmem:[%s1 + $0x8] sm:$0xf]
      %v197 = vld [vmem:[%s1 + $0xc] sm:$0xf]
      %v198 = vld [vmem:[%s1 + $0x10] sm:$0x3]
      %v207 = vunpack.c.l.b16 %v186
      %v208 = vunpack.c.l.b16 %v187
      %v209 = vunpack.c.l.b16 %v188
      %v210 = vunpack.c.l.b16 %v189
      %v211 = vunpack.c.l.b16 %v190
      %v212 = vunpack.c.l.b16 %v191
      %v213 = vunpack.c.l.b16 %v192
      %v214 = vunpack.c.l.b16 %v193
      %v215 = vpack.c.b16 %v208, %v207
      %v216 = vpack.c.b16 %v210, %v209
      %v217 = vpack.c.b16 %v212, %v211
      %v218 = vpack.c.b16 %v214, %v213
      %v224 = vunpack.c.l.b16 %v194
      %v225 = vunpack.c.l.b16 %v195
      %v226 = vunpack.c.l.b16 %v196
      %v227 = vunpack.c.l.b16 %v197
      %v228 = vunpack.c.l.b16 %v198
      %v229 = vpack.c.b16 %v225, %v224
      %v230 = vpack.c.b16 %v227, %v226
      %v231 = vpack.c.b16 %v228, %v228
      %vm234 = vcmask 293888
      %v236 = vsel %vm234, %v215, 0
      %v239 = vsel %vm234, %v216, 0
      %v242 = vsel %vm234, %v217, 0
      %v245 = vsel %vm234, %v218, 0
      %vm247 = vcmask 1041408
      %v249 = vsel %vm247, %v231, 0
      %251 = vmatprep.subr.bf16.mxu0 0
      %252 = vmatpush1.bf16.msra.mxu0 0
      %253 = vmatprep.subr.bf16.mxu0 0
      %254 = vmatpush1.bf16.msra.mxu0 0
      %255 = vmatprep.subr.bf16.mxu0 0
      %256 = vmatpush1.bf16.msra.mxu0 0
      %257 = vmatprep.subr.bf16.mxu0 0
      %258 = vmatpush1.bf16.msra.mxu0 0
      %259 = vmatprep.subr.bf16.mxu0 0
      %260 = vmatpush1.bf16.msra.mxu0 0
      %261 = vmatprep.subr.bf16.mxu0 0
      %262 = vmatpush1.bf16.msra.mxu0 %v249
      %263 = vmatprep.subr.bf16.mxu0 0
      %264 = vmatpush1.bf16.msra.mxu0 %v230
      %265 = vmatprep.subr.bf16.mxu0 0
      %266 = vmatpush1.bf16.msra.mxu0 %v229
      %267 = vmatprep.subr.bf16.mxu0 0
      %268 = vmatpush2.bf16.msra.mxu0 0
      %269 = vmatprep.subr.bf16.mxu0 0
      %270 = vmatpush2.bf16.msra.mxu0 0
      %271 = vmatprep.subr.bf16.mxu0 0
      %272 = vmatpush2.bf16.msra.mxu0 0
      %273 = vmatprep.subr.bf16.mxu0 0
      %274 = vmatpush2.bf16.msra.mxu0 0
      %275 = vmatprep.subr.bf16.mxu0 0
      %276 = vmatpush2.bf16.msra.mxu0 0
      %277 = vmatprep.subr.bf16.mxu0 0
      %278 = vmatpush2.bf16.msra.mxu0 0
      %279 = vmatprep.subr.bf16.mxu0 0
      %280 = vmatpush2.bf16.msra.mxu0 0
      %281 = vmatprep.subr.bf16.mxu0 0
      %282 = vmatpush2.bf16.msra.mxu0 0
      %283 = vmatprep.mubr.bf16.mxu0 0
      %284 = vmatmul.mubr.bf16.gmra.mxu0 %v236
      %v285 = vpop.f32.mrf.mxu0
      %v286 = vadd.f32 0.0, %v285
      %v287 = vpop.f32.mrf.mxu0
      %v288 = vpop.f32.mrf.mxu0
      %v289 = vadd.f32 0.0, %v288
      %v290 = vpop.f32.mrf.mxu0
      %291 = vmatprep.mubr.bf16.mxu0 0
      %292 = vmatmul.mubr.bf16.gmra.mxu0 %v239
      %v293 = vpop.f32.mrf.mxu0
      %v294 = vadd.f32 0.0, %v293
      %v295 = vpop.f32.mrf.mxu0
      %v296 = vpop.f32.mrf.mxu0
      %v297 = vadd.f32 0.0, %v296
      %v298 = vpop.f32.mrf.mxu0
      %299 = vmatprep.mubr.bf16.mxu0 0
      %300 = vmatmul.mubr.bf16.gmra.mxu0 %v242
      %v301 = vpop.f32.mrf.mxu0
      %v302 = vadd.f32 0.0, %v301
      %v303 = vpop.f32.mrf.mxu0
      %v304 = vpop.f32.mrf.mxu0
      %v305 = vadd.f32 0.0, %v304
      %v306 = vpop.f32.mrf.mxu0
      %307 = vmatprep.mubr.bf16.mxu0 0
      %308 = vmatmul.mubr.bf16.gmra.mxu0 %v245
      %v309 = vpop.f32.mrf.mxu0
      %v310 = vadd.f32 0.0, %v309
      %v311 = vpop.f32.mrf.mxu0
      %v312 = vpop.f32.mrf.mxu0
      %v313 = vadd.f32 0.0, %v312
      %v314 = vpop.f32.mrf.mxu0
      %315 = vdwg.mxu0
      %vm316 = vcmask 261120
      %317 = vst.msk [vmem:[%s179] sm:$0xff] %vm316, %v286
      %318 = vst.msk [vmem:[%s179 + $0x8] sm:$0xff] %vm316, %v289
      %319 = vst.msk [vmem:[%s179 + $0x10] sm:$0xff] %vm316, %v294
      %320 = vst.msk [vmem:[%s179 + $0x18] sm:$0xff] %vm316, %v297
      %321 = vst.msk [vmem:[%s179 + $0x20] sm:$0xff] %vm316, %v302
      %322 = vst.msk [vmem:[%s179 + $0x28] sm:$0xff] %vm316, %v305
      %323 = vst.msk [vmem:[%s179 + $0x30] sm:$0xff] %vm316, %v310
      %324 = vst.msk [vmem:[%s179 + $0x38] sm:$0xff] %vm316, %v313
      %v325 = vsel %vm316, %v286, 0.0
      %v326 = vsel %vm316, %v289, 0.0
      %v327 = vadd.f32 %v325, %v326
      %v328 = vsel %vm316, %v294, 0.0
      %v329 = vadd.f32 %v327, %v328
      %v330 = vsel %vm316, %v297, 0.0
      %v331 = vadd.f32 %v329, %v330
      %v332 = vsel %vm316, %v302, 0.0
      %v333 = vadd.f32 %v331, %v332
      %v334 = vsel %vm316, %v305, 0.0
      %v335 = vadd.f32 %v333, %v334
      %v336 = vsel %vm316, %v310, 0.0
      %v337 = vadd.f32 %v335, %v336
      %v338 = vsel %vm316, %v313, 0.0
      %v339 = vadd.f32 %v337, %v338
      %v340 = vrot.slane %v339, 4
      %v341 = vadd.f32 %v339, %v340
      %v342 = vrot.slane %v341, 2
      %v343 = vadd.f32 %v341, %v342
      %v344 = vrot.slane %v343, 1
      %v345 = vadd.f32 %v343, %v344
      %v346 = vmul.f32 %v286, %v286
      %v347 = vmul.f32 %v289, %v289
      %v348 = vmul.f32 %v294, %v294
      %v349 = vmul.f32 %v297, %v297
      %v350 = vmul.f32 %v302, %v302
      %v351 = vmul.f32 %v305, %v305
      %v352 = vmul.f32 %v310, %v310
      %v353 = vmul.f32 %v313, %v313
      %v354 = vsel %vm316, %v346, 0.0
      %v355 = vsel %vm316, %v347, 0.0
      %v356 = vadd.f32 %v354, %v355
      %v357 = vsel %vm316, %v348, 0.0
      %v358 = vadd.f32 %v356, %v357
      %v359 = vsel %vm316, %v349, 0.0
      %v360 = vadd.f32 %v358, %v359
      %v361 = vsel %vm316, %v350, 0.0
      %v362 = vadd.f32 %v360, %v361
      %v363 = vsel %vm316, %v351, 0.0
      %v364 = vadd.f32 %v362, %v363
      %v365 = vsel %vm316, %v352, 0.0
      %v366 = vadd.f32 %v364, %v365
      %v367 = vsel %vm316, %v353, 0.0
      %v368 = vadd.f32 %v366, %v367
      %v369 = vrot.slane %v368, 4
      %v370 = vadd.f32 %v368, %v369
      %v371 = vrot.slane %v370, 2
      %v372 = vadd.f32 %v370, %v371
      %v373 = vrot.slane %v372, 1
      %v374 = vadd.f32 %v372, %v373
      %v375 = vlaneseq
      %v376 = vshrl.u32 %v375, 7
      %vm377 = vcmp.eq.s32.totalorder %v376, 0
      %vm378 = vcmp.eq.s32.totalorder %v376, 1
      %v379 = vsel %vm378, %v374, 0.0
      %v380 = vsel %vm377, %v345, %v379
      %381 = vst.msk [vmem:[%s184] sm:$0xff] %vm316, %v380
      %s382 = smul.u32 8, %s15
      %p383 = scmp.lt.s32.totalorder %s382, 15
      %s384 = scalar_select %p383, %s382, 15
      %s385 = smul.addr %s384, 8
      %s386 = scalar_lea.vmem %s2, %s385
      %p387 = scmp.lt.s32.totalorder %s15, 1
      %s388 = scalar_select %p387, %s15, 1
      %s389 = smul.addr %s388, 8
      %s390 = scalar_lea.vmem %s3, %s389
      // Predicated region
      $region29: #{stem_forward.7} parent=27 // pred_check
        %p391 = pneg %p80
      $region30: #{stem_forward.7} parent=27 // pred_check_branch
        %393 = sbr.rel (%p391) target = $region32
      $region31: #{stem_forward.7} parent=27 // pred_region
        %s394 = smul.u32 8, %s15
      $region32: #{stem_forward.7} parent=27 // pred_fallthru
        _
      // Predicated region
      $region33: #{stem_forward.7} parent=27 // pred_check
        %p395 = pneg %p106
      $region34: #{stem_forward.7} parent=27 // pred_check_branch
        %397 = sbr.rel (%p395) target = $region36
      $region35: #{stem_forward.7} parent=27 // pred_region
        _
      $region36: #{stem_forward.7} parent=27 // pred_fallthru
        _
    $region28: #{stem_forward.7} parent=5 // pred_fallthru
      _
    %p398 = scmp.le.s32.totalorder 2, %s10
    // Predicated region
    $region37: #{stem_forward.7} parent=5 // pred_check
      %p399 = pneg %p398
    $region38: #{stem_forward.7} parent=5 // pred_check_branch
      %401 = sbr.rel (%p399) target = $region40
    $region39: #{stem_forward.7} parent=5 // pred_region
      %s402 = ssub.s32 %s10, 2
      // Predicated region
      $region41: #{stem_forward.7} parent=39 // pred_check
        %p403 = pneg %p86
      $region42: #{stem_forward.7} parent=39 // pred_check_branch
        %405 = sbr.rel (%p403) target = $region44
      $region43: #{stem_forward.7} parent=39 // pred_region
        %s406 = smul.u32 8, %s16
        %p407 = scmp.lt.s32.totalorder %s406, 15
        %s408 = scalar_select %p407, %s406, 15
        %s409 = smul.addr %s408, 8
        %s410 = scalar_lea.vmem %s2, %s409
      $region44: #{stem_forward.7} parent=39 // pred_fallthru
        _
      // Predicated region
      $region45: #{stem_forward.7} parent=39 // pred_check
        %p411 = pneg %p112
      $region46: #{stem_forward.7} parent=39 // pred_check_branch
        %413 = sbr.rel (%p411) target = $region48
      $region47: #{stem_forward.7} parent=39 // pred_region
        %p414 = scmp.lt.s32.totalorder %s16, 1
        %s415 = scalar_select %p414, %s16, 1
        %s416 = smul.addr %s415, 8
        %s417 = scalar_lea.vmem %s3, %s416
      $region48: #{stem_forward.7} parent=39 // pred_fallthru
        _
    $region40: #{stem_forward.7} parent=5 // pred_fallthru
      _
  $region6: #{stem_forward.7} parent=0 // loop_footer
    %s14 = sadd.s32 1, %s10
  $region7: #{stem_forward.7} parent=0 // loop_footer_branch
    %9 = sbr.rel target = $region3
  $region8: #{stem_forward.7} parent=0 // loop_exit
    _

// kernel: stem_forward.11
$region0: #{stem_forward.11}
  #allocation0 [shape = 'u32[]', space=smem, size = 0x4, offset = 0x4, fixed_abs, tag = 'smem constant byte address 0x4 - core index']
  #allocation1 [shape = 'u32[144,128]{1,0:T(1,128)}', space=vmem, size = 0x12000, scoped, tag = 'internal scratch']
  %s0 = inlined_call_operand.vmem [shape: bf16[9,32,16], index: 0, kind: input, shape index: {}]
  %s1 = inlined_call_operand.vmem [shape: f32[9,16], index: 1, kind: input, shape index: {}]
  %s2 = inlined_call_operand.vmem [shape: bf16[32,16], index: 2, kind: output, shape index: {0}]
  %s3 = inlined_call_operand.vmem [shape: f32[16,16], index: 3, kind: output, shape index: {1}]
  %4 = xla_tuple %s2, %s3
  %s5 = sld [smem:[#allocation0]]
  $region90: #{stem_forward.11} parent=0
    _
  %s7 = ssub.s32 1, %s5
  %s8 = scalar_select 0, %s7, %s5
  $region1: #{stem_forward.11} parent=0
    #allocation2 [shape = 'u8[73728]{0}', space=vmem, size = 0x12000, scoped, tag = 'input window, operand 0']
    loop: start=0, step=1, limit=4
    $region2: #{stem_forward.11} parent=1 // loop_pre_header
      _
    $region3: #{stem_forward.11} parent=1 // loop_header
      %s10 = sphi 0, %s14
      %p11 = scmp.ge.s32.totalorder %s10, 4
      %s20 = sphi 0, %s22
      %s23 = sphi 0, %s20
      %s24 = sphi 0, %s23
      %s40 = sphi 0, %s24
      %s44 = sphi 0, %s44
      %s46 = sphi 0, %s44
      %s47 = sphi 0, %s46
      %s61 = sphi 0, %s47
      %s67 = sphi 0, %s69
      %s70 = sphi 0, %s67
      %s71 = sphi 0, %s70
      %s87 = sphi 0, %s71
      %s93 = sphi 0, %s95
      %s96 = sphi 0, %s93
      %s97 = sphi 0, %s96
      %s113 = sphi 0, %s97
    $region4: #{stem_forward.11} parent=1 // loop_header_branch
      %13 = sbr.rel (%p11) target = $region8
    $region5: #{stem_forward.11} parent=1 // loop_body
      %s15 = ssub.s32 %s10, 1
      %s16 = ssub.s32 %s10, 2
      %s17 = sadd.s32 %s10, 1
      %s18 = ssub.s32 %s10, %s17
      %p19 = scmp.eq.s32.totalorder %s18, 0
      %s21 = sadd.s32 %s20, 1
      %s22 = scalar_select %p19, %s20, %s21
      %p25 = pneg %p19
      %p26 = scmp.eq.s32.totalorder %s10, 1
      %p27 = por %p25, %p26
      %p28 = scmp.ne.s32.totalorder %s20, %s23
      %p29 = scmp.eq.s32.totalorder %s10, 0
      %p30 = por %p28, %p29
      %p31 = scmp.ne.s32.totalorder %s20, %s23
      %p32 = scmp.eq.s32.totalorder %s15, 1
      %p33 = por %p31, %p32
      %p34 = scmp.ne.s32.totalorder %s23, %s24
      %p35 = scmp.eq.s32.totalorder %s15, 0
      %p36 = por %p34, %p35
      %p37 = scmp.ne.s32.totalorder %s23, %s24
      %p38 = scmp.eq.s32.totalorder %s16, 1
      %p39 = por %p37, %p38
      %p41 = scmp.ne.s32.totalorder %s24, %s40
      %p42 = scmp.eq.s32.totalorder %s16, 0
      %p43 = por %p41, %p42
      %s45 = sadd.s32 %s44, 1
      %p48 = scmp.eq.s32.totalorder %s10, 1
      %p49 = scmp.ne.s32.totalorder %s44, %s46
      %p50 = scmp.eq.s32.totalorder %s10, 0
      %p51 = por %p49, %p50
      %p52 = scmp.ne.s32.totalorder %s44, %s46
      %p53 = scmp.eq.s32.totalorder %s15, 1
      %p54 = por %p52, %p53
      %p55 = scmp.ne.s32.totalorder %s46, %s47
      %p56 = scmp.eq.s32.totalorder %s15, 0
      %p57 = por %p55, %p56
      %p58 = scmp.ne.s32.totalorder %s46, %s47
      %p59 = scmp.eq.s32.totalorder %s16, 1
      %p60 = por %p58, %p59
      %p62 = scmp.ne.s32.totalorder %s47, %s61
      %p63 = scmp.eq.s32.totalorder %s16, 0
      %p64 = por %p62, %p63
      %s65 = ssub.s32 %s10, %s17
      %p66 = scmp.eq.s32.totalorder %s65, 0
      %s68 = sadd.s32 %s67, 1
      %s69 = scalar_select %p66, %s67, %s68
      %p72 = pneg %p66
      %p73 = scmp.eq.s32.totalorder %s10, 1
      %p74 = por %p72, %p73
      %p75 = scmp.ne.s32.totalorder %s67, %s70
      %p76 = scmp.eq.s32.totalorder %s10, 0
      %p77 = por %p75, %p76
      %p78 = scmp.ne.s32.totalorder %s67, %s70
      %p79 = scmp.eq.s32.totalorder %s15, 1
      %p80 = por %p78, %p79
      %p81 = scmp.ne.s32.totalorder %s70, %s71
      %p82 = scmp.eq.s32.totalorder %s15, 0
      %p83 = por %p81, %p82
      %p84 = scmp.ne.s32.totalorder %s70, %s71
      %p85 = scmp.eq.s32.totalorder %s16, 1
      %p86 = por %p84, %p85
      %p88 = scmp.ne.s32.totalorder %s71, %s87
      %p89 = scmp.eq.s32.totalorder %s16, 0
      %p90 = por %p88, %p89
      %s91 = ssub.s32 %s10, %s17
      %p92 = scmp.eq.s32.totalorder %s91, 0
      %s94 = sadd.s32 %s93, 1
      %s95 = scalar_select %p92, %s93, %s94
      %p98 = pneg %p92
      %p99 = scmp.eq.s32.totalorder %s10, 1
      %p100 = por %p98, %p99
      %p101 = scmp.ne.s32.totalorder %s93, %s96
      %p102 = scmp.eq.s32.totalorder %s10, 0
      %p103 = por %p101, %p102
      %p104 = scmp.ne.s32.totalorder %s93, %s96
      %p105 = scmp.eq.s32.totalorder %s15, 1
      %p106 = por %p104, %p105
      %p107 = scmp.ne.s32.totalorder %s96, %s97
      %p108 = scmp.eq.s32.totalorder %s15, 0
      %p109 = por %p107, %p108
      %p110 = scmp.ne.s32.totalorder %s96, %s97
      %p111 = scmp.eq.s32.totalorder %s16, 1
      %p112 = por %p110, %p111
      %p114 = scmp.ne.s32.totalorder %s97, %s113
      %p115 = scmp.eq.s32.totalorder %s16, 0
      %p116 = por %p114, %p115
      %p117 = scmp.le.s32.totalorder 1, %s10
      %p118 = scmp.lt.s32.totalorder %s10, 3
      %p119 = pnand %p117, %p118
      %p120 = pneg %p119
      // Predicated region
      $region9: #{stem_forward.11} parent=5 // pred_check
        _
      $region10: #{stem_forward.11} parent=5 // pred_check_branch
        %122 = sbr.rel (%p119) target = $region12
      $region11: #{stem_forward.11} parent=5 // pred_region
        %s123 = ssub.s32 %s10, 1
        // Predicated region
        $region13: #{stem_forward.11} parent=11 // pred_check
          %p124 = pneg %p57
        $region14: #{stem_forward.11} parent=11 // pred_check_branch
          %126 = sbr.rel (%p124) target = $region16
        $region15: #{stem_forward.11} parent=11 // pred_region
          _
        $region16: #{stem_forward.11} parent=11 // pred_fallthru
          _
      $region12: #{stem_forward.11} parent=5 // pred_fallthru
        _
      %p127 = scmp.lt.s32.totalorder %s10, 2
      // Predicated region
      $region17: #{stem_forward.11} parent=5 // pred_check
        %p128 = pneg %p127
      $region18: #{stem_forward.11} parent=5 // pred_check_branch
        %130 = sbr.rel (%p128) target = $region20
      $region19: #{stem_forward.11} parent=5 // pred_region
        // Predicated region
        $region21: #{stem_forward.11} parent=19 // pred_check
          %p131 = pneg %p30
        $region22: #{stem_forward.11} parent=19 // pred_check_branch
          %133 = sbr.rel (%p131) target = $region24
        $region23: #{stem_forward.11} parent=19 // pred_region
          %s134 = sand.u32 %s20, 1
          %s135 = sand.u32 %s20, 1
          %s136 = smul.addr %s135, 72
          %s137 = scalar_lea.vmem [#allocation2], %s136
          %s138 = smul.u32 2, %s10
          %s139 = smul.addr %s138, 4
          %s140 = scalar_lea.vmem %s0, %s139
          // Predicated region
          $region25: #{stem_forward.11} parent=23 // pred_check
            _
          $region26: #{stem_forward.11} parent=23 // pred_check_branch
            %142 = sbr.rel (0) target = $region28
          $region27: #{stem_forward.11} parent=23 // pred_region
            // Predicated region
            $region29: #{stem_forward.11} parent=27 // pred_check
              _
            $region30: #{stem_forward.11} parent=27 // pred_check_branch
              %144 = sbr.rel target = $region32
            $region31: #{stem_forward.11} parent=27 // pred_region
              // Predicated region
              $region44: #{stem_forward.11} parent=31 // pred_check
                _
              $region45: #{stem_forward.11} parent=31 // pred_check_branch
                %194 = sbr.rel (0) target = $region47
              $region46: #{stem_forward.11} parent=31 // pred_region
                loop: start=0, step=1, limit=1
                $region48: #{stem_forward.11} parent=46 // loop_pre_header
                  _
                $region49: #{stem_forward.11} parent=46 // loop_header
                  %s196 = sphi 0, %s200
                  %p197 = scmp.ge.s32.totalorder %s196, 1
                  %s201 = sphi %s140, %s140
                  %s202 = sphi %s137, %s137
                $region50: #{stem_forward.11} parent=46 // loop_header_branch
                  %199 = sbr.rel (%p197) target = $region54
                $region51: #{stem_forward.11} parent=46 // loop_body
                  _
                $region52: #{stem_forward.11} parent=46 // loop_footer
                  %s200 = sadd.s32 1, %s196
                $region53: #{stem_forward.11} parent=46 // loop_footer_branch
                  %195 = sbr.rel target = $region49
                $region54: #{stem_forward.11} parent=46 // loop_exit
                  _
                %s204 = ssub.s32 16, 1
                loop: start=0, step=1, limit=1
                $region55: #{stem_forward.11} parent=46 // loop_pre_header
                  _
                $region56: #{stem_forward.11} parent=46 // loop_header
                  %s206 = sphi 0, %s210
                  %p207 = scmp.ge.s32.totalorder %s206, 1
                  %s211 = sphi %s140, %s140
                  %s212 = sphi %s137, %s137
                $region57: #{stem_forward.11} parent=46 // loop_header_branch
                  %209 = sbr.rel (%p207) target = $region61
                $region58: #{stem_forward.11} parent=46 // loop_body
                  %v213 = vld [vmem:[%s211] sm:%s204]
                  %214 = vst [vmem:[%s212] sm:%s204] %v213
                  %v215 = vld [vmem:[%s211 + $0x4] sm:%s204]
                  %216 = vst [vmem:[%s212 + $0x4] sm:%s204] %v215
                  %v217 = vld [vmem:[%s211 + $0x10] sm:%s204]
                  %218 = vst [vmem:[%s212 + $0x8] sm:%s204] %v217
                  %v219 = vld [vmem:[%s211 + $0x14] sm:%s204]
                  %220 = vst [vmem:[%s212 + $0xc] sm:%s204] %v219
                  %v221 = vld [vmem:[%s211 + $0x20] sm:%s204]
                  %222 = vst [vmem:[%s212 + $0x10] sm:%s204] %v221
                  %v223 = vld [vmem:[%s211 + $0x24] sm:%s204]
                  %224 = vst [vmem:[%s212 + $0x14] sm:%s204] %v223
                  %v225 = vld [vmem:[%s211 + $0x30] sm:%s204]
                  %226 = vst [vmem:[%s212 + $0x18] sm:%s204] %v225
                  %v227 = vld [vmem:[%s211 + $0x34] sm:%s204]
                  %228 = vst [vmem:[%s212 + $0x1c] sm:%s204] %v227
                  %v229 = vld [vmem:[%s211 + $0x40] sm:%s204]
                  %230 = vst [vmem:[%s212 + $0x20] sm:%s204] %v229
                  %v231 = vld [vmem:[%s211 + $0x44] sm:%s204]
                  %232 = vst [vmem:[%s212 + $0x24] sm:%s204] %v231
                  %v233 = vld [vmem:[%s211 + $0x50] sm:%s204]
                  %234 = vst [vmem:[%s212 + $0x28] sm:%s204] %v233
                  %v235 = vld [vmem:[%s211 + $0x54] sm:%s204]
                  %236 = vst [vmem:[%s212 + $0x2c] sm:%s204] %v235
                  %v237 = vld [vmem:[%s211 + $0x60] sm:%s204]
                  %238 = vst [vmem:[%s212 + $0x30] sm:%s204] %v237
                  %v239 = vld [vmem:[%s211 + $0x64] sm:%s204]
                  %240 = vst [vmem:[%s212 + $0x34] sm:%s204] %v239
                  %v241 = vld [vmem:[%s211 + $0x70] sm:%s204]
                  %242 = vst [vmem:[%s212 + $0x38] sm:%s204] %v241
                  %v243 = vld [vmem:[%s211 + $0x74] sm:%s204]
                  %244 = vst [vmem:[%s212 + $0x3c] sm:%s204] %v243
                  %v245 = vld [vmem:[%s211 + $0x80] sm:%s204]
                  %246 = vst [vmem:[%s212 + $0x40] sm:%s204] %v245
                  %v247 = vld [vmem:[%s211 + $0x84] sm:%s204]
                  %248 = vst [vmem:[%s212 + $0x44] sm:%s204] %v247
                $region59: #{stem_forward.11} parent=46 // loop_footer
                  %s210 = sadd.s32 1, %s206
                $region60: #{stem_forward.11} parent=46 // loop_footer_branch
                  %205 = sbr.rel target = $region56
                $region61: #{stem_forward.11} parent=46 // loop_exit
                  _
              $region47: #{stem_forward.11} parent=31 // pred_fallthru
                _
            $region32: #{stem_forward.11} parent=27 // pred_fallthru
              _
            // Predicated region
            $region33: #{stem_forward.11} parent=27 // pred_check
              _
            $region34: #{stem_forward.11} parent=27 // pred_check_branch
              %146 = sbr.rel (0) target = $region36
            $region35: #{stem_forward.11} parent=27 // pred_region
              %s148 = ssub.s32 16, 1
              loop: start=0, step=1, limit=1
              $region37: #{stem_forward.11} parent=35 // loop_pre_header
                _
              $region38: #{stem_forward.11} parent=35 // loop_header
                %s150 = sphi 0, %s154
                %p151 = scmp.ge.s32.totalorder %s150, 1
                %s155 = sphi %s140, %s140
                %s156 = sphi %s137, %s137
              $region39: #{stem_forward.11} parent=35 // loop_header_branch
                %153 = sbr.rel (%p151) target = $region43
              $region40: #{stem_forward.11} parent=35 // loop_body
                %v157 = vld [vmem:[%s155] sm:%s148]
                %158 = vst [vmem:[%s156] sm:%s148] %v157
                %v159 = vld [vmem:[%s155 + $0x4] sm:%s148]
                %160 = vst [vmem:[%s156 + $0x4] sm:%s148] %v159
                %v161 = vld [vmem:[%s155 + $0x10] sm:%s148]
                %162 = vst [vmem:[%s156 + $0x8] sm:%s148] %v161
                %v163 = vld [vmem:[%s155 + $0x14] sm:%s148]
                %164 = vst [vmem:[%s156 + $0xc] sm:%s148] %v163
                %v165 = vld [vmem:[%s155 + $0x20] sm:%s148]
                %166 = vst [vmem:[%s156 + $0x10] sm:%s148] %v165
                %v167 = vld [vmem:[%s155 + $0x24] sm:%s148]
                %168 = vst [vmem:[%s156 + $0x14] sm:%s148] %v167
                %v169 = vld [vmem:[%s155 + $0x30] sm:%s148]
                %170 = vst [vmem:[%s156 + $0x18] sm:%s148] %v169
                %v171 = vld [vmem:[%s155 + $0x34] sm:%s148]
                %172 = vst [vmem:[%s156 + $0x1c] sm:%s148] %v171
                %v173 = vld [vmem:[%s155 + $0x40] sm:%s148]
                %174 = vst [vmem:[%s156 + $0x20] sm:%s148] %v173
                %v175 = vld [vmem:[%s155 + $0x44] sm:%s148]
                %176 = vst [vmem:[%s156 + $0x24] sm:%s148] %v175
                %v177 = vld [vmem:[%s155 + $0x50] sm:%s148]
                %178 = vst [vmem:[%s156 + $0x28] sm:%s148] %v177
                %v179 = vld [vmem:[%s155 + $0x54] sm:%s148]
                %180 = vst [vmem:[%s156 + $0x2c] sm:%s148] %v179
                %v181 = vld [vmem:[%s155 + $0x60] sm:%s148]
                %182 = vst [vmem:[%s156 + $0x30] sm:%s148] %v181
                %v183 = vld [vmem:[%s155 + $0x64] sm:%s148]
                %184 = vst [vmem:[%s156 + $0x34] sm:%s148] %v183
                %v185 = vld [vmem:[%s155 + $0x70] sm:%s148]
                %186 = vst [vmem:[%s156 + $0x38] sm:%s148] %v185
                %v187 = vld [vmem:[%s155 + $0x74] sm:%s148]
                %188 = vst [vmem:[%s156 + $0x3c] sm:%s148] %v187
                %v189 = vld [vmem:[%s155 + $0x80] sm:%s148]
                %190 = vst [vmem:[%s156 + $0x40] sm:%s148] %v189
                %v191 = vld [vmem:[%s155 + $0x84] sm:%s148]
                %192 = vst [vmem:[%s156 + $0x44] sm:%s148] %v191
              $region41: #{stem_forward.11} parent=35 // loop_footer
                %s154 = sadd.s32 1, %s150
              $region42: #{stem_forward.11} parent=35 // loop_footer_branch
                %149 = sbr.rel target = $region38
              $region43: #{stem_forward.11} parent=35 // loop_exit
                _
            $region36: #{stem_forward.11} parent=27 // pred_fallthru
              _
          $region28: #{stem_forward.11} parent=23 // pred_fallthru
            _
          %249 = vnop
        $region24: #{stem_forward.11} parent=19 // pred_fallthru
          _
      $region20: #{stem_forward.11} parent=5 // pred_fallthru
        _
      %p250 = scmp.le.s32.totalorder 1, %s10
      %p251 = scmp.lt.s32.totalorder %s10, 3
      %p252 = pnand %p250, %p251
      %p253 = pneg %p252
      // Predicated region
      $region62: #{stem_forward.11} parent=5 // pred_check
        _
      $region63: #{stem_forward.11} parent=5 // pred_check_branch
        %255 = sbr.rel (%p252) target = $region65
      $region64: #{stem_forward.11} parent=5 // pred_region
        %s256 = ssub.s32 %s10, 1
        %s257 = sand.u32 %s23, 1
        %s258 = sand.u32 %s23, 1
        %s259 = smul.addr %s258, 72
        %s260 = scalar_lea.vmem [#allocation2], %s259
        // Predicated region
        $region66: #{stem_forward.11} parent=64 // pred_check
          %p261 = pneg %p36
        $region67: #{stem_forward.11} parent=64 // pred_check_branch
          %263 = sbr.rel (%p261) target = $region69
        $region68: #{stem_forward.11} parent=64 // pred_region
          _
        $region69: #{stem_forward.11} parent=64 // pred_fallthru
          _
        %s264 = sand.u32 %s23, 1
        %s265 = sand.u32 %s23, 1
        %s266 = smul.addr %s265, 72
        %s267 = scalar_lea.vmem [#allocation2], %s266
        %p268 = pneg %p36
        %p269 = pneg %p33
        %p270 = pneg %p57
        %p271 = pneg %p54
        %p272 = pneg %p83
        %p273 = pneg %p80
        %s274 = smul.u32 2, %s15
        %p275 = scmp.lt.s32.totalorder %s274, 3
        %s276 = scalar_select %p275, %s274, 3
        %s277 = smul.addr %s276, 4
        %s278 = scalar_lea.vmem %s2, %s277
        %p279 = pneg %p109
        %p280 = pneg %p106
        %p281 = scmp.lt.s32.totalorder %s15, 1
        %s282 = scalar_select %p281, %s15, 1
        %s283 = smul.addr %s282, 8
        %s284 = scalar_lea.vmem %s3, %s283
        %s285 = smul.u32 2, %s15
        %s286 = smul.u32 2, %s15
        %p287 = scmp.lt.s32.totalorder %s286, 3
        %s288 = scalar_select %p287, %s286, 3
        %s289 = smul.addr %s288, 4
        %s290 = scalar_lea.vmem %s2, %s289
        %s291 = smul.u32 2, %s15
        %p292 = scmp.lt.s32.totalorder %s15, 1
        %s293 = scalar_select %p292, %s15, 1
        %s294 = smul.addr %s293, 8
        %s295 = scalar_lea.vmem %s3, %s294
        %v296 = vld [vmem:[%s260] sm:$0xf]
        %v297 = vld [vmem:[%s260 + $0x4] sm:$0xf]
        %v298 = vunpack.c.l.bf16 %v296
        %v299 = vunpack.c.l.bf16 %v297
        %v300 = vld [vmem:[%s1] sm:$0x1]
        %v301 = vlaneseq
        %v302 = vshrl.u32 %v301, 7
        %v303 = vsub.s32 0, %v302
        %v304 = vrot.slane %v300, %v303
        %v305 = vmul.f32 %v298, %v304
        %v306 = vmul.f32 %v299, %v304
        %s307 = scalar_lea.vmem %s260, 8 [#allocation2]
        %v308 = vld [vmem:[%s307] sm:$0xf]
        %v309 = vld [vmem:[%s307 + $0x4] sm:$0xf]
        %v310 = vunpack.c.l.bf16 %v308
        %v311 = vunpack.c.l.bf16 %v309
        %v312 = vld [vmem:[%s1 + $0x1] sm:$0x1]
        %v313 = vlaneseq
        %v314 = vshrl.u32 %v313, 7
        %v315 = vsub.s32 0, %v314
        %v316 = vrot.slane %v312, %v315
        %v317 = vmul.f32 %v310, %v316
        %v318 = vmul.f32 %v311, %v316
        %v319 = vadd.f32 %v305, %v317
        %v320 = vadd.f32 %v306, %v318
        %s321 = scalar_lea.vmem %s260, 16 [#allocation2]
        %v322 = vld [vmem:[%s321] sm:$0xf]
        %v323 = vld [vmem:[%s321 + $0x4] sm:$0xf]
        %v324 = vunpack.c.l.bf16 %v322
        %v325 = vunpack.c.l.bf16 %v323
        %v326 = vld [vmem:[%s1 + $0x2] sm:$0x1]
        %v327 = vlaneseq
        %v328 = vshrl.u32 %v327, 7
        %v329 = vsub.s32 0, %v328
        %v330 = vrot.slane %v326, %v329
        %v331 = vmul.f32 %v324, %v330
        %v332 = vmul.f32 %v325, %v330
        %v333 = vadd.f32 %v319, %v331
        %v334 = vadd.f32 %v320, %v332
        %s335 = scalar_lea.vmem %s260, 24 [#allocation2]
        %v336 = vld [vmem:[%s335] sm:$0xf]
        %v337 = vld [vmem:[%s335 + $0x4] sm:$0xf]
        %v338 = vunpack.c.l.bf16 %v336
        %v339 = vunpack.c.l.bf16 %v337
        %v340 = vld [vmem:[%s1 + $0x3] sm:$0x1]
        %v341 = vlaneseq
        %v342 = vshrl.u32 %v341, 7
        %v343 = vsub.s32 0, %v342
        %v344 = vrot.slane %v340, %v343
        %v345 = vmul.f32 %v338, %v344
        %v346 = vmul.f32 %v339, %v344
        %v347 = vadd.f32 %v333, %v345
        %v348 = vadd.f32 %v334, %v346
        %s349 = scalar_lea.vmem %s260, 32 [#allocation2]
        %v350 = vld [vmem:[%s349] sm:$0xf]
        %v351 = vld [vmem:[%s349 + $0x4] sm:$0xf]
        %v352 = vunpack.c.l.bf16 %v350
        %v353 = vunpack.c.l.bf16 %v351
        %v354 = vld [vmem:[%s1 + $0x4] sm:$0x1]
        %v355 = vlaneseq
        %v356 = vshrl.u32 %v355, 7
        %v357 = vsub.s32 0, %v356
        %v358 = vrot.slane %v354, %v357
        %v359 = vmul.f32 %v352, %v358
        %v360 = vmul.f32 %v353, %v358
        %v361 = vadd.f32 %v347, %v359
        %v362 = vadd.f32 %v348, %v360
        %s363 = scalar_lea.vmem %s260, 40 [#allocation2]
        %v364 = vld [vmem:[%s363] sm:$0xf]
        %v365 = vld [vmem:[%s363 + $0x4] sm:$0xf]
        %v366 = vunpack.c.l.bf16 %v364
        %v367 = vunpack.c.l.bf16 %v365
        %v368 = vld [vmem:[%s1 + $0x5] sm:$0x1]
        %v369 = vlaneseq
        %v370 = vshrl.u32 %v369, 7
        %v371 = vsub.s32 0, %v370
        %v372 = vrot.slane %v368, %v371
        %v373 = vmul.f32 %v366, %v372
        %v374 = vmul.f32 %v367, %v372
        %v375 = vadd.f32 %v361, %v373
        %v376 = vadd.f32 %v362, %v374
        %s377 = scalar_lea.vmem %s260, 48 [#allocation2]
        %v378 = vld [vmem:[%s377] sm:$0xf]
        %v379 = vld [vmem:[%s377 + $0x4] sm:$0xf]
        %v380 = vunpack.c.l.bf16 %v378
        %v381 = vunpack.c.l.bf16 %v379
        %v382 = vld [vmem:[%s1 + $0x6] sm:$0x1]
        %v383 = vlaneseq
        %v384 = vshrl.u32 %v383, 7
        %v385 = vsub.s32 0, %v384
        %v386 = vrot.slane %v382, %v385
        %v387 = vmul.f32 %v380, %v386
        %v388 = vmul.f32 %v381, %v386
        %v389 = vadd.f32 %v375, %v387
        %v390 = vadd.f32 %v376, %v388
        %s391 = scalar_lea.vmem %s260, 56 [#allocation2]
        %v392 = vld [vmem:[%s391] sm:$0xf]
        %v393 = vld [vmem:[%s391 + $0x4] sm:$0xf]
        %v394 = vunpack.c.l.bf16 %v392
        %v395 = vunpack.c.l.bf16 %v393
        %v396 = vld [vmem:[%s1 + $0x7] sm:$0x1]
        %v397 = vlaneseq
        %v398 = vshrl.u32 %v397, 7
        %v399 = vsub.s32 0, %v398
        %v400 = vrot.slane %v396, %v399
        %v401 = vmul.f32 %v394, %v400
        %v402 = vmul.f32 %v395, %v400
        %v403 = vadd.f32 %v389, %v401
        %v404 = vadd.f32 %v390, %v402
        %s405 = scalar_lea.vmem %s260, 64 [#allocation2]
        %v406 = vld [vmem:[%s405] sm:$0xf]
        %v407 = vld [vmem:[%s405 + $0x4] sm:$0xf]
        %v408 = vunpack.c.l.bf16 %v406
        %v409 = vunpack.c.l.bf16 %v407
        %v410 = vld [vmem:[%s1 + $0x8] sm:$0x1]
        %v411 = vlaneseq
        %v412 = vshrl.u32 %v411, 7
        %v413 = vsub.s32 0, %v412
        %v414 = vrot.slane %v410, %v413
        %v415 = vmul.f32 %v408, %v414
        %v416 = vmul.f32 %v409, %v414
        %v417 = vadd.f32 %v403, %v415
        %v418 = vadd.f32 %v404, %v416
        %v419 = vpack.c.bf16 %v418, %v417
        %v421 = vunpack.c.l.b16 %v419
        %v422 = vunpack.c.h.b16 %v419
        %v423 = vpack.c.b16 %v421, %v421
        %v424 = vpack.c.b16 %v422, %v422
        %vm427 = vcmask 125952
        %428 = vst.msk [vmem:[%s290] sm:$0xf] %vm427, %v423
        %429 = vst.msk [vmem:[%s290 + $0x4] sm:$0xf] %vm427, %v424
        %vm430 = vcmask 130048
        %v431 = vsel %vm430, %v417, 0.0
        %v432 = vsel %vm430, %v418, 0.0
        %v433 = vadd.f32 %v431, %v432
        %v434 = vrot.slane %v433, 4
        %v435 = vadd.f32 %v433, %v434
        %v436 = vrot.slane %v435, 2
        %v437 = vadd.f32 %v435, %v436
        %v438 = vrot.slane %v437, 1
        %v439 = vadd.f32 %v437, %v438
        %v440 = vmul.f32 %v417, %v417
        %v441 = vmul.f32 %v418, %v418
        %v442 = vsel %vm430, %v440, 0.0
        %v443 = vsel %vm430, %v441, 0.0
        %v444 = vadd.f32 %v442, %v443
        %v445 = vrot.slane %v444, 4
        %v446 = vadd.f32 %v444, %v445
        %v447 = vrot.slane %v446, 2
        %v448 = vadd.f32 %v446, %v447
        %v449 = vrot.slane %v448, 1
        %v450 = vadd.f32 %v448, %v449
        %v451 = vlaneseq
        %v452 = vshrl.u32 %v451, 7
        %vm453 = vcmp.eq.s32.totalorder %v452, 0
        %vm454 = vcmp.eq.s32.totalorder %v452, 1
        %v455 = vsel %vm454, %v450, 0.0
        %v456 = vsel %vm453, %v439, %v455
        %457 = vst.msk [vmem:[%s295] sm:$0xff] %vm430, %v456
        %s458 = smul.u32 2, %s15
        %p459 = scmp.lt.s32.totalorder %s458, 3
        %s460 = scalar_select %p459, %s458, 3
        %s461 = smul.addr %s460, 4
        %s462 = scalar_lea.vmem %s2, %s461
        %p463 = scmp.lt.s32.totalorder %s15, 1
        %s464 = scalar_select %p463, %s15, 1
        %s465 = smul.addr %s464, 8
        %s466 = scalar_lea.vmem %s3, %s465
        // Predicated region
        $region70: #{stem_forward.11} parent=64 // pred_check
          %p467 = pneg %p80
        $region71: #{stem_forward.11} parent=64 // pred_check_branch
          %469 = sbr.rel (%p467) target = $region73
        $region72: #{stem_forward.11} parent=64 // pred_region
          %s470 = smul.u32 2, %s15
        $region73: #{stem_forward.11} parent=64 // pred_fallthru
          _
        // Predicated region
        $region74: #{stem_forward.11} parent=64 // pred_check
          %p471 = pneg %p106
        $region75: #{stem_forward.11} parent=64 // pred_check_branch
          %473 = sbr.rel (%p471) target = $region77
        $region76: #{stem_forward.11} parent=64 // pred_region
          _
        $region77: #{stem_forward.11} parent=64 // pred_fallthru
          _
      $region65: #{stem_forward.11} parent=5 // pred_fallthru
        _
      %p474 = scmp.le.s32.totalorder 2, %s10
      // Predicated region
      $region78: #{stem_forward.11} parent=5 // pred_check
        %p475 = pneg %p474
      $region79: #{stem_forward.11} parent=5 // pred_check_branch
        %477 = sbr.rel (%p475) target = $region81
      $region80: #{stem_forward.11} parent=5 // pred_region
        %s478 = ssub.s32 %s10, 2
        // Predicated region
        $region82: #{stem_forward.11} parent=80 // pred_check
          %p479 = pneg %p86
        $region83: #{stem_forward.11} parent=80 // pred_check_branch
          %481 = sbr.rel (%p479) target = $region85
        $region84: #{stem_forward.11} parent=80 // pred_region
          %s482 = smul.u32 2, %s16
          %p483 = scmp.lt.s32.totalorder %s482, 3
          %s484 = scalar_select %p483, %s482, 3
          %s485 = smul.addr %s484, 4
          %s486 = scalar_lea.vmem %s2, %s485
        $region85: #{stem_forward.11} parent=80 // pred_fallthru
          _
        // Predicated region
        $region86: #{stem_forward.11} parent=80 // pred_check
          %p487 = pneg %p112
        $region87: #{stem_forward.11} parent=80 // pred_check_branch
          %489 = sbr.rel (%p487) target = $region89
        $region88: #{stem_forward.11} parent=80 // pred_region
          %p490 = scmp.lt.s32.totalorder %s16, 1
          %s491 = scalar_select %p490, %s16, 1
          %s492 = smul.addr %s491, 8
          %s493 = scalar_lea.vmem %s3, %s492
        $region89: #{stem_forward.11} parent=80 // pred_fallthru
          _
      $region81: #{stem_forward.11} parent=5 // pred_fallthru
        _
    $region6: #{stem_forward.11} parent=1 // loop_footer
      %s14 = sadd.s32 1, %s10
    $region7: #{stem_forward.11} parent=1 // loop_footer_branch
      %9 = sbr.rel target = $region3
    $region8: #{stem_forward.11} parent=1 // loop_exit
      _

// kernel: stem_forward.12
$region0: #{stem_forward.12}
  #allocation0 [shape = 'u32[]', space=smem, size = 0x4, offset = 0x4, fixed_abs, tag = 'smem constant byte address 0x4 - core index']
  #allocation1 [shape = 'u32[144,128]{1,0:T(1,128)}', space=vmem, size = 0x12000, scoped, tag = 'internal scratch']
  %s0 = inlined_call_operand.vmem [shape: bf16[32,16], index: 0, kind: input, shape index: {}]
  %s1 = inlined_call_operand.vmem [shape: bf16[16,16], index: 1, kind: input, shape index: {}]
  %s2 = inlined_call_operand.vmem [shape: f32[32,16], index: 2, kind: output, shape index: {0}]
  %s3 = inlined_call_operand.vmem [shape: f32[16,16], index: 3, kind: output, shape index: {1}]
  %4 = xla_tuple %s2, %s3
  %s5 = sld [smem:[#allocation0]]
  $region49: #{stem_forward.12} parent=0
    _
  %s7 = ssub.s32 1, %s5
  %s8 = scalar_select 0, %s7, %s5
  loop: start=0, step=1, limit=4
  $region2: #{stem_forward.12} parent=0 // loop_pre_header
    _
  $region3: #{stem_forward.12} parent=0 // loop_header
    %s10 = sphi 0, %s14
    %p11 = scmp.ge.s32.totalorder %s10, 4
    %s20 = sphi 0, %s22
    %s23 = sphi 0, %s20
    %s24 = sphi 0, %s23
    %s40 = sphi 0, %s24
    %s44 = sphi 0, %s44
    %s46 = sphi 0, %s44
    %s47 = sphi 0, %s46
    %s61 = sphi 0, %s47
    %s67 = sphi 0, %s69
    %s70 = sphi 0, %s67
    %s71 = sphi 0, %s70
    %s87 = sphi 0, %s71
    %s93 = sphi 0, %s95
    %s96 = sphi 0, %s93
    %s97 = sphi 0, %s96
    %s113 = sphi 0, %s97
  $region4: #{stem_forward.12} parent=0 // loop_header_branch
    %13 = sbr.rel (%p11) target = $region8
  $region5: #{stem_forward.12} parent=0 // loop_body
    %s15 = ssub.s32 %s10, 1
    %s16 = ssub.s32 %s10, 2
    %s17 = sadd.s32 %s10, 1
    %s18 = ssub.s32 %s10, %s17
    %p19 = scmp.eq.s32.totalorder %s18, 0
    %s21 = sadd.s32 %s20, 1
    %s22 = scalar_select %p19, %s20, %s21
    %p25 = pneg %p19
    %p26 = scmp.eq.s32.totalorder %s10, 1
    %p27 = por %p25, %p26
    %p28 = scmp.ne.s32.totalorder %s20, %s23
    %p29 = scmp.eq.s32.totalorder %s10, 0
    %p30 = por %p28, %p29
    %p31 = scmp.ne.s32.totalorder %s20, %s23
    %p32 = scmp.eq.s32.totalorder %s15, 1
    %p33 = por %p31, %p32
    %p34 = scmp.ne.s32.totalorder %s23, %s24
    %p35 = scmp.eq.s32.totalorder %s15, 0
    %p36 = por %p34, %p35
    %p37 = scmp.ne.s32.totalorder %s23, %s24
    %p38 = scmp.eq.s32.totalorder %s16, 1
    %p39 = por %p37, %p38
    %p41 = scmp.ne.s32.totalorder %s24, %s40
    %p42 = scmp.eq.s32.totalorder %s16, 0
    %p43 = por %p41, %p42
    %s45 = sadd.s32 %s44, 1
    %p48 = scmp.eq.s32.totalorder %s10, 1
    %p49 = scmp.ne.s32.totalorder %s44, %s46
    %p50 = scmp.eq.s32.totalorder %s10, 0
    %p51 = por %p49, %p50
    %p52 = scmp.ne.s32.totalorder %s44, %s46
    %p53 = scmp.eq.s32.totalorder %s15, 1
    %p54 = por %p52, %p53
    %p55 = scmp.ne.s32.totalorder %s46, %s47
    %p56 = scmp.eq.s32.totalorder %s15, 0
    %p57 = por %p55, %p56
    %p58 = scmp.ne.s32.totalorder %s46, %s47
    %p59 = scmp.eq.s32.totalorder %s16, 1
    %p60 = por %p58, %p59
    %p62 = scmp.ne.s32.totalorder %s47, %s61
    %p63 = scmp.eq.s32.totalorder %s16, 0
    %p64 = por %p62, %p63
    %s65 = ssub.s32 %s10, %s17
    %p66 = scmp.eq.s32.totalorder %s65, 0
    %s68 = sadd.s32 %s67, 1
    %s69 = scalar_select %p66, %s67, %s68
    %p72 = pneg %p66
    %p73 = scmp.eq.s32.totalorder %s10, 1
    %p74 = por %p72, %p73
    %p75 = scmp.ne.s32.totalorder %s67, %s70
    %p76 = scmp.eq.s32.totalorder %s10, 0
    %p77 = por %p75, %p76
    %p78 = scmp.ne.s32.totalorder %s67, %s70
    %p79 = scmp.eq.s32.totalorder %s15, 1
    %p80 = por %p78, %p79
    %p81 = scmp.ne.s32.totalorder %s70, %s71
    %p82 = scmp.eq.s32.totalorder %s15, 0
    %p83 = por %p81, %p82
    %p84 = scmp.ne.s32.totalorder %s70, %s71
    %p85 = scmp.eq.s32.totalorder %s16, 1
    %p86 = por %p84, %p85
    %p88 = scmp.ne.s32.totalorder %s71, %s87
    %p89 = scmp.eq.s32.totalorder %s16, 0
    %p90 = por %p88, %p89
    %s91 = ssub.s32 %s10, %s17
    %p92 = scmp.eq.s32.totalorder %s91, 0
    %s94 = sadd.s32 %s93, 1
    %s95 = scalar_select %p92, %s93, %s94
    %p98 = pneg %p92
    %p99 = scmp.eq.s32.totalorder %s10, 1
    %p100 = por %p98, %p99
    %p101 = scmp.ne.s32.totalorder %s93, %s96
    %p102 = scmp.eq.s32.totalorder %s10, 0
    %p103 = por %p101, %p102
    %p104 = scmp.ne.s32.totalorder %s93, %s96
    %p105 = scmp.eq.s32.totalorder %s15, 1
    %p106 = por %p104, %p105
    %p107 = scmp.ne.s32.totalorder %s96, %s97
    %p108 = scmp.eq.s32.totalorder %s15, 0
    %p109 = por %p107, %p108
    %p110 = scmp.ne.s32.totalorder %s96, %s97
    %p111 = scmp.eq.s32.totalorder %s16, 1
    %p112 = por %p110, %p111
    %p114 = scmp.ne.s32.totalorder %s97, %s113
    %p115 = scmp.eq.s32.totalorder %s16, 0
    %p116 = por %p114, %p115
    %p117 = scmp.le.s32.totalorder 1, %s10
    %p118 = scmp.lt.s32.totalorder %s10, 3
    %p119 = pnand %p117, %p118
    %p120 = pneg %p119
    // Predicated region
    $region9: #{stem_forward.12} parent=5 // pred_check
      _
    $region10: #{stem_forward.12} parent=5 // pred_check_branch
      %122 = sbr.rel (%p119) target = $region12
    $region11: #{stem_forward.12} parent=5 // pred_region
      %s123 = ssub.s32 %s10, 1
      // Predicated region
      $region13: #{stem_forward.12} parent=11 // pred_check
        %p124 = pneg %p57
      $region14: #{stem_forward.12} parent=11 // pred_check_branch
        %126 = sbr.rel (%p124) target = $region16
      $region15: #{stem_forward.12} parent=11 // pred_region
        _
      $region16: #{stem_forward.12} parent=11 // pred_fallthru
        _
    $region12: #{stem_forward.12} parent=5 // pred_fallthru
      _
    %p127 = scmp.lt.s32.totalorder %s10, 2
    // Predicated region
    $region17: #{stem_forward.12} parent=5 // pred_check
      %p128 = pneg %p127
    $region18: #{stem_forward.12} parent=5 // pred_check_branch
      %130 = sbr.rel (%p128) target = $region20
    $region19: #{stem_forward.12} parent=5 // pred_region
      // Predicated region
      $region21: #{stem_forward.12} parent=19 // pred_check
        %p131 = pneg %p30
      $region22: #{stem_forward.12} parent=19 // pred_check_branch
        %133 = sbr.rel (%p131) target = $region24
      $region23: #{stem_forward.12} parent=19 // pred_region
        %s134 = smul.u32 2, %s10
        %p135 = scmp.lt.s32.totalorder %s134, 3
        %s136 = scalar_select %p135, %s134, 3
        %s137 = smul.addr %s136, 4
        %s138 = scalar_lea.vmem %s0, %s137
        %s139 = smul.u32 2, %s10
      $region24: #{stem_forward.12} parent=19 // pred_fallthru
        _
    $region20: #{stem_forward.12} parent=5 // pred_fallthru
      _
    %p140 = scmp.le.s32.totalorder 1, %s10
    %p141 = scmp.lt.s32.totalorder %s10, 3
    %p142 = pnand %p140, %p141
    %p143 = pneg %p142
    // Predicated region
    $region25: #{stem_forward.12} parent=5 // pred_check
      _
    $region26: #{stem_forward.12} parent=5 // pred_check_branch
      %145 = sbr.rel (%p142) target = $region28
    $region27: #{stem_forward.12} parent=5 // pred_region
      %s146 = ssub.s32 %s10, 1
      %s147 = smul.u32 2, %s15
      %p148 = scmp.lt.s32.totalorder %s147, 3
      %s149 = scalar_select %p148, %s147, 3
      %s150 = smul.addr %s149, 4
      %s151 = scalar_lea.vmem %s0, %s150
      %p152 = pneg %p36
      %p153 = pneg %p33
      %p154 = pneg %p57
      %p155 = pneg %p54
      %p156 = pneg %p83
      %p157 = pneg %p80
      %s158 = smul.u32 2, %s15
      %p159 = scmp.lt.s32.totalorder %s158, 3
      %s160 = scalar_select %p159, %s158, 3
      %s161 = smul.addr %s160, 8
      %s162 = scalar_lea.vmem %s2, %s161
      %p163 = pneg %p109
      %p164 = pneg %p106
      %p165 = scmp.lt.s32.totalorder %s15, 1
      %s166 = scalar_select %p165, %s15, 1
      %s167 = smul.addr %s166, 8
      %s168 = scalar_lea.vmem %s3, %s167
      %s169 = smul.u32 2, %s15
      %p170 = scmp.lt.s32.totalorder %s169, 3
      %s171 = scalar_select %p170, %s169, 3
      %s172 = smul.addr %s171, 4
      %s173 = scalar_lea.vmem %s0, %s172
      %s174 = smul.u32 2, %s15
      %s175 = smul.u32 2, %s15
      %p176 = scmp.lt.s32.totalorder %s175, 3
      %s177 = scalar_select %p176, %s175, 3
      %s178 = smul.addr %s177, 8
      %s179 = scalar_lea.vmem %s2, %s178
      %s180 = smul.u32 2, %s15
      %p181 = scmp.lt.s32.totalorder %s15, 1
      %s182 = scalar_select %p181, %s15, 1
      %s183 = smul.addr %s182, 8
      %s184 = scalar_lea.vmem %s3, %s183
      %v186 = vld [vmem:[%s173] sm:$0xf]
      %v187 = vld [vmem:[%s173 + $0x4] sm:$0xf]
      %v188 = vld [vmem:[%s1] sm:$0xf]
      %v189 = vld [vmem:[%s1 + $0x4] sm:$0xf]
      %v192 = vunpack.c.l.b16 %v186
      %v193 = vunpack.c.l.b16 %v187
      %v194 = vpack.c.b16 %v193, %v192
      %v197 = vunpack.c.l.b16 %v188
      %v198 = vunpack.c.l.b16 %v189
      %v199 = vpack.c.b16 %v198, %v197
      %vm201 = vcmask 130048
      %v203 = vsel %vm201, %v194, 0
      %205 = vmatprep.subr.bf16.mxu0 0
      %206 = vmatpush1.bf16.msra.mxu0 0
      %207 = vmatprep.subr.bf16.mxu0 0
      %208 = vmatpush1.bf16.msra.mxu0 0
      %209 = vmatprep.subr.bf16.mxu0 0
      %210 = vmatpush1.bf16.msra.mxu0 0
      %211 = vmatprep.subr.bf16.mxu0 0
      %212 = vmatpush1.bf16.msra.mxu0 0
      %213 = vmatprep.subr.bf16.mxu0 0
      %214 = vmatpush1.bf16.msra.mxu0 0
      %215 = vmatprep.subr.bf16.mxu0 0
      %216 = vmatpush1.bf16.msra.mxu0 0
      %217 = vmatprep.subr.bf16.mxu0 0
      %218 = vmatpush1.bf16.msra.mxu0 0
      %219 = vmatprep.subr.bf16.mxu0 0
      %220 = vmatpush1.bf16.msra.mxu0 %v199
      %221 = vmatprep.subr.bf16.mxu0 0
      %222 = vmatpush2.bf16.msra.mxu0 0
      %223 = vmatprep.subr.bf16.mxu0 0
      %224 = vmatpush2.bf16.msra.mxu0 0
      %225 = vmatprep.subr.bf16.mxu0 0
      %226 = vmatpush2.bf16.msra.mxu0 0
      %227 = vmatprep.subr.bf16.mxu0 0
      %228 = vmatpush2.bf16.msra.mxu0 0
      %229 = vmatprep.subr.bf16.mxu0 0
      %230 = vmatpush2.bf16.msra.mxu0 0
      %231 = vmatprep.subr.bf16.mxu0 0
      %232 = vmatpush2.bf16.msra.mxu0 0
      %233 = vmatprep.subr.bf16.mxu0 0
      %234 = vmatpush2.bf16.msra.mxu0 0
      %235 = vmatprep.subr.bf16.mxu0 0
      %236 = vmatpush2.bf16.msra.mxu0 0
      %237 = vmatprep.mubr.bf16.mxu0 0
      %238 = vmatmul.mubr.bf16.gmra.mxu0 %v203
      %v239 = vpop.f32.mrf.mxu0
      %v240 = vadd.f32 0.0, %v239
      %v241 = vpop.f32.mrf.mxu0
      %v242 = vpop.f32.mrf.mxu0
      %v243 = vadd.f32 0.0, %v242
      %v244 = vpop.f32.mrf.mxu0
      %245 = vdwg.mxu0
      %246 = vst.msk [vmem:[%s179] sm:$0xff] %vm201, %v240
      %247 = vst.msk [vmem:[%s179 + $0x8] sm:$0xff] %vm201, %v243
      %v248 = vsel %vm201, %v240, 0.0
      %v249 = vsel %vm201, %v243, 0.0
      %v250 = vadd.f32 %v248, %v249
      %v251 = vrot.slane %v250, 4
      %v252 = vadd.f32 %v250, %v251
      %v253 = vrot.slane %v252, 2
      %v254 = vadd.f32 %v252, %v253
      %v255 = vrot.slane %v254, 1
      %v256 = vadd.f32 %v254, %v255
      %v257 = vmul.f32 %v240, %v240
      %v258 = vmul.f32 %v243, %v243
      %v259 = vsel %vm201, %v257, 0.0
      %v260 = vsel %vm201, %v258, 0.0
      %v261 = vadd.f32 %v259, %v260
      %v262 = vrot.slane %v261, 4
      %v263 = vadd.f32 %v261, %v262
      %v264 = vrot.slane %v263, 2
      %v265 = vadd.f32 %v263, %v264
      %v266 = vrot.slane %v265, 1
      %v267 = vadd.f32 %v265, %v266
      %v268 = vlaneseq
      %v269 = vshrl.u32 %v268, 7
      %vm270 = vcmp.eq.s32.totalorder %v269, 0
      %vm271 = vcmp.eq.s32.totalorder %v269, 1
      %v272 = vsel %vm271, %v267, 0.0
      %v273 = vsel %vm270, %v256, %v272
      %274 = vst.msk [vmem:[%s184] sm:$0xff] %vm201, %v273
      %s275 = smul.u32 2, %s15
      %p276 = scmp.lt.s32.totalorder %s275, 3
      %s277 = scalar_select %p276, %s275, 3
      %s278 = smul.addr %s277, 8
      %s279 = scalar_lea.vmem %s2, %s278
      %p280 = scmp.lt.s32.totalorder %s15, 1
      %s281 = scalar_select %p280, %s15, 1
      %s282 = smul.addr %s281, 8
      %s283 = scalar_lea.vmem %s3, %s282
      // Predicated region
      $region29: #{stem_forward.12} parent=27 // pred_check
        %p284 = pneg %p80
      $region30: #{stem_forward.12} parent=27 // pred_check_branch
        %286 = sbr.rel (%p284) target = $region32
      $region31: #{stem_forward.12} parent=27 // pred_region
        %s287 = smul.u32 2, %s15
      $region32: #{stem_forward.12} parent=27 // pred_fallthru
        _
      // Predicated region
      $region33: #{stem_forward.12} parent=27 // pred_check
        %p288 = pneg %p106
      $region34: #{stem_forward.12} parent=27 // pred_check_branch
        %290 = sbr.rel (%p288) target = $region36
      $region35: #{stem_forward.12} parent=27 // pred_region
        _
      $region36: #{stem_forward.12} parent=27 // pred_fallthru
        _
    $region28: #{stem_forward.12} parent=5 // pred_fallthru
      _
    %p291 = scmp.le.s32.totalorder 2, %s10
    // Predicated region
    $region37: #{stem_forward.12} parent=5 // pred_check
      %p292 = pneg %p291
    $region38: #{stem_forward.12} parent=5 // pred_check_branch
      %294 = sbr.rel (%p292) target = $region40
    $region39: #{stem_forward.12} parent=5 // pred_region
      %s295 = ssub.s32 %s10, 2
      // Predicated region
      $region41: #{stem_forward.12} parent=39 // pred_check
        %p296 = pneg %p86
      $region42: #{stem_forward.12} parent=39 // pred_check_branch
        %298 = sbr.rel (%p296) target = $region44
      $region43: #{stem_forward.12} parent=39 // pred_region
        %s299 = smul.u32 2, %s16
        %p300 = scmp.lt.s32.totalorder %s299, 3
        %s301 = scalar_select %p300, %s299, 3
        %s302 = smul.addr %s301, 8
        %s303 = scalar_lea.vmem %s2, %s302
      $region44: #{stem_forward.12} parent=39 // pred_fallthru
        _
      // Predicated region
      $region45: #{stem_forward.12} parent=39 // pred_check
        %p304 = pneg %p112
      $region46: #{stem_forward.12} parent=39 // pred_check_branch
        %306 = sbr.rel (%p304) target = $region48
      $region47: #{stem_forward.12} parent=39 // pred_region
        %p307 = scmp.lt.s32.totalorder %s16, 1
        %s308 = scalar_select %p307, %s16, 1
        %s309 = smul.addr %s308, 8
        %s310 = scalar_lea.vmem %s3, %s309
      $region48: #{stem_forward.12} parent=39 // pred_fallthru
        _
    $region40: #{stem_forward.12} parent=5 // pred_fallthru
      _
  $region6: #{stem_forward.12} parent=0 // loop_footer
    %s14 = sadd.s32 1, %s10
  $region7: #{stem_forward.12} parent=0 // loop_footer_branch
    %9 = sbr.rel target = $region3
  $region8: #{stem_forward.12} parent=0 // loop_exit
    _

// kernel: stem_forward.8
$region0: #{stem_forward.8}
  #allocation0 [shape = 'u32[]', space=smem, size = 0x4, offset = 0x4, fixed_abs, tag = 'smem constant byte address 0x4 - core index']
  #allocation1 [shape = 'u32[144,128]{1,0:T(1,128)}', space=vmem, size = 0x12000, scoped, tag = 'internal scratch']
  %s0 = inlined_call_operand.vmem [shape: f32[128,32], index: 0, kind: input, shape index: {}]
  %s1 = inlined_call_operand.vmem [shape: f32[1,32], index: 1, kind: input, shape index: {}]
  %s2 = inlined_call_operand.vmem [shape: f32[1,32], index: 2, kind: input, shape index: {}]
  %s3 = inlined_call_operand.vmem [shape: bf16[32,32], index: 3, kind: input, shape index: {}]
  %s4 = inlined_call_operand.vmem [shape: bf16[128,32], index: 4, kind: output, shape index: {0}]
  %s5 = inlined_call_operand.vmem [shape: f32[16,32], index: 5, kind: output, shape index: {1}]
  %6 = xla_tuple %s4, %s5
  %s7 = sld [smem:[#allocation0]]
  $region57: #{stem_forward.8} parent=0
    _
  %s9 = ssub.s32 1, %s7
  %s10 = scalar_select 0, %s9, %s7
  loop: start=0, step=1, limit=4
  $region2: #{stem_forward.8} parent=0 // loop_pre_header
    _
  $region3: #{stem_forward.8} parent=0 // loop_header
    %s12 = sphi 0, %s16
    %p13 = scmp.ge.s32.totalorder %s12, 4
    %s22 = sphi 0, %s24
    %s25 = sphi 0, %s22
    %s26 = sphi 0, %s25
    %s42 = sphi 0, %s26
    %s46 = sphi 0, %s46
    %s48 = sphi 0, %s46
    %s49 = sphi 0, %s48
    %s63 = sphi 0, %s49
    %s67 = sphi 0, %s67
    %s69 = sphi 0, %s67
    %s70 = sphi 0, %s69
    %s84 = sphi 0, %s70
    %s88 = sphi 0, %s88
    %s90 = sphi 0, %s88
    %s91 = sphi 0, %s90
    %s105 = sphi 0, %s91
    %s111 = sphi 0, %s113
    %s114 = sphi 0, %s111
    %s115 = sphi 0, %s114
    %s131 = sphi 0, %s115
    %s137 = sphi 0, %s139
    %s140 = sphi 0, %s137
    %s141 = sphi 0, %s140
    %s157 = sphi 0, %s141
  $region4: #{stem_forward.8} parent=0 // loop_header_branch
    %15 = sbr.rel (%p13) target = $region8
  $region5: #{stem_forward.8} parent=0 // loop_body
    %s17 = ssub.s32 %s12, 1
    %s18 = ssub.s32 %s12, 2
    %s19 = sadd.s32 %s12, 1
    %s20 = ssub.s32 %s12, %s19
    %p21 = scmp.eq.s32.totalorder %s20, 0
    %s23 = sadd.s32 %s22, 1
    %s24 = scalar_select %p21, %s22, %s23
    %p27 = pneg %p21
    %p28 = scmp.eq.s32.totalorder %s12, 1
    %p29 = por %p27, %p28
    %p30 = scmp.ne.s32.totalorder %s22, %s25
    %p31 = scmp.eq.s32.totalorder %s12, 0
    %p32 = por %p30, %p31
    %p33 = scmp.ne.s32.totalorder %s22, %s25
    %p34 = scmp.eq.s32.totalorder %s17, 1
    %p35 = por %p33, %p34
    %p36 = scmp.ne.s32.totalorder %s25, %s26
    %p37 = scmp.eq.s32.totalorder %s17, 0
    %p38 = por %p36, %p37
    %p39 = scmp.ne.s32.totalorder %s25, %s26
    %p40 = scmp.eq.s32.totalorder %s18, 1
    %p41 = por %p39, %p40
    %p43 = scmp.ne.s32.totalorder %s26, %s42
    %p44 = scmp.eq.s32.totalorder %s18, 0
    %p45 = por %p43, %p44
    %s47 = sadd.s32 %s46, 1
    %p50 = scmp.eq.s32.totalorder %s12, 1
    %p51 = scmp.ne.s32.totalorder %s46, %s48
    %p52 = scmp.eq.s32.totalorder %s12, 0
    %p53 = por %p51, %p52
    %p54 = scmp.ne.s32.totalorder %s46, %s48
    %p55 = scmp.eq.s32.totalorder %s17, 1
    %p56 = por %p54, %p55
    %p57 = scmp.ne.s32.totalorder %s48, %s49
    %p58 = scmp.eq.s32.totalorder %s17, 0
    %p59 = por %p57, %p58
    %p60 = scmp.ne.s32.totalorder %s48, %s49
    %p61 = scmp.eq.s32.totalorder %s18, 1
    %p62 = por %p60, %p61
    %p64 = scmp.ne.s32.totalorder %s49, %s63
    %p65 = scmp.eq.s32.totalorder %s18, 0
    %p66 = por %p64, %p65
    %s68 = sadd.s32 %s67, 1
    %p71 = scmp.eq.s32.totalorder %s12, 1
    %p72 = scmp.ne.s32.totalorder %s67, %s69
    %p73 = scmp.eq.s32.totalorder %s12, 0
    %p74 = por %p72, %p73
    %p75 = scmp.ne.s32.totalorder %s67, %s69
    %p76 = scmp.eq.s32.totalorder %s17, 1
    %p77 = por %p75, %p76
    %p78 = scmp.ne.s32.totalorder %s69, %s70
    %p79 = scmp.eq.s32.totalorder %s17, 0
    %p80 = por %p78, %p79
    %p81 = scmp.ne.s32.totalorder %s69, %s70
    %p82 = scmp.eq.s32.totalorder %s18, 1
    %p83 = por %p81, %p82
    %p85 = scmp.ne.s32.totalorder %s70, %s84
    %p86 = scmp.eq.s32.totalorder %s18, 0
    %p87 = por %p85, %p86
    %s89 = sadd.s32 %s88, 1
    %p92 = scmp.eq.s32.totalorder %s12, 1
    %p93 = scmp.ne.s32.totalorder %s88, %s90
    %p94 = scmp.eq.s32.totalorder %s12, 0
    %p95 = por %p93, %p94
    %p96 = scmp.ne.s32.totalorder %s88, %s90
    %p97 = scmp.eq.s32.totalorder %s17, 1
    %p98 = por %p96, %p97
    %p99 = scmp.ne.s32.totalorder %s90, %s91
    %p100 = scmp.eq.s32.totalorder %s17, 0
    %p101 = por %p99, %p100
    %p102 = scmp.ne.s32.totalorder %s90, %s91
    %p103 = scmp.eq.s32.totalorder %s18, 1
    %p104 = por %p102, %p103
    %p106 = scmp.ne.s32.totalorder %s91, %s105
    %p107 = scmp.eq.s32.totalorder %s18, 0
    %p108 = por %p106, %p107
    %s109 = ssub.s32 %s12, %s19
    %p110 = scmp.eq.s32.totalorder %s109, 0
    %s112 = sadd.s32 %s111, 1
    %s113 = scalar_select %p110, %s111, %s112
    %p116 = pneg %p110
    %p117 = scmp.eq.s32.totalorder %s12, 1
    %p118 = por %p116, %p117
    %p119 = scmp.ne.s32.totalorder %s111, %s114
    %p120 = scmp.eq.s32.totalorder %s12, 0
    %p121 = por %p119, %p120
    %p122 = scmp.ne.s32.totalorder %s111, %s114
    %p123 = scmp.eq.s32.totalorder %s17, 1
    %p124 = por %p122, %p123
    %p125 = scmp.ne.s32.totalorder %s114, %s115
    %p126 = scmp.eq.s32.totalorder %s17, 0
    %p127 = por %p125, %p126
    %p128 = scmp.ne.s32.totalorder %s114, %s115
    %p129 = scmp.eq.s32.totalorder %s18, 1
    %p130 = por %p128, %p129
    %p132 = scmp.ne.s32.totalorder %s115, %s131
    %p133 = scmp.eq.s32.totalorder %s18, 0
    %p134 = por %p132, %p133
    %s135 = ssub.s32 %s12, %s19
    %p136 = scmp.eq.s32.totalorder %s135, 0
    %s138 = sadd.s32 %s137, 1
    %s139 = scalar_select %p136, %s137, %s138
    %p142 = pneg %p136
    %p143 = scmp.eq.s32.totalorder %s12, 1
    %p144 = por %p142, %p143
    %p145 = scmp.ne.s32.totalorder %s137, %s140
    %p146 = scmp.eq.s32.totalorder %s12, 0
    %p147 = por %p145, %p146
    %p148 = scmp.ne.s32.totalorder %s137, %s140
    %p149 = scmp.eq.s32.totalorder %s17, 1
    %p150 = por %p148, %p149
    %p151 = scmp.ne.s32.totalorder %s140, %s141
    %p152 = scmp.eq.s32.totalorder %s17, 0
    %p153 = por %p151, %p152
    %p154 = scmp.ne.s32.totalorder %s140, %s141
    %p155 = scmp.eq.s32.totalorder %s18, 1
    %p156 = por %p154, %p155
    %p158 = scmp.ne.s32.totalorder %s141, %s157
    %p159 = scmp.eq.s32.totalorder %s18, 0
    %p160 = por %p158, %p159
    %p161 = scmp.le.s32.totalorder 1, %s12
    %p162 = scmp.lt.s32.totalorder %s12, 3
    %p163 = pnand %p161, %p162
    %p164 = pneg %p163
    // Predicated region
    $region9: #{stem_forward.8} parent=5 // pred_check
      _
    $region10: #{stem_forward.8} parent=5 // pred_check_branch
      %166 = sbr.rel (%p163) target = $region12
    $region11: #{stem_forward.8} parent=5 // pred_region
      %s167 = ssub.s32 %s12, 1
      // Predicated region
      $region13: #{stem_forward.8} parent=11 // pred_check
        %p168 = pneg %p59
      $region14: #{stem_forward.8} parent=11 // pred_check_branch
        %170 = sbr.rel (%p168) target = $region16
      $region15: #{stem_forward.8} parent=11 // pred_region
        _
      $region16: #{stem_forward.8} parent=11 // pred_fallthru
        _
      // Predicated region
      $region17: #{stem_forward.8} parent=11 // pred_check
        %p171 = pneg %p80
      $region18: #{stem_forward.8} parent=11 // pred_check_branch
        %173 = sbr.rel (%p171) target = $region20
      $region19: #{stem_forward.8} parent=11 // pred_region
        _
      $region20: #{stem_forward.8} parent=11 // pred_fallthru
        _
      // Predicated region
      $region21: #{stem_forward.8} parent=11 // pred_check
        %p174 = pneg %p101
      $region22: #{stem_forward.8} parent=11 // pred_check_branch
        %176 = sbr.rel (%p174) target = $region24
      $region23: #{stem_forward.8} parent=11 // pred_region
        _
      $region24: #{stem_forward.8} parent=11 // pred_fallthru
        _
    $region12: #{stem_forward.8} parent=5 // pred_fallthru
      _
    %p177 = scmp.lt.s32.totalorder %s12, 2
    // Predicated region
    $region25: #{stem_forward.8} parent=5 // pred_check
      %p178 = pneg %p177
    $region26: #{stem_forward.8} parent=5 // pred_check_branch
      %180 = sbr.rel (%p178) target = $region28
    $region27: #{stem_forward.8} parent=5 // pred_region
      // Predicated region
      $region29: #{stem_forward.8} parent=27 // pred_check
        %p181 = pneg %p32
      $region30: #{stem_forward.8} parent=27 // pred_check_branch
        %183 = sbr.rel (%p181) target = $region32
      $region31: #{stem_forward.8} parent=27 // pred_region
        %s184 = smul.u32 8, %s12
        %p185 = scmp.lt.s32.totalorder %s184, 15
        %s186 = scalar_select %p185, %s184, 15
        %s187 = smul.addr %s186, 8
        %s188 = scalar_lea.vmem %s0, %s187
        %s189 = smul.u32 8, %s12
      $region32: #{stem_forward.8} parent=27 // pred_fallthru
        _
    $region28: #{stem_forward.8} parent=5 // pred_fallthru
      _
    %p190 = scmp.le.s32.totalorder 1, %s12
    %p191 = scmp.lt.s32.totalorder %s12, 3
    %p192 = pnand %p190, %p191
    %p193 = pneg %p192
    // Predicated region
    $region33: #{stem_forward.8} parent=5 // pred_check
      _
    $region34: #{stem_forward.8} parent=5 // pred_check_branch
      %195 = sbr.rel (%p192) target = $region36
    $region35: #{stem_forward.8} parent=5 // pred_region
      %s196 = ssub.s32 %s12, 1
      %s197 = smul.u32 8, %s17
      %p198 = scmp.lt.s32.totalorder %s197, 15
      %s199 = scalar_select %p198, %s197, 15
      %s200 = smul.addr %s199, 8
      %s201 = scalar_lea.vmem %s0, %s200
      %p202 = pneg %p38
      %p203 = pneg %p35
      %p204 = pneg %p59
      %p205 = pneg %p56
      %p206 = pneg %p80
      %p207 = pneg %p77
      %p208 = pneg %p101
      %p209 = pneg %p98
      %p210 = pneg %p127
      %p211 = pneg %p124
      %s212 = smul.u32 8, %s17
      %p213 = scmp.lt.s32.totalorder %s212, 15
      %s214 = scalar_select %p213, %s212, 15
      %s215 = smul.addr %s214, 4
      %s216 = scalar_lea.vmem %s4, %s215
      %p217 = pneg %p153
      %p218 = pneg %p150
      %p219 = scmp.lt.s32.totalorder %s17, 1
      %s220 = scalar_select %p219, %s17, 1
      %s221 = smul.addr %s220, 8
      %s222 = scalar_lea.vmem %s5, %s221
      %s223 = smul.u32 8, %s17
      %p224 = scmp.lt.s32.totalorder %s223, 15
      %s225 = scalar_select %p224, %s223, 15
      %s226 = smul.addr %s225, 8
      %s227 = scalar_lea.vmem %s0, %s226
      %s228 = smul.u32 8, %s17
      %s229 = smul.u32 8, %s17
      %p230 = scmp.lt.s32.totalorder %s229, 15
      %s231 = scalar_select %p230, %s229, 15
      %s232 = smul.addr %s231, 4
      %s233 = scalar_lea.vmem %s4, %s232
      %s234 = smul.u32 8, %s17
      %p235 = scmp.lt.s32.totalorder %s17, 1
      %s236 = scalar_select %p235, %s17, 1
      %s237 = smul.addr %s236, 8
      %s238 = scalar_lea.vmem %s5, %s237
      %v240 = vld [vmem:[%s227] sm:$0xff]
      %v241 = vld [vmem:[%s227 + $0x8] sm:$0xff]
      %v242 = vld [vmem:[%s227 + $0x10] sm:$0xff]
      %v243 = vld [vmem:[%s227 + $0x18] sm:$0xff]
      %v244 = vld [vmem:[%s227 + $0x20] sm:$0xff]
      %v245 = vld [vmem:[%s227 + $0x28] sm:$0xff]
      %v246 = vld [vmem:[%s227 + $0x30] sm:$0xff]
      %v247 = vld [vmem:[%s227 + $0x38] sm:$0xff]
      %v248 = vld [vmem:[%s1] sm:$0x1]
      %v250 = vlaneseq
      %v251 = vshrl.u32 %v250, 7
      %v252 = vsub.s32 0, %v251
      %v253 = vrot.slane %v248, %v252
      %v255 = vmul.f32 %v240, %v253
      %v256 = vmul.f32 %v241, %v253
      %v257 = vmul.f32 %v242, %v253
      %v258 = vmul.f32 %v243, %v253
      %v259 = vmul.f32 %v244, %v253
      %v260 = vmul.f32 %v245, %v253
      %v261 = vmul.f32 %v246, %v253
      %v262 = vmul.f32 %v247, %v253
      %v263 = vld [vmem:[%s2] sm:$0x1]
      %v265 = vlaneseq
      %v266 = vshrl.u32 %v265, 7
      %v267 = vsub.s32 0, %v266
      %v268 = vrot.slane %v263, %v267
      %v270 = vadd.f32 %v255, %v268
      %v271 = vadd.f32 %v256, %v268
      %v272 = vadd.f32 %v257, %v268
      %v273 = vadd.f32 %v258, %v268
      %v274 = vadd.f32 %v259, %v268
      %v275 = vadd.f32 %v260, %v268
      %v276 = vadd.f32 %v261, %v268
      %v277 = vadd.f32 %v262, %v268
      %v278 = vmul.f32 %v270, 0.01
      %v279 = vmul.f32 %v271, 0.01
      %v280 = vmul.f32 %v272, 0.01
      %v281 = vmul.f32 %v273, 0.01
      %v282 = vmul.f32 %v274, 0.01
      %v283 = vmul.f32 %v275, 0.01
      %v284 = vmul.f32 %v276, 0.01
      %v285 = vmul.f32 %v277, 0.01
      %v286 = vmax.f32 %v270, %v278
      %v287 = vmax.f32 %v271, %v279
      %v288 = vmax.f32 %v272, %v280
      %v289 = vmax.f32 %v273, %v281
      %v290 = vmax.f32 %v274, %v282
      %v291 = vmax.f32 %v275, %v283
      %v292 = vmax.f32 %v276, %v284
      %v293 = vmax.f32 %v277, %v285
      %s294 = smul.u32 %s17, 64
      %v295 = vlaneseq
      %v296 = vshrl.u32 %v295, 7
      %v297 = vadd.s32 %v296, 8
      %v298 = vadd.s32 %v296, 16
      %v299 = vadd.s32 %v296, 24
      %v300 = vadd.s32 %v296, 32
      %v301 = vadd.s32 %v296, 40
      %v302 = vadd.s32 %v296, 48
      %v303 = vadd.s32 %v296, 56
      %v304 = vstv %s294
      %v305 = vadd.s32 %v304, %v296
      %v306 = vadd.s32 %v304, %v297
      %v307 = vadd.s32 %v304, %v298
      %v308 = vadd.s32 %v304, %v299
      %v309 = vadd.s32 %v304, %v300
      %v310 = vadd.s32 %v304, %v301
      %v311 = vadd.s32 %v304, %v302
      %v312 = vadd.s32 %v304, %v303
      %vm313 = vcmp.lt.s32.totalorder %v305, 128
      %vm314 = vcmp.lt.s32.totalorder %v306, 128
      %vm315 = vcmp.lt.s32.totalorder %v307, 128
      %vm316 = vcmp.lt.s32.totalorder %v308, 128
      %vm317 = vcmp.lt.s32.totalorder %v309, 128
      %vm318 = vcmp.lt.s32.totalorder %v310, 128
      %vm319 = vcmp.lt.s32.totalorder %v311, 128
      %vm320 = vcmp.lt.s32.totalorder %v312, 128
      %v321 = vsel %vm313, %v286, 0.0
      %v322 = vsel %vm314, %v287, 0.0
      %v323 = vsel %vm315, %v288, 0.0
      %v324 = vsel %vm316, %v289, 0.0
      %v325 = vsel %vm317, %v290, 0.0
      %v326 = vsel %vm318, %v291, 0.0
      %v327 = vsel %vm319, %v292, 0.0
      %v328 = vsel %vm320, %v293, 0.0
      %v329 = vpack.c.bf16 %v322, %v321
      %v330 = vpack.c.bf16 %v324, %v323
      %v331 = vpack.c.bf16 %v326, %v325
      %v332 = vpack.c.bf16 %v328, %v327
      %v333 = vld [vmem:[%s3] sm:$0xf]
      %v334 = vld [vmem:[%s3 + $0x4] sm:$0xf]
      %v335 = vld [vmem:[%s3 + $0x8] sm:$0xf]
      %v336 = vld [vmem:[%s3 + $0xc] sm:$0xf]
      %v341 = vunpack.c.l.b16 %v333
      %v342 = vunpack.c.l.b16 %v334
      %v343 = vunpack.c.l.b16 %v335
      %v344 = vunpack.c.l.b16 %v336
      %v345 = vpack.c.b16 %v342, %v341
      %v346 = vpack.c.b16 %v344, %v343
      %vm349 = vcmask 261120
      %v351 = vsel %vm349, %v329, 0
      %v354 = vsel %vm349, %v330, 0
      %v357 = vsel %vm349, %v331, 0
      %v360 = vsel %vm349, %v332, 0
      %362 = vmatprep.subr.bf16.mxu0 0
      %363 = vmatpush1.bf16.msra.mxu0 0
      %364 = vmatprep.subr.bf16.mxu0 0
      %365 = vmatpush1.bf16.msra.mxu0 0
      %366 = vmatprep.subr.bf16.mxu0 0
      %367 = vmatpush1.bf16.msra.mxu0 0
      %368 = vmatprep.subr.bf16.mxu0 0
      %369 = vmatpush1.bf16.msra.mxu0 0
      %370 = vmatprep.subr.bf16.mxu0 0
      %371 = vmatpush1.bf16.msra.mxu0 0
      %372 = vmatprep.subr.bf16.mxu0 0
      %373 = vmatpush1.bf16.msra.mxu0 0
      %374 = vmatprep.subr.bf16.mxu0 0
      %375 = vmatpush1.bf16.msra.mxu0 %v346
      %376 = vmatprep.subr.bf16.mxu0 0
      %377 = vmatpush1.bf16.msra.mxu0 %v345
      %378 = vmatprep.subr.bf16.mxu0 0
      %379 = vmatpush2.bf16.msra.mxu0 0
      %380 = vmatprep.subr.bf16.mxu0 0
      %381 = vmatpush2.bf16.msra.mxu0 0
      %382 = vmatprep.subr.bf16.mxu0 0
      %383 = vmatpush2.bf16.msra.mxu0 0
      %384 = vmatprep.subr.bf16.mxu0 0
      %385 = vmatpush2.bf16.msra.mxu0 0
      %386 = vmatprep.subr.bf16.mxu0 0
      %387 = vmatpush2.bf16.msra.mxu0 0
      %388 = vmatprep.subr.bf16.mxu0 0
      %389 = vmatpush2.bf16.msra.mxu0 0
      %390 = vmatprep.subr.bf16.mxu0 0
      %391 = vmatpush2.bf16.msra.mxu0 0
      %392 = vmatprep.subr.bf16.mxu0 0
      %393 = vmatpush2.bf16.msra.mxu0 0
      %394 = vmatprep.mubr.bf16.mxu0 0
      %395 = vmatmul.mubr.bf16.gmra.mxu0 %v351
      %v396 = vpop.f32.mrf.mxu0
      %v397 = vadd.f32 0.0, %v396
      %v398 = vpop.f32.mrf.mxu0
      %v399 = vpop.f32.mrf.mxu0
      %v400 = vadd.f32 0.0, %v399
      %v401 = vpop.f32.mrf.mxu0
      %402 = vmatprep.mubr.bf16.mxu0 0
      %403 = vmatmul.mubr.bf16.gmra.mxu0 %v354
      %v404 = vpop.f32.mrf.mxu0
      %v405 = vadd.f32 0.0, %v404
      %v406 = vpop.f32.mrf.mxu0
      %v407 = vpop.f32.mrf.mxu0
      %v408 = vadd.f32 0.0, %v407
      %v409 = vpop.f32.mrf.mxu0
      %410 = vmatprep.mubr.bf16.mxu0 0
      %411 = vmatmul.mubr.bf16.gmra.mxu0 %v357
      %v412 = vpop.f32.mrf.mxu0
      %v413 = vadd.f32 0.0, %v412
      %v414 = vpop.f32.mrf.mxu0
      %v415 = vpop.f32.mrf.mxu0
      %v416 = vadd.f32 0.0, %v415
      %v417 = vpop.f32.mrf.mxu0
      %418 = vmatprep.mubr.bf16.mxu0 0
      %419 = vmatmul.mubr.bf16.gmra.mxu0 %v360
      %v420 = vpop.f32.mrf.mxu0
      %v421 = vadd.f32 0.0, %v420
      %v422 = vpop.f32.mrf.mxu0
      %v423 = vpop.f32.mrf.mxu0
      %v424 = vadd.f32 0.0, %v423
      %v425 = vpop.f32.mrf.mxu0
      %426 = vdwg.mxu0
      %v427 = vpack.c.bf16 %v400, %v397
      %v428 = vpack.c.bf16 %v408, %v405
      %v429 = vpack.c.bf16 %v416, %v413
      %v430 = vpack.c.bf16 %v424, %v421
      %v435 = vunpack.c.l.b16 %v427
      %v436 = vunpack.c.h.b16 %v427
      %v437 = vunpack.c.l.b16 %v428
      %v438 = vunpack.c.h.b16 %v428
      %v439 = vunpack.c.l.b16 %v429
      %v440 = vunpack.c.h.b16 %v429
      %v441 = vunpack.c.l.b16 %v430
      %v442 = vunpack.c.h.b16 %v430
      %v443 = vpack.c.b16 %v435, %v435
      %v444 = vpack.c.b16 %v436, %v436
      %v445 = vpack.c.b16 %v437, %v437
      %v446 = vpack.c.b16 %v438, %v438
      %v447 = vpack.c.b16 %v439, %v439
      %v448 = vpack.c.b16 %v440, %v440
      %v449 = vpack.c.b16 %v441, %v441
      %v450 = vpack.c.b16 %v442, %v442
      %vm459 = vcmask 257024
      %460 = vst.msk [vmem:[%s233] sm:$0xf] %vm459, %v443
      %461 = vst.msk [vmem:[%s233 + $0x4] sm:$0xf] %vm459, %v444
      %462 = vst.msk [vmem:[%s233 + $0x8] sm:$0xf] %vm459, %v445
      %463 = vst.msk [vmem:[%s233 + $0xc] sm:$0xf] %vm459, %v446
      %464 = vst.msk [vmem:[%s233 + $0x10] sm:$0xf] %vm459, %v447
      %465 = vst.msk [vmem:[%s233 + $0x14] sm:$0xf] %vm459, %v448
      %466 = vst.msk [vmem:[%s233 + $0x18] sm:$0xf] %vm459, %v449
      %467 = vst.msk [vmem:[%s233 + $0x1c] sm:$0xf] %vm459, %v450
      %v468 = vsel %vm349, %v397, 0.0
      %v469 = vsel %vm349, %v400, 0.0
      %v470 = vadd.f32 %v468, %v469
      %v471 = vsel %vm349, %v405, 0.0
      %v472 = vadd.f32 %v470, %v471
      %v473 = vsel %vm349, %v408, 0.0
      %v474 = vadd.f32 %v472, %v473
      %v475 = vsel %vm349, %v413, 0.0
      %v476 = vadd.f32 %v474, %v475
      %v477 = vsel %vm349, %v416, 0.0
      %v478 = vadd.f32 %v476, %v477
      %v479 = vsel %vm349, %v421, 0.0
      %v480 = vadd.f32 %v478, %v479
      %v481 = vsel %vm349, %v424, 0.0
      %v482 = vadd.f32 %v480, %v481
      %v483 = vrot.slane %v482, 4
      %v484 = vadd.f32 %v482, %v483
      %v485 = vrot.slane %v484, 2
      %v486 = vadd.f32 %v484, %v485
      %v487 = vrot.slane %v486, 1
      %v488 = vadd.f32 %v486, %v487
      %v489 = vmul.f32 %v397, %v397
      %v490 = vmul.f32 %v400, %v400
      %v491 = vmul.f32 %v405, %v405
      %v492 = vmul.f32 %v408, %v408
      %v493 = vmul.f32 %v413, %v413
      %v494 = vmul.f32 %v416, %v416
      %v495 = vmul.f32 %v421, %v421
      %v496 = vmul.f32 %v424, %v424
      %v497 = vsel %vm349, %v489, 0.0
      %v498 = vsel %vm349, %v490, 0.0
      %v499 = vadd.f32 %v497, %v498
      %v500 = vsel %vm349, %v491, 0.0
      %v501 = vadd.f32 %v499, %v500
      %v502 = vsel %vm349, %v492, 0.0
      %v503 = vadd.f32 %v501, %v502
      %v504 = vsel %vm349, %v493, 0.0
      %v505 = vadd.f32 %v503, %v504
      %v506 = vsel %vm349, %v494, 0.0
      %v507 = vadd.f32 %v505, %v506
      %v508 = vsel %vm349, %v495, 0.0
      %v509 = vadd.f32 %v507, %v508
      %v510 = vsel %vm349, %v496, 0.0
      %v511 = vadd.f32 %v509, %v510
      %v512 = vrot.slane %v511, 4
      %v513 = vadd.f32 %v511, %v512
      %v514 = vrot.slane %v513, 2
      %v515 = vadd.f32 %v513, %v514
      %v516 = vrot.slane %v515, 1
      %v517 = vadd.f32 %v515, %v516
      %vm518 = vcmp.eq.s32.totalorder %v296, 0
      %vm519 = vcmp.eq.s32.totalorder %v296, 1
      %v520 = vsel %vm519, %v517, 0.0
      %v521 = vsel %vm518, %v488, %v520
      %522 = vst.msk [vmem:[%s238] sm:$0xff] %vm349, %v521
      %s523 = smul.u32 8, %s17
      %p524 = scmp.lt.s32.totalorder %s523, 15
      %s525 = scalar_select %p524, %s523, 15
      %s526 = smul.addr %s525, 4
      %s527 = scalar_lea.vmem %s4, %s526
      %p528 = scmp.lt.s32.totalorder %s17, 1
      %s529 = scalar_select %p528, %s17, 1
      %s530 = smul.addr %s529, 8
      %s531 = scalar_lea.vmem %s5, %s530
      // Predicated region
      $region37: #{stem_forward.8} parent=35 // pred_check
        %p532 = pneg %p124
      $region38: #{stem_forward.8} parent=35 // pred_check_branch
        %534 = sbr.rel (%p532) target = $region40
      $region39: #{stem_forward.8} parent=35 // pred_region
        %s535 = smul.u32 8, %s17
      $region40: #{stem_forward.8} parent=35 // pred_fallthru
        _
      // Predicated region
      $region41: #{stem_forward.8} parent=35 // pred_check
        %p536 = pneg %p150
      $region42: #{stem_forward.8} parent=35 // pred_check_branch
        %538 = sbr.rel (%p536) target = $region44
      $region43: #{stem_forward.8} parent=35 // pred_region
        _
      $region44: #{stem_forward.8} parent=35 // pred_fallthru
        _
    $region36: #{stem_forward.8} parent=5 // pred_fallthru
      _
    %p539 = scmp.le.s32.totalorder 2, %s12
    // Predicated region
    $region45: #{stem_forward.8} parent=5 // pred_check
      %p540 = pneg %p539
    $region46: #{stem_forward.8} parent=5 // pred_check_branch
      %542 = sbr.rel (%p540) target = $region48
    $region47: #{stem_forward.8} parent=5 // pred_region
      %s543 = ssub.s32 %s12, 2
      // Predicated region
      $region49: #{stem_forward.8} parent=47 // pred_check
        %p544 = pneg %p130
      $region50: #{stem_forward.8} parent=47 // pred_check_branch
        %546 = sbr.rel (%p544) target = $region52
      $region51: #{stem_forward.8} parent=47 // pred_region
        %s547 = smul.u32 8, %s18
        %p548 = scmp.lt.s32.totalorder %s547, 15
        %s549 = scalar_select %p548, %s547, 15
        %s550 = smul.addr %s549, 4
        %s551 = scalar_lea.vmem %s4, %s550
      $region52: #{stem_forward.8} parent=47 // pred_fallthru
        _
      // Predicated region
      $region53: #{stem_forward.8} parent=47 // pred_check
        %p552 = pneg %p156
      $region54: #{stem_forward.8} parent=47 // pred_check_branch
        %554 = sbr.rel (%p552) target = $region56
      $region55: #{stem_forward.8} parent=47 // pred_region
        %p555 = scmp.lt.s32.totalorder %s18, 1
        %s556 = scalar_select %p555, %s18, 1
        %s557 = smul.addr %s556, 8
        %s558 = scalar_lea.vmem %s5, %s557
      $region56: #{stem_forward.8} parent=47 // pred_fallthru
        _
    $region48: #{stem_forward.8} parent=5 // pred_fallthru
      _
  $region6: #{stem_forward.8} parent=0 // loop_footer
    %s16 = sadd.s32 1, %s12
  $region7: #{stem_forward.8} parent=0 // loop_footer_branch
    %11 = sbr.rel target = $region3
  $region8: #{stem_forward.8} parent=0 // loop_exit
    _

// kernel: stem_forward.13
$region0: #{stem_forward.13}
  #allocation0 [shape = 'u32[]', space=smem, size = 0x4, offset = 0x4, fixed_abs, tag = 'smem constant byte address 0x4 - core index']
  #allocation1 [shape = 'u32[144,128]{1,0:T(1,128)}', space=vmem, size = 0x12000, scoped, tag = 'internal scratch']
  %s0 = inlined_call_operand.vmem [shape: f32[32,16], index: 0, kind: input, shape index: {}]
  %s1 = inlined_call_operand.vmem [shape: f32[32,16], index: 1, kind: input, shape index: {}]
  %s2 = inlined_call_operand.vmem [shape: f32[1,32], index: 2, kind: input, shape index: {}]
  %s3 = inlined_call_operand.vmem [shape: f32[1,32], index: 3, kind: input, shape index: {}]
  %s4 = inlined_call_operand.vmem [shape: f32[32,32], index: 4, kind: output, shape index: {}]
  %s5 = sld [smem:[#allocation0]]
  $region49: #{stem_forward.13} parent=0
    _
  %s7 = ssub.s32 1, %s5
  %s8 = scalar_select 0, %s7, %s5
  loop: start=0, step=1, limit=4
  $region2: #{stem_forward.13} parent=0 // loop_pre_header
    _
  $region3: #{stem_forward.13} parent=0 // loop_header
    %s10 = sphi 0, %s14
    %p11 = scmp.ge.s32.totalorder %s10, 4
    %s20 = sphi 0, %s22
    %s23 = sphi 0, %s20
    %s24 = sphi 0, %s23
    %s40 = sphi 0, %s24
    %s46 = sphi 0, %s48
    %s49 = sphi 0, %s46
    %s50 = sphi 0, %s49
    %s66 = sphi 0, %s50
    %s70 = sphi 0, %s70
    %s72 = sphi 0, %s70
    %s73 = sphi 0, %s72
    %s87 = sphi 0, %s73
    %s91 = sphi 0, %s91
    %s93 = sphi 0, %s91
    %s94 = sphi 0, %s93
    %s108 = sphi 0, %s94
    %s114 = sphi 0, %s116
    %s117 = sphi 0, %s114
    %s118 = sphi 0, %s117
    %s134 = sphi 0, %s118
  $region4: #{stem_forward.13} parent=0 // loop_header_branch
    %13 = sbr.rel (%p11) target = $region8
  $region5: #{stem_forward.13} parent=0 // loop_body
    %s15 = ssub.s32 %s10, 1
    %s16 = ssub.s32 %s10, 2
    %s17 = sadd.s32 %s10, 1
    %s18 = ssub.s32 %s10, %s17
    %p19 = scmp.eq.s32.totalorder %s18, 0
    %s21 = sadd.s32 %s20, 1
    %s22 = scalar_select %p19, %s20, %s21
    %p25 = pneg %p19
    %p26 = scmp.eq.s32.totalorder %s10, 1
    %p27 = por %p25, %p26
    %p28 = scmp.ne.s32.totalorder %s20, %s23
    %p29 = scmp.eq.s32.totalorder %s10, 0
    %p30 = por %p28, %p29
    %p31 = scmp.ne.s32.totalorder %s20, %s23
    %p32 = scmp.eq.s32.totalorder %s15, 1
    %p33 = por %p31, %p32
    %p34 = scmp.ne.s32.totalorder %s23, %s24
    %p35 = scmp.eq.s32.totalorder %s15, 0
    %p36 = por %p34, %p35
    %p37 = scmp.ne.s32.totalorder %s23, %s24
    %p38 = scmp.eq.s32.totalorder %s16, 1
    %p39 = por %p37, %p38
    %p41 = scmp.ne.s32.totalorder %s24, %s40
    %p42 = scmp.eq.s32.totalorder %s16, 0
    %p43 = por %p41, %p42
    %s44 = ssub.s32 %s10, %s17
    %p45 = scmp.eq.s32.totalorder %s44, 0
    %s47 = sadd.s32 %s46, 1
    %s48 = scalar_select %p45, %s46, %s47
    %p51 = pneg %p45
    %p52 = scmp.eq.s32.totalorder %s10, 1
    %p53 = por %p51, %p52
    %p54 = scmp.ne.s32.totalorder %s46, %s49
    %p55 = scmp.eq.s32.totalorder %s10, 0
    %p56 = por %p54, %p55
    %p57 = scmp.ne.s32.totalorder %s46, %s49
    %p58 = scmp.eq.s32.totalorder %s15, 1
    %p59 = por %p57, %p58
    %p60 = scmp.ne.s32.totalorder %s49, %s50
    %p61 = scmp.eq.s32.totalorder %s15, 0
    %p62 = por %p60, %p61
    %p63 = scmp.ne.s32.totalorder %s49, %s50
    %p64 = scmp.eq.s32.totalorder %s16, 1
    %p65 = por %p63, %p64
    %p67 = scmp.ne.s32.totalorder %s50, %s66
    %p68 = scmp.eq.s32.totalorder %s16, 0
    %p69 = por %p67, %p68
    %s71 = sadd.s32 %s70, 1
    %p74 = scmp.eq.s32.totalorder %s10, 1
    %p75 = scmp.ne.s32.totalorder %s70, %s72
    %p76 = scmp.eq.s32.totalorder %s10, 0
    %p77 = por %p75, %p76
    %p78 = scmp.ne.s32.totalorder %s70, %s72
    %p79 = scmp.eq.s32.totalorder %s15, 1
    %p80 = por %p78, %p79
    %p81 = scmp.ne.s32.totalorder %s72, %s73
    %p82 = scmp.eq.s32.totalorder %s15, 0
    %p83 = por %p81, %p82
    %p84 = scmp.ne.s32.totalorder %s72, %s73
    %p85 = scmp.eq.s32.totalorder %s16, 1
    %p86 = por %p84, %p85
    %p88 = scmp.ne.s32.totalorder %s73, %s87
    %p89 = scmp.eq.s32.totalorder %s16, 0
    %p90 = por %p88, %p89
    %s92 = sadd.s32 %s91, 1
    %p95 = scmp.eq.s32.totalorder %s10, 1
    %p96 = scmp.ne.s32.totalorder %s91, %s93
    %p97 = scmp.eq.s32.totalorder %s10, 0
    %p98 = por %p96, %p97
    %p99 = scmp.ne.s32.totalorder %s91, %s93
    %p100 = scmp.eq.s32.totalorder %s15, 1
    %p101 = por %p99, %p100
    %p102 = scmp.ne.s32.totalorder %s93, %s94
    %p103 = scmp.eq.s32.totalorder %s15, 0
    %p104 = por %p102, %p103
    %p105 = scmp.ne.s32.totalorder %s93, %s94
    %p106 = scmp.eq.s32.totalorder %s16, 1
    %p107 = por %p105, %p106
    %p109 = scmp.ne.s32.totalorder %s94, %s108
    %p110 = scmp.eq.s32.totalorder %s16, 0
    %p111 = por %p109, %p110
    %s112 = ssub.s32 %s10, %s17
    %p113 = scmp.eq.s32.totalorder %s112, 0
    %s115 = sadd.s32 %s114, 1
    %s116 = scalar_select %p113, %s114, %s115
    %p119 = pneg %p113
    %p120 = scmp.eq.s32.totalorder %s10, 1
    %p121 = por %p119, %p120
    %p122 = scmp.ne.s32.totalorder %s114, %s117
    %p123 = scmp.eq.s32.totalorder %s10, 0
    %p124 = por %p122, %p123
    %p125 = scmp.ne.s32.totalorder %s114, %s117
    %p126 = scmp.eq.s32.totalorder %s15, 1
    %p127 = por %p125, %p126
    %p128 = scmp.ne.s32.totalorder %s117, %s118
    %p129 = scmp.eq.s32.totalorder %s15, 0
    %p130 = por %p128, %p129
    %p131 = scmp.ne.s32.totalorder %s117, %s118
    %p132 = scmp.eq.s32.totalorder %s16, 1
    %p133 = por %p131, %p132
    %p135 = scmp.ne.s32.totalorder %s118, %s134
    %p136 = scmp.eq.s32.totalorder %s16, 0
    %p137 = por %p135, %p136
    %p138 = scmp.le.s32.totalorder 1, %s10
    %p139 = scmp.lt.s32.totalorder %s10, 3
    %p140 = pnand %p138, %p139
    %p141 = pneg %p140
    // Predicated region
    $region9: #{stem_forward.13} parent=5 // pred_check
      _
    $region10: #{stem_forward.13} parent=5 // pred_check_branch
      %143 = sbr.rel (%p140) target = $region12
    $region11: #{stem_forward.13} parent=5 // pred_region
      %s144 = ssub.s32 %s10, 1
      // Predicated region
      $region13: #{stem_forward.13} parent=11 // pred_check
        %p145 = pneg %p83
      $region14: #{stem_forward.13} parent=11 // pred_check_branch
        %147 = sbr.rel (%p145) target = $region16
      $region15: #{stem_forward.13} parent=11 // pred_region
        _
      $region16: #{stem_forward.13} parent=11 // pred_fallthru
        _
      // Predicated region
      $region17: #{stem_forward.13} parent=11 // pred_check
        %p148 = pneg %p104
      $region18: #{stem_forward.13} parent=11 // pred_check_branch
        %150 = sbr.rel (%p148) target = $region20
      $region19: #{stem_forward.13} parent=11 // pred_region
        _
      $region20: #{stem_forward.13} parent=11 // pred_fallthru
        _
    $region12: #{stem_forward.13} parent=5 // pred_fallthru
      _
    %p151 = scmp.lt.s32.totalorder %s10, 2
    // Predicated region
    $region21: #{stem_forward.13} parent=5 // pred_check
      %p152 = pneg %p151
    $region22: #{stem_forward.13} parent=5 // pred_check_branch
      %154 = sbr.rel (%p152) target = $region24
    $region23: #{stem_forward.13} parent=5 // pred_region
      // Predicated region
      $region25: #{stem_forward.13} parent=23 // pred_check
        %p155 = pneg %p30
      $region26: #{stem_forward.13} parent=23 // pred_check_branch
        %157 = sbr.rel (%p155) target = $region28
      $region27: #{stem_forward.13} parent=23 // pred_region
        %s158 = smul.u32 2, %s10
        %p159 = scmp.lt.s32.totalorder %s158, 3
        %s160 = scalar_select %p159, %s158, 3
        %s161 = smul.addr %s160, 8
        %s162 = scalar_lea.vmem %s0, %s161
        %s163 = smul.u32 2, %s10
      $region28: #{stem_forward.13} parent=23 // pred_fallthru
        _
      // Predicated region
      $region29: #{stem_forward.13} parent=23 // pred_check
        %p164 = pneg %p56
      $region30: #{stem_forward.13} parent=23 // pred_check_branch
        %166 = sbr.rel (%p164) target = $region32
      $region31: #{stem_forward.13} parent=23 // pred_region
        %s167 = smul.u32 2, %s10
        %p168 = scmp.lt.s32.totalorder %s167, 3
        %s169 = scalar_select %p168, %s167, 3
        %s170 = smul.addr %s169, 8
        %s171 = scalar_lea.vmem %s1, %s170
        %s172 = smul.u32 2, %s10
      $region32: #{stem_forward.13} parent=23 // pred_fallthru
        _
    $region24: #{stem_forward.13} parent=5 // pred_fallthru
      _
    %p173 = scmp.le.s32.totalorder 1, %s10
    %p174 = scmp.lt.s32.totalorder %s10, 3
    %p175 = pnand %p173, %p174
    %p176 = pneg %p175
    // Predicated region
    $region33: #{stem_forward.13} parent=5 // pred_check
      _
    $region34: #{stem_forward.13} parent=5 // pred_check_branch
      %178 = sbr.rel (%p175) target = $region36
    $region35: #{stem_forward.13} parent=5 // pred_region
      %s179 = ssub.s32 %s10, 1
      %s180 = smul.u32 2, %s15
      %p181 = scmp.lt.s32.totalorder %s180, 3
      %s182 = scalar_select %p181, %s180, 3
      %s183 = smul.addr %s182, 8
      %s184 = scalar_lea.vmem %s0, %s183
      %p185 = pneg %p36
      %p186 = pneg %p33
      %s187 = smul.u32 2, %s15
      %p188 = scmp.lt.s32.totalorder %s187, 3
      %s189 = scalar_select %p188, %s187, 3
      %s190 = smul.addr %s189, 8
      %s191 = scalar_lea.vmem %s1, %s190
      %p192 = pneg %p62
      %p193 = pneg %p59
      %p194 = pneg %p83
      %p195 = pneg %p80
      %p196 = pneg %p104
      %p197 = pneg %p101
      %p198 = pneg %p130
      %p199 = pneg %p127
      %s200 = smul.u32 2, %s15
      %p201 = scmp.lt.s32.totalorder %s200, 3
      %s202 = scalar_select %p201, %s200, 3
      %s203 = smul.addr %s202, 8
      %s204 = scalar_lea.vmem %s4, %s203
      %s205 = smul.u32 2, %s15
      %p206 = scmp.lt.s32.totalorder %s205, 3
      %s207 = scalar_select %p206, %s205, 3
      %s208 = smul.addr %s207, 8
      %s209 = scalar_lea.vmem %s0, %s208
      %s210 = smul.u32 2, %s15
      %s211 = smul.u32 2, %s15
      %p212 = scmp.lt.s32.totalorder %s211, 3
      %s213 = scalar_select %p212, %s211, 3
      %s214 = smul.addr %s213, 8
      %s215 = scalar_lea.vmem %s1, %s214
      %s216 = smul.u32 2, %s15
      %s217 = smul.u32 2, %s15
      %p218 = scmp.lt.s32.totalorder %s217, 3
      %s219 = scalar_select %p218, %s217, 3
      %s220 = smul.addr %s219, 8
      %s221 = scalar_lea.vmem %s4, %s220
      %s222 = smul.u32 2, %s15
      %v223 = vld [vmem:[%s209] sm:$0xff]
      %v224 = vld [vmem:[%s209 + $0x8] sm:$0xff]
      %v225 = vld [vmem:[%s215] sm:$0xff]
      %v226 = vld [vmem:[%s215 + $0x8] sm:$0xff]
      %229 = vrot.lane.b32.xlu0 %v225, 16
      %v230 = vpop.permute.xlu0 %229
      %231 = vrot.lane.b32.xlu0 %v226, 16
      %v232 = vpop.permute.xlu0 %231
      %vm235 = vcmask 130048
      %v236 = vsel %vm235, %v223, %v230
      %v237 = vsel %vm235, %v224, %v232
      %v238 = vld [vmem:[%s2] sm:$0x1]
      %v240 = vlaneseq
      %v241 = vshrl.u32 %v240, 7
      %v242 = vsub.s32 0, %v241
      %v243 = vrot.slane %v238, %v242
      %v245 = vmul.f32 %v236, %v243
      %v246 = vmul.f32 %v237, %v243
      %v247 = vld [vmem:[%s3] sm:$0x1]
      %v249 = vlaneseq
      %v250 = vshrl.u32 %v249, 7
      %v251 = vsub.s32 0, %v250
      %v252 = vrot.slane %v247, %v251
      %v254 = vadd.f32 %v245, %v252
      %v255 = vadd.f32 %v246, %v252
      %v256 = vmul.f32 %v254, 0.01
      %v257 = vmul.f32 %v255, 0.01
      %v258 = vmax.f32 %v254, %v256
      %v259 = vmax.f32 %v255, %v257
      %vm260 = vcmask 261120
      %261 = vst.msk [vmem:[%s221] sm:$0xff] %vm260, %v258
      %262 = vst.msk [vmem:[%s221 + $0x8] sm:$0xff] %vm260, %v259
      %s263 = smul.u32 2, %s15
      %p264 = scmp.lt.s32.totalorder %s263, 3
      %s265 = scalar_select %p264, %s263, 3
      %s266 = smul.addr %s265, 8
      %s267 = scalar_lea.vmem %s4, %s266
      // Predicated region
      $region37: #{stem_forward.13} parent=35 // pred_check
        %p268 = pneg %p127
      $region38: #{stem_forward.13} parent=35 // pred_check_branch
        %270 = sbr.rel (%p268) target = $region40
      $region39: #{stem_forward.13} parent=35 // pred_region
        %s271 = smul.u32 2, %s15
      $region40: #{stem_forward.13} parent=35 // pred_fallthru
        _
    $region36: #{stem_forward.13} parent=5 // pred_fallthru
      _
    %p272 = scmp.le.s32.totalorder 2, %s10
    // Predicated region
    $region41: #{stem_forward.13} parent=5 // pred_check
      %p273 = pneg %p272
    $region42: #{stem_forward.13} parent=5 // pred_check_branch
      %275 = sbr.rel (%p273) target = $region44
    $region43: #{stem_forward.13} parent=5 // pred_region
      %s276 = ssub.s32 %s10, 2
      // Predicated region
      $region45: #{stem_forward.13} parent=43 // pred_check
        %p277 = pneg %p133
      $region46: #{stem_forward.13} parent=43 // pred_check_branch
        %279 = sbr.rel (%p277) target = $region48
      $region47: #{stem_forward.13} parent=43 // pred_region
        %s280 = smul.u32 2, %s16
        %p281 = scmp.lt.s32.totalorder %s280, 3
        %s282 = scalar_select %p281, %s280, 3
        %s283 = smul.addr %s282, 8
        %s284 = scalar_lea.vmem %s4, %s283
      $region48: #{stem_forward.13} parent=43 // pred_fallthru
        _
    $region44: #{stem_forward.13} parent=5 // pred_fallthru
      _
  $region6: #{stem_forward.13} parent=0 // loop_footer
    %s14 = sadd.s32 1, %s10
  $region7: #{stem_forward.13} parent=0 // loop_footer_branch
    %9 = sbr.rel target = $region3
  $region8: #{stem_forward.13} parent=0 // loop_exit
    _

// kernel: stem_forward.9
$region0: #{stem_forward.9}
  #allocation0 [shape = 'u32[]', space=smem, size = 0x4, offset = 0x4, fixed_abs, tag = 'smem constant byte address 0x4 - core index']
  #allocation1 [shape = 'u32[144,128]{1,0:T(1,128)}', space=vmem, size = 0x12000, scoped, tag = 'internal scratch']
  %s0 = inlined_call_operand.vmem [shape: bf16[9,32,32], index: 0, kind: input, shape index: {}]
  %s1 = inlined_call_operand.vmem [shape: f32[9,32], index: 1, kind: input, shape index: {}]
  %s2 = inlined_call_operand.vmem [shape: bf16[32,32], index: 2, kind: output, shape index: {0}]
  %s3 = inlined_call_operand.vmem [shape: f32[16,32], index: 3, kind: output, shape index: {1}]
  %4 = xla_tuple %s2, %s3
  %s5 = sld [smem:[#allocation0]]
  $region90: #{stem_forward.9} parent=0
    _
  %s7 = ssub.s32 1, %s5
  %s8 = scalar_select 0, %s7, %s5
  $region1: #{stem_forward.9} parent=0
    #allocation2 [shape = 'u8[73728]{0}', space=vmem, size = 0x12000, scoped, tag = 'input window, operand 0']
    loop: start=0, step=1, limit=4
    $region2: #{stem_forward.9} parent=1 // loop_pre_header
      _
    $region3: #{stem_forward.9} parent=1 // loop_header
      %s10 = sphi 0, %s14
      %p11 = scmp.ge.s32.totalorder %s10, 4
      %s20 = sphi 0, %s22
      %s23 = sphi 0, %s20
      %s24 = sphi 0, %s23
      %s40 = sphi 0, %s24
      %s44 = sphi 0, %s44
      %s46 = sphi 0, %s44
      %s47 = sphi 0, %s46
      %s61 = sphi 0, %s47
      %s67 = sphi 0, %s69
      %s70 = sphi 0, %s67
      %s71 = sphi 0, %s70
      %s87 = sphi 0, %s71
      %s93 = sphi 0, %s95
      %s96 = sphi 0, %s93
      %s97 = sphi 0, %s96
      %s113 = sphi 0, %s97
    $region4: #{stem_forward.9} parent=1 // loop_header_branch
      %13 = sbr.rel (%p11) target = $region8
    $region5: #{stem_forward.9} parent=1 // loop_body
      %s15 = ssub.s32 %s10, 1
      %s16 = ssub.s32 %s10, 2
      %s17 = sadd.s32 %s10, 1
      %s18 = ssub.s32 %s10, %s17
      %p19 = scmp.eq.s32.totalorder %s18, 0
      %s21 = sadd.s32 %s20, 1
      %s22 = scalar_select %p19, %s20, %s21
      %p25 = pneg %p19
      %p26 = scmp.eq.s32.totalorder %s10, 1
      %p27 = por %p25, %p26
      %p28 = scmp.ne.s32.totalorder %s20, %s23
      %p29 = scmp.eq.s32.totalorder %s10, 0
      %p30 = por %p28, %p29
      %p31 = scmp.ne.s32.totalorder %s20, %s23
      %p32 = scmp.eq.s32.totalorder %s15, 1
      %p33 = por %p31, %p32
      %p34 = scmp.ne.s32.totalorder %s23, %s24
      %p35 = scmp.eq.s32.totalorder %s15, 0
      %p36 = por %p34, %p35
      %p37 = scmp.ne.s32.totalorder %s23, %s24
      %p38 = scmp.eq.s32.totalorder %s16, 1
      %p39 = por %p37, %p38
      %p41 = scmp.ne.s32.totalorder %s24, %s40
      %p42 = scmp.eq.s32.totalorder %s16, 0
      %p43 = por %p41, %p42
      %s45 = sadd.s32 %s44, 1
      %p48 = scmp.eq.s32.totalorder %s10, 1
      %p49 = scmp.ne.s32.totalorder %s44, %s46
      %p50 = scmp.eq.s32.totalorder %s10, 0
      %p51 = por %p49, %p50
      %p52 = scmp.ne.s32.totalorder %s44, %s46
      %p53 = scmp.eq.s32.totalorder %s15, 1
      %p54 = por %p52, %p53
      %p55 = scmp.ne.s32.totalorder %s46, %s47
      %p56 = scmp.eq.s32.totalorder %s15, 0
      %p57 = por %p55, %p56
      %p58 = scmp.ne.s32.totalorder %s46, %s47
      %p59 = scmp.eq.s32.totalorder %s16, 1
      %p60 = por %p58, %p59
      %p62 = scmp.ne.s32.totalorder %s47, %s61
      %p63 = scmp.eq.s32.totalorder %s16, 0
      %p64 = por %p62, %p63
      %s65 = ssub.s32 %s10, %s17
      %p66 = scmp.eq.s32.totalorder %s65, 0
      %s68 = sadd.s32 %s67, 1
      %s69 = scalar_select %p66, %s67, %s68
      %p72 = pneg %p66
      %p73 = scmp.eq.s32.totalorder %s10, 1
      %p74 = por %p72, %p73
      %p75 = scmp.ne.s32.totalorder %s67, %s70
      %p76 = scmp.eq.s32.totalorder %s10, 0
      %p77 = por %p75, %p76
      %p78 = scmp.ne.s32.totalorder %s67, %s70
      %p79 = scmp.eq.s32.totalorder %s15, 1
      %p80 = por %p78, %p79
      %p81 = scmp.ne.s32.totalorder %s70, %s71
      %p82 = scmp.eq.s32.totalorder %s15, 0
      %p83 = por %p81, %p82
      %p84 = scmp.ne.s32.totalorder %s70, %s71
      %p85 = scmp.eq.s32.totalorder %s16, 1
      %p86 = por %p84, %p85
      %p88 = scmp.ne.s32.totalorder %s71, %s87
      %p89 = scmp.eq.s32.totalorder %s16, 0
      %p90 = por %p88, %p89
      %s91 = ssub.s32 %s10, %s17
      %p92 = scmp.eq.s32.totalorder %s91, 0
      %s94 = sadd.s32 %s93, 1
      %s95 = scalar_select %p92, %s93, %s94
      %p98 = pneg %p92
      %p99 = scmp.eq.s32.totalorder %s10, 1
      %p100 = por %p98, %p99
      %p101 = scmp.ne.s32.totalorder %s93, %s96
      %p102 = scmp.eq.s32.totalorder %s10, 0
      %p103 = por %p101, %p102
      %p104 = scmp.ne.s32.totalorder %s93, %s96
      %p105 = scmp.eq.s32.totalorder %s15, 1
      %p106 = por %p104, %p105
      %p107 = scmp.ne.s32.totalorder %s96, %s97
      %p108 = scmp.eq.s32.totalorder %s15, 0
      %p109 = por %p107, %p108
      %p110 = scmp.ne.s32.totalorder %s96, %s97
      %p111 = scmp.eq.s32.totalorder %s16, 1
      %p112 = por %p110, %p111
      %p114 = scmp.ne.s32.totalorder %s97, %s113
      %p115 = scmp.eq.s32.totalorder %s16, 0
      %p116 = por %p114, %p115
      %p117 = scmp.le.s32.totalorder 1, %s10
      %p118 = scmp.lt.s32.totalorder %s10, 3
      %p119 = pnand %p117, %p118
      %p120 = pneg %p119
      // Predicated region
      $region9: #{stem_forward.9} parent=5 // pred_check
        _
      $region10: #{stem_forward.9} parent=5 // pred_check_branch
        %122 = sbr.rel (%p119) target = $region12
      $region11: #{stem_forward.9} parent=5 // pred_region
        %s123 = ssub.s32 %s10, 1
        // Predicated region
        $region13: #{stem_forward.9} parent=11 // pred_check
          %p124 = pneg %p57
        $region14: #{stem_forward.9} parent=11 // pred_check_branch
          %126 = sbr.rel (%p124) target = $region16
        $region15: #{stem_forward.9} parent=11 // pred_region
          _
        $region16: #{stem_forward.9} parent=11 // pred_fallthru
          _
      $region12: #{stem_forward.9} parent=5 // pred_fallthru
        _
      %p127 = scmp.lt.s32.totalorder %s10, 2
      // Predicated region
      $region17: #{stem_forward.9} parent=5 // pred_check
        %p128 = pneg %p127
      $region18: #{stem_forward.9} parent=5 // pred_check_branch
        %130 = sbr.rel (%p128) target = $region20
      $region19: #{stem_forward.9} parent=5 // pred_region
        // Predicated region
        $region21: #{stem_forward.9} parent=19 // pred_check
          %p131 = pneg %p30
        $region22: #{stem_forward.9} parent=19 // pred_check_branch
          %133 = sbr.rel (%p131) target = $region24
        $region23: #{stem_forward.9} parent=19 // pred_region
          %s134 = sand.u32 %s20, 1
          %s135 = sand.u32 %s20, 1
          %s136 = smul.addr %s135, 72
          %s137 = scalar_lea.vmem [#allocation2], %s136
          %s138 = smul.u32 2, %s10
          %s139 = smul.addr %s138, 4
          %s140 = scalar_lea.vmem %s0, %s139
          // Predicated region
          $region25: #{stem_forward.9} parent=23 // pred_check
            _
          $region26: #{stem_forward.9} parent=23 // pred_check_branch
            %142 = sbr.rel (0) target = $region28
          $region27: #{stem_forward.9} parent=23 // pred_region
            // Predicated region
            $region29: #{stem_forward.9} parent=27 // pred_check
              _
            $region30: #{stem_forward.9} parent=27 // pred_check_branch
              %144 = sbr.rel target = $region32
            $region31: #{stem_forward.9} parent=27 // pred_region
              // Predicated region
              $region44: #{stem_forward.9} parent=31 // pred_check
                _
              $region45: #{stem_forward.9} parent=31 // pred_check_branch
                %194 = sbr.rel (0) target = $region47
              $region46: #{stem_forward.9} parent=31 // pred_region
                loop: start=0, step=1, limit=1
                $region48: #{stem_forward.9} parent=46 // loop_pre_header
                  _
                $region49: #{stem_forward.9} parent=46 // loop_header
                  %s196 = sphi 0, %s200
                  %p197 = scmp.ge.s32.totalorder %s196, 1
                  %s201 = sphi %s140, %s140
                  %s202 = sphi %s137, %s137
                $region50: #{stem_forward.9} parent=46 // loop_header_branch
                  %199 = sbr.rel (%p197) target = $region54
                $region51: #{stem_forward.9} parent=46 // loop_body
                  _
                $region52: #{stem_forward.9} parent=46 // loop_footer
                  %s200 = sadd.s32 1, %s196
                $region53: #{stem_forward.9} parent=46 // loop_footer_branch
                  %195 = sbr.rel target = $region49
                $region54: #{stem_forward.9} parent=46 // loop_exit
                  _
                %s204 = ssub.s32 16, 1
                loop: start=0, step=1, limit=1
                $region55: #{stem_forward.9} parent=46 // loop_pre_header
                  _
                $region56: #{stem_forward.9} parent=46 // loop_header
                  %s206 = sphi 0, %s210
                  %p207 = scmp.ge.s32.totalorder %s206, 1
                  %s211 = sphi %s140, %s140
                  %s212 = sphi %s137, %s137
                $region57: #{stem_forward.9} parent=46 // loop_header_branch
                  %209 = sbr.rel (%p207) target = $region61
                $region58: #{stem_forward.9} parent=46 // loop_body
                  %v213 = vld [vmem:[%s211] sm:%s204]
                  %214 = vst [vmem:[%s212] sm:%s204] %v213
                  %v215 = vld [vmem:[%s211 + $0x4] sm:%s204]
                  %216 = vst [vmem:[%s212 + $0x4] sm:%s204] %v215
                  %v217 = vld [vmem:[%s211 + $0x10] sm:%s204]
                  %218 = vst [vmem:[%s212 + $0x8] sm:%s204] %v217
                  %v219 = vld [vmem:[%s211 + $0x14] sm:%s204]
                  %220 = vst [vmem:[%s212 + $0xc] sm:%s204] %v219
                  %v221 = vld [vmem:[%s211 + $0x20] sm:%s204]
                  %222 = vst [vmem:[%s212 + $0x10] sm:%s204] %v221
                  %v223 = vld [vmem:[%s211 + $0x24] sm:%s204]
                  %224 = vst [vmem:[%s212 + $0x14] sm:%s204] %v223
                  %v225 = vld [vmem:[%s211 + $0x30] sm:%s204]
                  %226 = vst [vmem:[%s212 + $0x18] sm:%s204] %v225
                  %v227 = vld [vmem:[%s211 + $0x34] sm:%s204]
                  %228 = vst [vmem:[%s212 + $0x1c] sm:%s204] %v227
                  %v229 = vld [vmem:[%s211 + $0x40] sm:%s204]
                  %230 = vst [vmem:[%s212 + $0x20] sm:%s204] %v229
                  %v231 = vld [vmem:[%s211 + $0x44] sm:%s204]
                  %232 = vst [vmem:[%s212 + $0x24] sm:%s204] %v231
                  %v233 = vld [vmem:[%s211 + $0x50] sm:%s204]
                  %234 = vst [vmem:[%s212 + $0x28] sm:%s204] %v233
                  %v235 = vld [vmem:[%s211 + $0x54] sm:%s204]
                  %236 = vst [vmem:[%s212 + $0x2c] sm:%s204] %v235
                  %v237 = vld [vmem:[%s211 + $0x60] sm:%s204]
                  %238 = vst [vmem:[%s212 + $0x30] sm:%s204] %v237
                  %v239 = vld [vmem:[%s211 + $0x64] sm:%s204]
                  %240 = vst [vmem:[%s212 + $0x34] sm:%s204] %v239
                  %v241 = vld [vmem:[%s211 + $0x70] sm:%s204]
                  %242 = vst [vmem:[%s212 + $0x38] sm:%s204] %v241
                  %v243 = vld [vmem:[%s211 + $0x74] sm:%s204]
                  %244 = vst [vmem:[%s212 + $0x3c] sm:%s204] %v243
                  %v245 = vld [vmem:[%s211 + $0x80] sm:%s204]
                  %246 = vst [vmem:[%s212 + $0x40] sm:%s204] %v245
                  %v247 = vld [vmem:[%s211 + $0x84] sm:%s204]
                  %248 = vst [vmem:[%s212 + $0x44] sm:%s204] %v247
                $region59: #{stem_forward.9} parent=46 // loop_footer
                  %s210 = sadd.s32 1, %s206
                $region60: #{stem_forward.9} parent=46 // loop_footer_branch
                  %205 = sbr.rel target = $region56
                $region61: #{stem_forward.9} parent=46 // loop_exit
                  _
              $region47: #{stem_forward.9} parent=31 // pred_fallthru
                _
            $region32: #{stem_forward.9} parent=27 // pred_fallthru
              _
            // Predicated region
            $region33: #{stem_forward.9} parent=27 // pred_check
              _
            $region34: #{stem_forward.9} parent=27 // pred_check_branch
              %146 = sbr.rel (0) target = $region36
            $region35: #{stem_forward.9} parent=27 // pred_region
              %s148 = ssub.s32 16, 1
              loop: start=0, step=1, limit=1
              $region37: #{stem_forward.9} parent=35 // loop_pre_header
                _
              $region38: #{stem_forward.9} parent=35 // loop_header
                %s150 = sphi 0, %s154
                %p151 = scmp.ge.s32.totalorder %s150, 1
                %s155 = sphi %s140, %s140
                %s156 = sphi %s137, %s137
              $region39: #{stem_forward.9} parent=35 // loop_header_branch
                %153 = sbr.rel (%p151) target = $region43
              $region40: #{stem_forward.9} parent=35 // loop_body
                %v157 = vld [vmem:[%s155] sm:%s148]
                %158 = vst [vmem:[%s156] sm:%s148] %v157
                %v159 = vld [vmem:[%s155 + $0x4] sm:%s148]
                %160 = vst [vmem:[%s156 + $0x4] sm:%s148] %v159
                %v161 = vld [vmem:[%s155 + $0x10] sm:%s148]
                %162 = vst [vmem:[%s156 + $0x8] sm:%s148] %v161
                %v163 = vld [vmem:[%s155 + $0x14] sm:%s148]
                %164 = vst [vmem:[%s156 + $0xc] sm:%s148] %v163
                %v165 = vld [vmem:[%s155 + $0x20] sm:%s148]
                %166 = vst [vmem:[%s156 + $0x10] sm:%s148] %v165
                %v167 = vld [vmem:[%s155 + $0x24] sm:%s148]
                %168 = vst [vmem:[%s156 + $0x14] sm:%s148] %v167
                %v169 = vld [vmem:[%s155 + $0x30] sm:%s148]
                %170 = vst [vmem:[%s156 + $0x18] sm:%s148] %v169
                %v171 = vld [vmem:[%s155 + $0x34] sm:%s148]
                %172 = vst [vmem:[%s156 + $0x1c] sm:%s148] %v171
                %v173 = vld [vmem:[%s155 + $0x40] sm:%s148]
                %174 = vst [vmem:[%s156 + $0x20] sm:%s148] %v173
                %v175 = vld [vmem:[%s155 + $0x44] sm:%s148]
                %176 = vst [vmem:[%s156 + $0x24] sm:%s148] %v175
                %v177 = vld [vmem:[%s155 + $0x50] sm:%s148]
                %178 = vst [vmem:[%s156 + $0x28] sm:%s148] %v177
                %v179 = vld [vmem:[%s155 + $0x54] sm:%s148]
                %180 = vst [vmem:[%s156 + $0x2c] sm:%s148] %v179
                %v181 = vld [vmem:[%s155 + $0x60] sm:%s148]
                %182 = vst [vmem:[%s156 + $0x30] sm:%s148] %v181
                %v183 = vld [vmem:[%s155 + $0x64] sm:%s148]
                %184 = vst [vmem:[%s156 + $0x34] sm:%s148] %v183
                %v185 = vld [vmem:[%s155 + $0x70] sm:%s148]
                %186 = vst [vmem:[%s156 + $0x38] sm:%s148] %v185
                %v187 = vld [vmem:[%s155 + $0x74] sm:%s148]
                %188 = vst [vmem:[%s156 + $0x3c] sm:%s148] %v187
                %v189 = vld [vmem:[%s155 + $0x80] sm:%s148]
                %190 = vst [vmem:[%s156 + $0x40] sm:%s148] %v189
                %v191 = vld [vmem:[%s155 + $0x84] sm:%s148]
                %192 = vst [vmem:[%s156 + $0x44] sm:%s148] %v191
              $region41: #{stem_forward.9} parent=35 // loop_footer
                %s154 = sadd.s32 1, %s150
              $region42: #{stem_forward.9} parent=35 // loop_footer_branch
                %149 = sbr.rel target = $region38
              $region43: #{stem_forward.9} parent=35 // loop_exit
                _
            $region36: #{stem_forward.9} parent=27 // pred_fallthru
              _
          $region28: #{stem_forward.9} parent=23 // pred_fallthru
            _
          %249 = vnop
        $region24: #{stem_forward.9} parent=19 // pred_fallthru
          _
      $region20: #{stem_forward.9} parent=5 // pred_fallthru
        _
      %p250 = scmp.le.s32.totalorder 1, %s10
      %p251 = scmp.lt.s32.totalorder %s10, 3
      %p252 = pnand %p250, %p251
      %p253 = pneg %p252
      // Predicated region
      $region62: #{stem_forward.9} parent=5 // pred_check
        _
      $region63: #{stem_forward.9} parent=5 // pred_check_branch
        %255 = sbr.rel (%p252) target = $region65
      $region64: #{stem_forward.9} parent=5 // pred_region
        %s256 = ssub.s32 %s10, 1
        %s257 = sand.u32 %s23, 1
        %s258 = sand.u32 %s23, 1
        %s259 = smul.addr %s258, 72
        %s260 = scalar_lea.vmem [#allocation2], %s259
        // Predicated region
        $region66: #{stem_forward.9} parent=64 // pred_check
          %p261 = pneg %p36
        $region67: #{stem_forward.9} parent=64 // pred_check_branch
          %263 = sbr.rel (%p261) target = $region69
        $region68: #{stem_forward.9} parent=64 // pred_region
          _
        $region69: #{stem_forward.9} parent=64 // pred_fallthru
          _
        %s264 = sand.u32 %s23, 1
        %s265 = sand.u32 %s23, 1
        %s266 = smul.addr %s265, 72
        %s267 = scalar_lea.vmem [#allocation2], %s266
        %p268 = pneg %p36
        %p269 = pneg %p33
        %p270 = pneg %p57
        %p271 = pneg %p54
        %p272 = pneg %p83
        %p273 = pneg %p80
        %s274 = smul.u32 2, %s15
        %p275 = scmp.lt.s32.totalorder %s274, 3
        %s276 = scalar_select %p275, %s274, 3
        %s277 = smul.addr %s276, 4
        %s278 = scalar_lea.vmem %s2, %s277
        %p279 = pneg %p109
        %p280 = pneg %p106
        %p281 = scmp.lt.s32.totalorder %s15, 1
        %s282 = scalar_select %p281, %s15, 1
        %s283 = smul.addr %s282, 8
        %s284 = scalar_lea.vmem %s3, %s283
        %s285 = smul.u32 2, %s15
        %s286 = smul.u32 2, %s15
        %p287 = scmp.lt.s32.totalorder %s286, 3
        %s288 = scalar_select %p287, %s286, 3
        %s289 = smul.addr %s288, 4
        %s290 = scalar_lea.vmem %s2, %s289
        %s291 = smul.u32 2, %s15
        %p292 = scmp.lt.s32.totalorder %s15, 1
        %s293 = scalar_select %p292, %s15, 1
        %s294 = smul.addr %s293, 8
        %s295 = scalar_lea.vmem %s3, %s294
        %v296 = vld [vmem:[%s260] sm:$0xf]
        %v297 = vld [vmem:[%s260 + $0x4] sm:$0xf]
        %v298 = vunpack.c.l.bf16 %v296
        %v299 = vunpack.c.l.bf16 %v297
        %v300 = vld [vmem:[%s1] sm:$0x1]
        %v301 = vlaneseq
        %v302 = vshrl.u32 %v301, 7
        %v303 = vsub.s32 0, %v302
        %v304 = vrot.slane %v300, %v303
        %v305 = vmul.f32 %v298, %v304
        %v306 = vmul.f32 %v299, %v304
        %s307 = scalar_lea.vmem %s260, 8 [#allocation2]
        %v308 = vld [vmem:[%s307] sm:$0xf]
        %v309 = vld [vmem:[%s307 + $0x4] sm:$0xf]
        %v310 = vunpack.c.l.bf16 %v308
        %v311 = vunpack.c.l.bf16 %v309
        %v312 = vld [vmem:[%s1 + $0x1] sm:$0x1]
        %v313 = vlaneseq
        %v314 = vshrl.u32 %v313, 7
        %v315 = vsub.s32 0, %v314
        %v316 = vrot.slane %v312, %v315
        %v317 = vmul.f32 %v310, %v316
        %v318 = vmul.f32 %v311, %v316
        %v319 = vadd.f32 %v305, %v317
        %v320 = vadd.f32 %v306, %v318
        %s321 = scalar_lea.vmem %s260, 16 [#allocation2]
        %v322 = vld [vmem:[%s321] sm:$0xf]
        %v323 = vld [vmem:[%s321 + $0x4] sm:$0xf]
        %v324 = vunpack.c.l.bf16 %v322
        %v325 = vunpack.c.l.bf16 %v323
        %v326 = vld [vmem:[%s1 + $0x2] sm:$0x1]
        %v327 = vlaneseq
        %v328 = vshrl.u32 %v327, 7
        %v329 = vsub.s32 0, %v328
        %v330 = vrot.slane %v326, %v329
        %v331 = vmul.f32 %v324, %v330
        %v332 = vmul.f32 %v325, %v330
        %v333 = vadd.f32 %v319, %v331
        %v334 = vadd.f32 %v320, %v332
        %s335 = scalar_lea.vmem %s260, 24 [#allocation2]
        %v336 = vld [vmem:[%s335] sm:$0xf]
        %v337 = vld [vmem:[%s335 + $0x4] sm:$0xf]
        %v338 = vunpack.c.l.bf16 %v336
        %v339 = vunpack.c.l.bf16 %v337
        %v340 = vld [vmem:[%s1 + $0x3] sm:$0x1]
        %v341 = vlaneseq
        %v342 = vshrl.u32 %v341, 7
        %v343 = vsub.s32 0, %v342
        %v344 = vrot.slane %v340, %v343
        %v345 = vmul.f32 %v338, %v344
        %v346 = vmul.f32 %v339, %v344
        %v347 = vadd.f32 %v333, %v345
        %v348 = vadd.f32 %v334, %v346
        %s349 = scalar_lea.vmem %s260, 32 [#allocation2]
        %v350 = vld [vmem:[%s349] sm:$0xf]
        %v351 = vld [vmem:[%s349 + $0x4] sm:$0xf]
        %v352 = vunpack.c.l.bf16 %v350
        %v353 = vunpack.c.l.bf16 %v351
        %v354 = vld [vmem:[%s1 + $0x4] sm:$0x1]
        %v355 = vlaneseq
        %v356 = vshrl.u32 %v355, 7
        %v357 = vsub.s32 0, %v356
        %v358 = vrot.slane %v354, %v357
        %v359 = vmul.f32 %v352, %v358
        %v360 = vmul.f32 %v353, %v358
        %v361 = vadd.f32 %v347, %v359
        %v362 = vadd.f32 %v348, %v360
        %s363 = scalar_lea.vmem %s260, 40 [#allocation2]
        %v364 = vld [vmem:[%s363] sm:$0xf]
        %v365 = vld [vmem:[%s363 + $0x4] sm:$0xf]
        %v366 = vunpack.c.l.bf16 %v364
        %v367 = vunpack.c.l.bf16 %v365
        %v368 = vld [vmem:[%s1 + $0x5] sm:$0x1]
        %v369 = vlaneseq
        %v370 = vshrl.u32 %v369, 7
        %v371 = vsub.s32 0, %v370
        %v372 = vrot.slane %v368, %v371
        %v373 = vmul.f32 %v366, %v372
        %v374 = vmul.f32 %v367, %v372
        %v375 = vadd.f32 %v361, %v373
        %v376 = vadd.f32 %v362, %v374
        %s377 = scalar_lea.vmem %s260, 48 [#allocation2]
        %v378 = vld [vmem:[%s377] sm:$0xf]
        %v379 = vld [vmem:[%s377 + $0x4] sm:$0xf]
        %v380 = vunpack.c.l.bf16 %v378
        %v381 = vunpack.c.l.bf16 %v379
        %v382 = vld [vmem:[%s1 + $0x6] sm:$0x1]
        %v383 = vlaneseq
        %v384 = vshrl.u32 %v383, 7
        %v385 = vsub.s32 0, %v384
        %v386 = vrot.slane %v382, %v385
        %v387 = vmul.f32 %v380, %v386
        %v388 = vmul.f32 %v381, %v386
        %v389 = vadd.f32 %v375, %v387
        %v390 = vadd.f32 %v376, %v388
        %s391 = scalar_lea.vmem %s260, 56 [#allocation2]
        %v392 = vld [vmem:[%s391] sm:$0xf]
        %v393 = vld [vmem:[%s391 + $0x4] sm:$0xf]
        %v394 = vunpack.c.l.bf16 %v392
        %v395 = vunpack.c.l.bf16 %v393
        %v396 = vld [vmem:[%s1 + $0x7] sm:$0x1]
        %v397 = vlaneseq
        %v398 = vshrl.u32 %v397, 7
        %v399 = vsub.s32 0, %v398
        %v400 = vrot.slane %v396, %v399
        %v401 = vmul.f32 %v394, %v400
        %v402 = vmul.f32 %v395, %v400
        %v403 = vadd.f32 %v389, %v401
        %v404 = vadd.f32 %v390, %v402
        %s405 = scalar_lea.vmem %s260, 64 [#allocation2]
        %v406 = vld [vmem:[%s405] sm:$0xf]
        %v407 = vld [vmem:[%s405 + $0x4] sm:$0xf]
        %v408 = vunpack.c.l.bf16 %v406
        %v409 = vunpack.c.l.bf16 %v407
        %v410 = vld [vmem:[%s1 + $0x8] sm:$0x1]
        %v411 = vlaneseq
        %v412 = vshrl.u32 %v411, 7
        %v413 = vsub.s32 0, %v412
        %v414 = vrot.slane %v410, %v413
        %v415 = vmul.f32 %v408, %v414
        %v416 = vmul.f32 %v409, %v414
        %v417 = vadd.f32 %v403, %v415
        %v418 = vadd.f32 %v404, %v416
        %v419 = vpack.c.bf16 %v418, %v417
        %v421 = vunpack.c.l.b16 %v419
        %v422 = vunpack.c.h.b16 %v419
        %v423 = vpack.c.b16 %v421, %v421
        %v424 = vpack.c.b16 %v422, %v422
        %vm427 = vcmask 257024
        %428 = vst.msk [vmem:[%s290] sm:$0xf] %vm427, %v423
        %429 = vst.msk [vmem:[%s290 + $0x4] sm:$0xf] %vm427, %v424
        %vm430 = vcmask 261120
        %v431 = vsel %vm430, %v417, 0.0
        %v432 = vsel %vm430, %v418, 0.0
        %v433 = vadd.f32 %v431, %v432
        %v434 = vrot.slane %v433, 4
        %v435 = vadd.f32 %v433, %v434
        %v436 = vrot.slane %v435, 2
        %v437 = vadd.f32 %v435, %v436
        %v438 = vrot.slane %v437, 1
        %v439 = vadd.f32 %v437, %v438
        %v440 = vmul.f32 %v417, %v417
        %v441 = vmul.f32 %v418, %v418
        %v442 = vsel %vm430, %v440, 0.0
        %v443 = vsel %vm430, %v441, 0.0
        %v444 = vadd.f32 %v442, %v443
        %v445 = vrot.slane %v444, 4
        %v446 = vadd.f32 %v444, %v445
        %v447 = vrot.slane %v446, 2
        %v448 = vadd.f32 %v446, %v447
        %v449 = vrot.slane %v448, 1
        %v450 = vadd.f32 %v448, %v449
        %v451 = vlaneseq
        %v452 = vshrl.u32 %v451, 7
        %vm453 = vcmp.eq.s32.totalorder %v452, 0
        %vm454 = vcmp.eq.s32.totalorder %v452, 1
        %v455 = vsel %vm454, %v450, 0.0
        %v456 = vsel %vm453, %v439, %v455
        %457 = vst.msk [vmem:[%s295] sm:$0xff] %vm430, %v456
        %s458 = smul.u32 2, %s15
        %p459 = scmp.lt.s32.totalorder %s458, 3
        %s460 = scalar_select %p459, %s458, 3
        %s461 = smul.addr %s460, 4
        %s462 = scalar_lea.vmem %s2, %s461
        %p463 = scmp.lt.s32.totalorder %s15, 1
        %s464 = scalar_select %p463, %s15, 1
        %s465 = smul.addr %s464, 8
        %s466 = scalar_lea.vmem %s3, %s465
        // Predicated region
        $region70: #{stem_forward.9} parent=64 // pred_check
          %p467 = pneg %p80
        $region71: #{stem_forward.9} parent=64 // pred_check_branch
          %469 = sbr.rel (%p467) target = $region73
        $region72: #{stem_forward.9} parent=64 // pred_region
          %s470 = smul.u32 2, %s15
        $region73: #{stem_forward.9} parent=64 // pred_fallthru
          _
        // Predicated region
        $region74: #{stem_forward.9} parent=64 // pred_check
          %p471 = pneg %p106
        $region75: #{stem_forward.9} parent=64 // pred_check_branch
          %473 = sbr.rel (%p471) target = $region77
        $region76: #{stem_forward.9} parent=64 // pred_region
          _
        $region77: #{stem_forward.9} parent=64 // pred_fallthru
          _
      $region65: #{stem_forward.9} parent=5 // pred_fallthru
        _
      %p474 = scmp.le.s32.totalorder 2, %s10
      // Predicated region
      $region78: #{stem_forward.9} parent=5 // pred_check
        %p475 = pneg %p474
      $region79: #{stem_forward.9} parent=5 // pred_check_branch
        %477 = sbr.rel (%p475) target = $region81
      $region80: #{stem_forward.9} parent=5 // pred_region
        %s478 = ssub.s32 %s10, 2
        // Predicated region
        $region82: #{stem_forward.9} parent=80 // pred_check
          %p479 = pneg %p86
        $region83: #{stem_forward.9} parent=80 // pred_check_branch
          %481 = sbr.rel (%p479) target = $region85
        $region84: #{stem_forward.9} parent=80 // pred_region
          %s482 = smul.u32 2, %s16
          %p483 = scmp.lt.s32.totalorder %s482, 3
          %s484 = scalar_select %p483, %s482, 3
          %s485 = smul.addr %s484, 4
          %s486 = scalar_lea.vmem %s2, %s485
        $region85: #{stem_forward.9} parent=80 // pred_fallthru
          _
        // Predicated region
        $region86: #{stem_forward.9} parent=80 // pred_check
          %p487 = pneg %p112
        $region87: #{stem_forward.9} parent=80 // pred_check_branch
          %489 = sbr.rel (%p487) target = $region89
        $region88: #{stem_forward.9} parent=80 // pred_region
          %p490 = scmp.lt.s32.totalorder %s16, 1
          %s491 = scalar_select %p490, %s16, 1
          %s492 = smul.addr %s491, 8
          %s493 = scalar_lea.vmem %s3, %s492
        $region89: #{stem_forward.9} parent=80 // pred_fallthru
          _
      $region81: #{stem_forward.9} parent=5 // pred_fallthru
        _
    $region6: #{stem_forward.9} parent=1 // loop_footer
      %s14 = sadd.s32 1, %s10
    $region7: #{stem_forward.9} parent=1 // loop_footer_branch
      %9 = sbr.rel target = $region3
    $region8: #{stem_forward.9} parent=1 // loop_exit
      _

// kernel: stem_forward.10
$region0: #{stem_forward.10}
  #allocation0 [shape = 'u32[]', space=smem, size = 0x4, offset = 0x4, fixed_abs, tag = 'smem constant byte address 0x4 - core index']
  #allocation1 [shape = 'u32[144,128]{1,0:T(1,128)}', space=vmem, size = 0x12000, scoped, tag = 'internal scratch']
  %s0 = inlined_call_operand.vmem [shape: bf16[32,32], index: 0, kind: input, shape index: {}]
  %s1 = inlined_call_operand.vmem [shape: bf16[32,16], index: 1, kind: input, shape index: {}]
  %s2 = inlined_call_operand.vmem [shape: f32[32,16], index: 2, kind: output, shape index: {0}]
  %s3 = inlined_call_operand.vmem [shape: f32[16,16], index: 3, kind: output, shape index: {1}]
  %4 = xla_tuple %s2, %s3
  %s5 = sld [smem:[#allocation0]]
  $region49: #{stem_forward.10} parent=0
    _
  %s7 = ssub.s32 1, %s5
  %s8 = scalar_select 0, %s7, %s5
  loop: start=0, step=1, limit=4
  $region2: #{stem_forward.10} parent=0 // loop_pre_header
    _
  $region3: #{stem_forward.10} parent=0 // loop_header
    %s10 = sphi 0, %s14
    %p11 = scmp.ge.s32.totalorder %s10, 4
    %s20 = sphi 0, %s22
    %s23 = sphi 0, %s20
    %s24 = sphi 0, %s23
    %s40 = sphi 0, %s24
    %s44 = sphi 0, %s44
    %s46 = sphi 0, %s44
    %s47 = sphi 0, %s46
    %s61 = sphi 0, %s47
    %s67 = sphi 0, %s69
    %s70 = sphi 0, %s67
    %s71 = sphi 0, %s70
    %s87 = sphi 0, %s71
    %s93 = sphi 0, %s95
    %s96 = sphi 0, %s93
    %s97 = sphi 0, %s96
    %s113 = sphi 0, %s97
  $region4: #{stem_forward.10} parent=0 // loop_header_branch
    %13 = sbr.rel (%p11) target = $region8
  $region5: #{stem_forward.10} parent=0 // loop_body
    %s15 = ssub.s32 %s10, 1
    %s16 = ssub.s32 %s10, 2
    %s17 = sadd.s32 %s10, 1
    %s18 = ssub.s32 %s10, %s17
    %p19 = scmp.eq.s32.totalorder %s18, 0
    %s21 = sadd.s32 %s20, 1
    %s22 = scalar_select %p19, %s20, %s21
    %p25 = pneg %p19
    %p26 = scmp.eq.s32.totalorder %s10, 1
    %p27 = por %p25, %p26
    %p28 = scmp.ne.s32.totalorder %s20, %s23
    %p29 = scmp.eq.s32.totalorder %s10, 0
    %p30 = por %p28, %p29
    %p31 = scmp.ne.s32.totalorder %s20, %s23
    %p32 = scmp.eq.s32.totalorder %s15, 1
    %p33 = por %p31, %p32
    %p34 = scmp.ne.s32.totalorder %s23, %s24
    %p35 = scmp.eq.s32.totalorder %s15, 0
    %p36 = por %p34, %p35
    %p37 = scmp.ne.s32.totalorder %s23, %s24
    %p38 = scmp.eq.s32.totalorder %s16, 1
    %p39 = por %p37, %p38
    %p41 = scmp.ne.s32.totalorder %s24, %s40
    %p42 = scmp.eq.s32.totalorder %s16, 0
    %p43 = por %p41, %p42
    %s45 = sadd.s32 %s44, 1
    %p48 = scmp.eq.s32.totalorder %s10, 1
    %p49 = scmp.ne.s32.totalorder %s44, %s46
    %p50 = scmp.eq.s32.totalorder %s10, 0
    %p51 = por %p49, %p50
    %p52 = scmp.ne.s32.totalorder %s44, %s46
    %p53 = scmp.eq.s32.totalorder %s15, 1
    %p54 = por %p52, %p53
    %p55 = scmp.ne.s32.totalorder %s46, %s47
    %p56 = scmp.eq.s32.totalorder %s15, 0
    %p57 = por %p55, %p56
    %p58 = scmp.ne.s32.totalorder %s46, %s47
    %p59 = scmp.eq.s32.totalorder %s16, 1
    %p60 = por %p58, %p59
    %p62 = scmp.ne.s32.totalorder %s47, %s61
    %p63 = scmp.eq.s32.totalorder %s16, 0
    %p64 = por %p62, %p63
    %s65 = ssub.s32 %s10, %s17
    %p66 = scmp.eq.s32.totalorder %s65, 0
    %s68 = sadd.s32 %s67, 1
    %s69 = scalar_select %p66, %s67, %s68
    %p72 = pneg %p66
    %p73 = scmp.eq.s32.totalorder %s10, 1
    %p74 = por %p72, %p73
    %p75 = scmp.ne.s32.totalorder %s67, %s70
    %p76 = scmp.eq.s32.totalorder %s10, 0
    %p77 = por %p75, %p76
    %p78 = scmp.ne.s32.totalorder %s67, %s70
    %p79 = scmp.eq.s32.totalorder %s15, 1
    %p80 = por %p78, %p79
    %p81 = scmp.ne.s32.totalorder %s70, %s71
    %p82 = scmp.eq.s32.totalorder %s15, 0
    %p83 = por %p81, %p82
    %p84 = scmp.ne.s32.totalorder %s70, %s71
    %p85 = scmp.eq.s32.totalorder %s16, 1
    %p86 = por %p84, %p85
    %p88 = scmp.ne.s32.totalorder %s71, %s87
    %p89 = scmp.eq.s32.totalorder %s16, 0
    %p90 = por %p88, %p89
    %s91 = ssub.s32 %s10, %s17
    %p92 = scmp.eq.s32.totalorder %s91, 0
    %s94 = sadd.s32 %s93, 1
    %s95 = scalar_select %p92, %s93, %s94
    %p98 = pneg %p92
    %p99 = scmp.eq.s32.totalorder %s10, 1
    %p100 = por %p98, %p99
    %p101 = scmp.ne.s32.totalorder %s93, %s96
    %p102 = scmp.eq.s32.totalorder %s10, 0
    %p103 = por %p101, %p102
    %p104 = scmp.ne.s32.totalorder %s93, %s96
    %p105 = scmp.eq.s32.totalorder %s15, 1
    %p106 = por %p104, %p105
    %p107 = scmp.ne.s32.totalorder %s96, %s97
    %p108 = scmp.eq.s32.totalorder %s15, 0
    %p109 = por %p107, %p108
    %p110 = scmp.ne.s32.totalorder %s96, %s97
    %p111 = scmp.eq.s32.totalorder %s16, 1
    %p112 = por %p110, %p111
    %p114 = scmp.ne.s32.totalorder %s97, %s113
    %p115 = scmp.eq.s32.totalorder %s16, 0
    %p116 = por %p114, %p115
    %p117 = scmp.le.s32.totalorder 1, %s10
    %p118 = scmp.lt.s32.totalorder %s10, 3
    %p119 = pnand %p117, %p118
    %p120 = pneg %p119
    // Predicated region
    $region9: #{stem_forward.10} parent=5 // pred_check
      _
    $region10: #{stem_forward.10} parent=5 // pred_check_branch
      %122 = sbr.rel (%p119) target = $region12
    $region11: #{stem_forward.10} parent=5 // pred_region
      %s123 = ssub.s32 %s10, 1
      // Predicated region
      $region13: #{stem_forward.10} parent=11 // pred_check
        %p124 = pneg %p57
      $region14: #{stem_forward.10} parent=11 // pred_check_branch
        %126 = sbr.rel (%p124) target = $region16
      $region15: #{stem_forward.10} parent=11 // pred_region
        _
      $region16: #{stem_forward.10} parent=11 // pred_fallthru
        _
    $region12: #{stem_forward.10} parent=5 // pred_fallthru
      _
    %p127 = scmp.lt.s32.totalorder %s10, 2
    // Predicated region
    $region17: #{stem_forward.10} parent=5 // pred_check
      %p128 = pneg %p127
    $region18: #{stem_forward.10} parent=5 // pred_check_branch
      %130 = sbr.rel (%p128) target = $region20
    $region19: #{stem_forward.10} parent=5 // pred_region
      // Predicated region
      $region21: #{stem_forward.10} parent=19 // pred_check
        %p131 = pneg %p30
      $region22: #{stem_forward.10} parent=19 // pred_check_branch
        %133 = sbr.rel (%p131) target = $region24
      $region23: #{stem_forward.10} parent=19 // pred_region
        %s134 = smul.u32 2, %s10
        %p135 = scmp.lt.s32.totalorder %s134, 3
        %s136 = scalar_select %p135, %s134, 3
        %s137 = smul.addr %s136, 4
        %s138 = scalar_lea.vmem %s0, %s137
        %s139 = smul.u32 2, %s10
      $region24: #{stem_forward.10} parent=19 // pred_fallthru
        _
    $region20: #{stem_forward.10} parent=5 // pred_fallthru
      _
    %p140 = scmp.le.s32.totalorder 1, %s10
    %p141 = scmp.lt.s32.totalorder %s10, 3
    %p142 = pnand %p140, %p141
    %p143 = pneg %p142
    // Predicated region
    $region25: #{stem_forward.10} parent=5 // pred_check
      _
    $region26: #{stem_forward.10} parent=5 // pred_check_branch
      %145 = sbr.rel (%p142) target = $region28
    $region27: #{stem_forward.10} parent=5 // pred_region
      %s146 = ssub.s32 %s10, 1
      %s147 = smul.u32 2, %s15
      %p148 = scmp.lt.s32.totalorder %s147, 3
      %s149 = scalar_select %p148, %s147, 3
      %s150 = smul.addr %s149, 4
      %s151 = scalar_lea.vmem %s0, %s150
      %p152 = pneg %p36
      %p153 = pneg %p33
      %p154 = pneg %p57
      %p155 = pneg %p54
      %p156 = pneg %p83
      %p157 = pneg %p80
      %s158 = smul.u32 2, %s15
      %p159 = scmp.lt.s32.totalorder %s158, 3
      %s160 = scalar_select %p159, %s158, 3
      %s161 = smul.addr %s160, 8
      %s162 = scalar_lea.vmem %s2, %s161
      %p163 = pneg %p109
      %p164 = pneg %p106
      %p165 = scmp.lt.s32.totalorder %s15, 1
      %s166 = scalar_select %p165, %s15, 1
      %s167 = smul.addr %s166, 8
      %s168 = scalar_lea.vmem %s3, %s167
      %s169 = smul.u32 2, %s15
      %p170 = scmp.lt.s32.totalorder %s169, 3
      %s171 = scalar_select %p170, %s169, 3
      %s172 = smul.addr %s171, 4
      %s173 = scalar_lea.vmem %s0, %s172
      %s174 = smul.u32 2, %s15
      %s175 = smul.u32 2, %s15
      %p176 = scmp.lt.s32.totalorder %s175, 3
      %s177 = scalar_select %p176, %s175, 3
      %s178 = smul.addr %s177, 8
      %s179 = scalar_lea.vmem %s2, %s178
      %s180 = smul.u32 2, %s15
      %p181 = scmp.lt.s32.totalorder %s15, 1
      %s182 = scalar_select %p181, %s15, 1
      %s183 = smul.addr %s182, 8
      %s184 = scalar_lea.vmem %s3, %s183
      %v186 = vld [vmem:[%s173] sm:$0xf]
      %v187 = vld [vmem:[%s173 + $0x4] sm:$0xf]
      %v188 = vld [vmem:[%s1] sm:$0xf]
      %v189 = vld [vmem:[%s1 + $0x4] sm:$0xf]
      %v190 = vld [vmem:[%s1 + $0x8] sm:$0xf]
      %v191 = vld [vmem:[%s1 + $0xc] sm:$0xf]
      %v194 = vunpack.c.l.b16 %v186
      %v195 = vunpack.c.l.b16 %v187
      %v196 = vpack.c.b16 %v195, %v194
      %v201 = vunpack.c.l.b16 %v188
      %v202 = vunpack.c.l.b16 %v189
      %v203 = vunpack.c.l.b16 %v190
      %v204 = vunpack.c.l.b16 %v191
      %v205 = vpack.c.b16 %v202, %v201
      %v206 = vpack.c.b16 %v204, %v203
      %vm209 = vcmask 261120
      %v211 = vsel %vm209, %v196, 0
      %213 = vmatprep.subr.bf16.mxu0 0
      %214 = vmatpush1.bf16.msra.mxu0 0
      %215 = vmatprep.subr.bf16.mxu0 0
      %216 = vmatpush1.bf16.msra.mxu0 0
      %217 = vmatprep.subr.bf16.mxu0 0
      %218 = vmatpush1.bf16.msra.mxu0 0
      %219 = vmatprep.subr.bf16.mxu0 0
      %220 = vmatpush1.bf16.msra.mxu0 0
      %221 = vmatprep.subr.bf16.mxu0 0
      %222 = vmatpush1.bf16.msra.mxu0 0
      %223 = vmatprep.subr.bf16.mxu0 0
      %224 = vmatpush1.bf16.msra.mxu0 0
      %225 = vmatprep.subr.bf16.mxu0 0
      %226 = vmatpush1.bf16.msra.mxu0 %v206
      %227 = vmatprep.subr.bf16.mxu0 0
      %228 = vmatpush1.bf16.msra.mxu0 %v205
      %229 = vmatprep.subr.bf16.mxu0 0
      %230 = vmatpush2.bf16.msra.mxu0 0
      %231 = vmatprep.subr.bf16.mxu0 0
      %232 = vmatpush2.bf16.msra.mxu0 0
      %233 = vmatprep.subr.bf16.mxu0 0
      %234 = vmatpush2.bf16.msra.mxu0 0
      %235 = vmatprep.subr.bf16.mxu0 0
      %236 = vmatpush2.bf16.msra.mxu0 0
      %237 = vmatprep.subr.bf16.mxu0 0
      %238 = vmatpush2.bf16.msra.mxu0 0
      %239 = vmatprep.subr.bf16.mxu0 0
      %240 = vmatpush2.bf16.msra.mxu0 0
      %241 = vmatprep.subr.bf16.mxu0 0
      %242 = vmatpush2.bf16.msra.mxu0 0
      %243 = vmatprep.subr.bf16.mxu0 0
      %244 = vmatpush2.bf16.msra.mxu0 0
      %245 = vmatprep.mubr.bf16.mxu0 0
      %246 = vmatmul.mubr.bf16.gmra.mxu0 %v211
      %v247 = vpop.f32.mrf.mxu0
      %v248 = vadd.f32 0.0, %v247
      %v249 = vpop.f32.mrf.mxu0
      %v250 = vpop.f32.mrf.mxu0
      %v251 = vadd.f32 0.0, %v250
      %v252 = vpop.f32.mrf.mxu0
      %253 = vdwg.mxu0
      %vm254 = vcmask 130048
      %255 = vst.msk [vmem:[%s179] sm:$0xff] %vm254, %v248
      %256 = vst.msk [vmem:[%s179 + $0x8] sm:$0xff] %vm254, %v251
      %v257 = vsel %vm254, %v248, 0.0
      %v258 = vsel %vm254, %v251, 0.0
      %v259 = vadd.f32 %v257, %v258
      %v260 = vrot.slane %v259, 4
      %v261 = vadd.f32 %v259, %v260
      %v262 = vrot.slane %v261, 2
      %v263 = vadd.f32 %v261, %v262
      %v264 = vrot.slane %v263, 1
      %v265 = vadd.f32 %v263, %v264
      %v266 = vmul.f32 %v248, %v248
      %v267 = vmul.f32 %v251, %v251
      %v268 = vsel %vm254, %v266, 0.0
      %v269 = vsel %vm254, %v267, 0.0
      %v270 = vadd.f32 %v268, %v269
      %v271 = vrot.slane %v270, 4
      %v272 = vadd.f32 %v270, %v271
      %v273 = vrot.slane %v272, 2
      %v274 = vadd.f32 %v272, %v273
      %v275 = vrot.slane %v274, 1
      %v276 = vadd.f32 %v274, %v275
      %v277 = vlaneseq
      %v278 = vshrl.u32 %v277, 7
      %vm279 = vcmp.eq.s32.totalorder %v278, 0
      %vm280 = vcmp.eq.s32.totalorder %v278, 1
      %v281 = vsel %vm280, %v276, 0.0
      %v282 = vsel %vm279, %v265, %v281
      %283 = vst.msk [vmem:[%s184] sm:$0xff] %vm254, %v282
      %s284 = smul.u32 2, %s15
      %p285 = scmp.lt.s32.totalorder %s284, 3
      %s286 = scalar_select %p285, %s284, 3
      %s287 = smul.addr %s286, 8
      %s288 = scalar_lea.vmem %s2, %s287
      %p289 = scmp.lt.s32.totalorder %s15, 1
      %s290 = scalar_select %p289, %s15, 1
      %s291 = smul.addr %s290, 8
      %s292 = scalar_lea.vmem %s3, %s291
      // Predicated region
      $region29: #{stem_forward.10} parent=27 // pred_check
        %p293 = pneg %p80
      $region30: #{stem_forward.10} parent=27 // pred_check_branch
        %295 = sbr.rel (%p293) target = $region32
      $region31: #{stem_forward.10} parent=27 // pred_region
        %s296 = smul.u32 2, %s15
      $region32: #{stem_forward.10} parent=27 // pred_fallthru
        _
      // Predicated region
      $region33: #{stem_forward.10} parent=27 // pred_check
        %p297 = pneg %p106
      $region34: #{stem_forward.10} parent=27 // pred_check_branch
        %299 = sbr.rel (%p297) target = $region36
      $region35: #{stem_forward.10} parent=27 // pred_region
        _
      $region36: #{stem_forward.10} parent=27 // pred_fallthru
        _
    $region28: #{stem_forward.10} parent=5 // pred_fallthru
      _
    %p300 = scmp.le.s32.totalorder 2, %s10
    // Predicated region
    $region37: #{stem_forward.10} parent=5 // pred_check
      %p301 = pneg %p300
    $region38: #{stem_forward.10} parent=5 // pred_check_branch
      %303 = sbr.rel (%p301) target = $region40
    $region39: #{stem_forward.10} parent=5 // pred_region
      %s304 = ssub.s32 %s10, 2
      // Predicated region
      $region41: #{stem_forward.10} parent=39 // pred_check
        %p305 = pneg %p86
      $region42: #{stem_forward.10} parent=39 // pred_check_branch
        %307 = sbr.rel (%p305) target = $region44
      $region43: #{stem_forward.10} parent=39 // pred_region
        %s308 = smul.u32 2, %s16
        %p309 = scmp.lt.s32.totalorder %s308, 3
        %s310 = scalar_select %p309, %s308, 3
        %s311 = smul.addr %s310, 8
        %s312 = scalar_lea.vmem %s2, %s311
      $region44: #{stem_forward.10} parent=39 // pred_fallthru
        _
      // Predicated region
      $region45: #{stem_forward.10} parent=39 // pred_check
        %p313 = pneg %p112
      $region46: #{stem_forward.10} parent=39 // pred_check_branch
        %315 = sbr.rel (%p313) target = $region48
      $region47: #{stem_forward.10} parent=39 // pred_region
        %p316 = scmp.lt.s32.totalorder %s16, 1
        %s317 = scalar_select %p316, %s16, 1
        %s318 = smul.addr %s317, 8
        %s319 = scalar_lea.vmem %s3, %s318
      $region48: #{stem_forward.10} parent=39 // pred_fallthru
        _
    $region40: #{stem_forward.10} parent=5 // pred_fallthru
      _
  $region6: #{stem_forward.10} parent=0 // loop_footer
    %s14 = sadd.s32 1, %s10
  $region7: #{stem_forward.10} parent=0 // loop_footer_branch
    %9 = sbr.rel target = $region3
  $region8: #{stem_forward.10} parent=0 // loop_exit
    _

</llo_original>
